<compile_context>
chip_gen: v6e
topology: v6e:2x2x1
jax: 0.10.0
libtpu: 0.0.40
codegen_flags: <defaults>
</compile_context>

<pallas_src>
import math

import jax
import jax.numpy as jnp
from jax import lax
from jax.experimental import pallas as pl
from jax.experimental.pallas import tpu as pltpu


def _rup8(n):
    return -(-n // 8) * 8


def convrnn_forward(x_btd, p):
    """x_btd: (B, T, D) like the PyTorch module input [sample, steps, dim]."""
    B, T, D = x_btd.shape
    assert T % 4 == 0, "steps must be divisible by 4 (avg-pool 2 and 4)"
    H = p['b1'].shape[0]
    C1, C2, C3 = p['w11'].shape[0], p['w21'].shape[0], p['w31'].shape[0]
    U1, U2, U3 = p['whh1'].shape[1], p['whh2'].shape[1], p['whh3'].shape[1]
    K1, K2, K3 = 7, 5, 3
    T2, T4 = T // 2, T // 4

    f32, bf16 = jnp.float32, jnp.bfloat16
    Bp = _rup8(B)                    # batch rows padded to 8 sublanes
    Dp = _rup8(D)                    # conv input channels padded (zero lanes)
    Cp = _rup8(max(C1, C2, C3))      # common (padded) conv channel count
    PAD1, PAD2, PAD3 = (K1 - 1) * Bp, (K2 - 1) * Bp, (K3 - 1) * Bp
    G1, G2, G3 = 3 * U1, 3 * U2, 3 * U3
    GW23 = max(G2, G3)               # shared gate width for branch-2/3 slab
    BW = max(Cp, G1, GW23, H)        # bias-slab lane width

    # ------------------ activations (layout built on the XLA side) ----------
    x = x_btd.astype(f32)
    if Bp != B:
        x = jnp.concatenate([x, jnp.zeros((Bp - B, T, D), f32)], axis=0)
    # linear2 input, column index d*T + t (== PyTorch permute(0,2,1).view)
    x_lin = jnp.transpose(x, (0, 2, 1)).reshape(Bp, D * T).astype(bf16)

    xdp = jnp.pad(x, ((0, 0), (0, 0), (0, Dp - D)))          # (Bp, T, Dp)
    x_tb = jnp.transpose(xdp, (1, 0, 2))                     # row = t*Bp + b
    x1 = x_tb.reshape(T * Bp, Dp)
    x2 = x_tb.reshape(T2, 2, Bp, Dp).mean(axis=1).reshape(T2 * Bp, Dp)
    x4 = x_tb.reshape(T4, 4, Bp, Dp).mean(axis=1).reshape(T4 * Bp, Dp)
    xp1 = jnp.concatenate([jnp.zeros((PAD1, Dp), f32), x1], 0).astype(bf16)
    xp2 = jnp.concatenate([jnp.zeros((PAD2, Dp), f32), x2], 0).astype(bf16)
    xp3 = jnp.concatenate([jnp.zeros((PAD3, Dp), f32), x4], 0).astype(bf16)

    # ------------------ packed weight slabs ---------------------------------
    def conv_block(w, cin_pad):
        # (Cout, Cin, K) -> im2col RHS (K*cin_pad, Cp); row index = k*cin_pad + c
        cout, cin, k = w.shape
        wt = jnp.transpose(w, (2, 1, 0))
        wt = jnp.pad(wt, ((0, 0), (0, cin_pad - cin), (0, Cp - cout)))
        return wt.reshape(k * cin_pad, Cp)

    conv_blocks = [conv_block(p['w11'], Dp), conv_block(p['w12'], Cp),
                   conv_block(p['w21'], Dp), conv_block(p['w22'], Cp),
                   conv_block(p['w31'], Dp), conv_block(p['w32'], Cp)]
    conv_offs, off = [], 0
    for blk in conv_blocks:
        conv_offs.append(off)
        off += blk.shape[0]
    conv_slab = jnp.concatenate(conv_blocks, axis=0).astype(bf16)  # (sum, Cp)

    def ih_block(w, cin, gw):   # (3U, Cin) -> (Cp, gw)
        return jnp.pad(w.T, ((0, Cp - cin), (0, gw - w.shape[0])))

    def hh_block(w, gw):        # (3U, U) -> (U, gw)
        return jnp.pad(w.T, ((0, 0), (0, gw - w.shape[0])))

    g1_slab = jnp.concatenate(
        [ih_block(p['wih1'], C1, G1), hh_block(p['whh1'], G1)],
        axis=0).astype(bf16)                                   # (Cp+U1, G1)
    g23_slab = jnp.concatenate(
        [ih_block(p['wih2'], C2, GW23), hh_block(p['whh2'], GW23),
         ih_block(p['wih3'], C3, GW23), hh_block(p['whh3'], GW23)],
        axis=0).astype(bf16)                                   # (2Cp+U2+U3, GW23)

    w1 = p['w1']                                               # (H, U1+U2+U3)
    head_slab = jnp.concatenate(
        [w1[:, :U1].T, w1[:, U1:U1 + U2].T, w1[:, U1 + U2:].T, p['w2'].T],
        axis=0).astype(bf16)                                   # (U1+U2+U3+D*T, H)

    def brow(v):
        return jnp.pad(v.astype(f32), (0, BW - v.shape[0]))

    bias_slab = jnp.stack([
        brow(p['b11']), brow(p['b12']), brow(p['b21']), brow(p['b22']),
        brow(p['b31']), brow(p['b32']),
        brow(p['bih1']), brow(p['bhh1']), brow(p['bih2']), brow(p['bhh2']),
        brow(p['bih3']), brow(p['bhh3']),
        brow(p['b1'] + p['b2']),
    ], axis=0)                                                 # (13, BW) f32

    # static row offsets inside the packed slabs (all multiples of 8)
    OW11, OW12, OW21, OW22, OW31, OW32 = conv_offs
    OIH1, OHH1 = 0, Cp
    OIH2, OHH2, OIH3, OHH3 = 0, Cp, Cp + U2, 2 * Cp + U2

    def kernel(xp1_ref, xp2_ref, xp3_ref, xlin_ref,
               cw_ref, g1_ref, g23_ref, hw_ref, b_ref,
               out_ref, s12, s22, s32):
        bias = b_ref[...]                                      # (13, BW) f32

        def conv_relu(in_ref, K, Tn, w_off, cin, b_row):
            # One im2col matmul per conv; the (K-1)*Bp zero rows at the top of
            # in_ref realize causality.  lhs: (Tn*Bp, K*cin) bf16.
            lhs = jnp.concatenate(
                [in_ref[k * Bp: k * Bp + Tn * Bp, :] for k in range(K)], axis=1)
            w = cw_ref[w_off: w_off + K * cin, :]
            y = jnp.dot(lhs, w, preferred_element_type=jnp.float32)
            return jnp.maximum(y + bias[b_row:b_row + 1, :Cp], 0.0)

        def stage(scratch, y, pad):
            # left-zero-pad y into a bf16 scratch (input of the second conv)
            scratch[0:pad, :] = jnp.zeros((pad, Cp), jnp.bfloat16)
            scratch[pad:, :] = y.astype(jnp.bfloat16)

        def input_proj(y, wih, b_row, gw):
            # GRU input projection hoisted out of the recurrence.
            return (jnp.dot(y.astype(jnp.bfloat16), wih,
                            preferred_element_type=jnp.float32)
                    + bias[b_row:b_row + 1, :gw])

        def gru_cell(gx_t, h, whh, bhh, U):
            gh = jnp.dot(h.astype(jnp.bfloat16), whh,
                         preferred_element_type=jnp.float32) + bhh
            r = jax.nn.sigmoid(gx_t[:, 0:U] + gh[:, 0:U])
            z = jax.nn.sigmoid(gx_t[:, U:2 * U] + gh[:, U:2 * U])
            n = jnp.tanh(gx_t[:, 2 * U:3 * U] + r * gh[:, 2 * U:3 * U])
            return (1.0 - z) * n + z * h

        # ---- branch 1: full resolution, two causal convs (k=7) ----
        y11 = conv_relu(xp1_ref, K1, T, OW11, Dp, 0)
        stage(s12, y11, PAD1)
        y12 = conv_relu(s12, K1, T, OW12, Cp, 1)
        gx1 = input_proj(y12, g1_ref[OIH1:OIH1 + Cp, :], 6, G1)

        # ---- branch 2: avg-pool(2), two causal convs (k=5) ----
        y21 = conv_relu(xp2_ref, K2, T2, OW21, Dp, 2)
        stage(s22, y21, PAD2)
        y22 = conv_relu(s22, K2, T2, OW22, Cp, 3)
        gx2 = input_proj(y22, g23_ref[OIH2:OIH2 + Cp, :], 8, GW23)

        # ---- branch 3: avg-pool(4), two causal convs (k=3) ----
        y31 = conv_relu(xp3_ref, K3, T4, OW31, Dp, 4)
        stage(s32, y31, PAD3)
        y32 = conv_relu(s32, K3, T4, OW32, Cp, 5)
        gx3 = input_proj(y32, g23_ref[OIH3:OIH3 + Cp, :], 10, GW23)

        # ---- merged GRU recurrences (interleaved, fully unrolled) ----
        whh1, bhh1 = g1_ref[OHH1:OHH1 + U1, :], bias[7:8, :G1]
        whh2, bhh2 = g23_ref[OHH2:OHH2 + U2, :], bias[9:10, :GW23]
        whh3, bhh3 = g23_ref[OHH3:OHH3 + U3, :], bias[11:12, :GW23]
        h1 = jnp.zeros((Bp, U1), jnp.float32)
        h2 = jnp.zeros((Bp, U2), jnp.float32)
        h3 = jnp.zeros((Bp, U3), jnp.float32)
        # TODO(synk): for T >~ 32 switch to lax.fori_loop with gx staged in
        # VMEM refs to bound vreg live ranges; at T=8 full unroll is better.
        for t in range(T):
            h1 = gru_cell(gx1[t * Bp:(t + 1) * Bp, :], h1, whh1, bhh1, U1)
            if t % 2 == 1:
                i2 = t // 2
                h2 = gru_cell(gx2[i2 * Bp:(i2 + 1) * Bp, :], h2, whh2, bhh2, U2)
            if t % 4 == 3:
                i3 = t // 4
                h3 = gru_cell(gx3[i3 * Bp:(i3 + 1) * Bp, :], h3, whh3, bhh3, U3)

        # ---- fused head: [h1|h2|h3|x_flat] @ [w1a;w1b;w1c;w2^T] + (b1+b2) ----
        feat = jnp.concatenate(
            [h1.astype(jnp.bfloat16), h2.astype(jnp.bfloat16),
             h3.astype(jnp.bfloat16), xlin_ref[...]], axis=1)
        out_ref[...] = (jnp.dot(feat, hw_ref[...],
                                preferred_element_type=jnp.float32)
                        + bias[12:13, :H])

    n_in = 9
    out = pl.pallas_call(
        kernel,
        out_shape=jax.ShapeDtypeStruct((Bp, H), f32),
        in_specs=[pl.BlockSpec(memory_space=pltpu.MemorySpace.VMEM)] * n_in,
        out_specs=pl.BlockSpec(memory_space=pltpu.MemorySpace.VMEM),
        scratch_shapes=[
            pltpu.VMEM((PAD1 + T * Bp, Cp), bf16),    # padded conv12 input
            pltpu.VMEM((PAD2 + T2 * Bp, Cp), bf16),   # padded conv22 input
            pltpu.VMEM((PAD3 + T4 * Bp, Cp), bf16),   # padded conv32 input
        ],
        # Single grid point: the whole (tiny) problem is VMEM-resident.  For
        # large batches, add a grid over padded B with
        # dimension_semantics=("parallel",) to use the 2nd TensorCore on v7x.
    )(xp1, xp2, xp3, x_lin, conv_slab, g1_slab, g23_slab, head_slab, bias_slab)
    return out[:B]


def init_params(key, D, T, H, C1, C2, C3, U1, U2, U3):
    specs = {
        'w11': ((C1, D, 7), D * 7),   'b11': ((C1,), D * 7),
        'w12': ((C1, C1, 7), C1 * 7), 'b12': ((C1,), C1 * 7),
        'w21': ((C2, D, 5), D * 5),   'b21': ((C2,), D * 5),
        'w22': ((C2, C2, 5), C2 * 5), 'b22': ((C2,), C2 * 5),
        'w31': ((C3, D, 3), D * 3),   'b31': ((C3,), D * 3),
        'w32': ((C3, C3, 3), C3 * 3), 'b32': ((C3,), C3 * 3),
        'wih1': ((3 * U1, C1), U1), 'whh1': ((3 * U1, U1), U1),
        'bih1': ((3 * U1,), U1),    'bhh1': ((3 * U1,), U1),
        'wih2': ((3 * U2, C2), U2), 'whh2': ((3 * U2, U2), U2),
        'bih2': ((3 * U2,), U2),    'bhh2': ((3 * U2,), U2),
        'wih3': ((3 * U3, C3), U3), 'whh3': ((3 * U3, U3), U3),
        'bih3': ((3 * U3,), U3),    'bhh3': ((3 * U3,), U3),
        'w1': ((H, U1 + U2 + U3), U1 + U2 + U3), 'b1': ((H,), U1 + U2 + U3),
        'w2': ((H, D * T), D * T),  'b2': ((H,), D * T),
    }
    keys = jax.random.split(key, len(specs))
    p = {}
    for (name, (shape, fan_in)), k in zip(specs.items(), keys):
        s = 1.0 / math.sqrt(fan_in)
        p[name] = jax.random.uniform(k, shape, jnp.float32, -s, s)
    return p


def reference_forward(x_btd, p):
    """Pure-JAX f32 mirror of the PyTorch forward (for correctness checking)."""
    B, T, D = x_btd.shape
    xc = jnp.transpose(x_btd, (0, 2, 1))      # (B, D, T), NCW like PyTorch
    hi = lax.Precision.HIGHEST

    def conv_causal_relu(inp, w, b):
        K = w.shape[-1]
        Bc, C, Tc = inp.shape
        xp = jnp.pad(inp, ((0, 0), (0, 0), (K - 1, 0)))
        cols = jnp.stack([xp[:, :, j:j + Tc] for j in range(K)], axis=-1)
        y = jnp.einsum('bctk,ock->bot', cols, w, precision=hi) + b[None, :, None]
        return jax.nn.relu(y)

    def gru_last(inp_btc, wih, whh, bih, bhh):
        Bc, Tc, C = inp_btc.shape
        U = whh.shape[1]
        h = jnp.zeros((Bc, U), jnp.float32)
        for t in range(Tc):
            xt = inp_btc[:, t]
            gx = jnp.dot(xt, wih.T, precision=hi) + bih
            gh = jnp.dot(h, whh.T, precision=hi) + bhh
            r = jax.nn.sigmoid(gx[:, :U] + gh[:, :U])
            z = jax.nn.sigmoid(gx[:, U:2 * U] + gh[:, U:2 * U])
            n = jnp.tanh(gx[:, 2 * U:] + r * gh[:, 2 * U:])
            h = (1 - z) * n + z * h
        return h

    def avg_pool(inp, k):
        Bc, C, Tc = inp.shape
        return inp.reshape(Bc, C, Tc // k, k).mean(-1)

    y1 = conv_causal_relu(xc, p['w11'], p['b11'])
    y1 = conv_causal_relu(y1, p['w12'], p['b12'])
    h1 = gru_last(jnp.transpose(y1, (0, 2, 1)),
                  p['wih1'], p['whh1'], p['bih1'], p['bhh1'])

    x2 = avg_pool(xc, 2)
    y2 = conv_causal_relu(x2, p['w21'], p['b21'])
    y2 = conv_causal_relu(y2, p['w22'], p['b22'])
    h2 = gru_last(jnp.transpose(y2, (0, 2, 1)),
                  p['wih2'], p['whh2'], p['bih2'], p['bhh2'])

    x3 = avg_pool(xc, 4)
    y3 = conv_causal_relu(x3, p['w31'], p['b31'])
    y3 = conv_causal_relu(y3, p['w32'], p['b32'])
    h3 = gru_last(jnp.transpose(y3, (0, 2, 1)),
                  p['wih3'], p['whh3'], p['bih3'], p['bhh3'])

    h = jnp.concatenate([h1, h2, h3], axis=1)
    out1 = jnp.dot(h, p['w1'].T, precision=hi) + p['b1']
    out2 = jnp.dot(xc.reshape(B, -1), p['w2'].T, precision=hi) + p['b2']
    return out1 + out2


if __name__ == "__main__":
    B, T = 2, 8          # batch, timesteps (params.steps)
    D = 4                # input_dim = 1 + cov_dim  (cov_dim = 3)
    H = 8                # output_dim = params.H
    C1, C2, C3 = 16, 12, 8
    U1, U2, U3 = 32, 16, 16

    key = jax.random.PRNGKey(0)
    pkey, xkey = jax.random.split(key)
    params = init_params(pkey, D, T, H, C1, C2, C3, U1, U2, U3)
    x = jax.random.normal(xkey, (B, T, D), jnp.float32)

    out = convrnn_forward(x, params)
    out = jax.block_until_ready(out)

    ref = reference_forward(x, params)
    assert out.shape == (B, H)
    max_err = float(jnp.max(jnp.abs(out - ref)))
    assert max_err < 5e-2, f"mismatch vs reference: {max_err}"
    print("KERNEL_OK")
</pallas_src>

<mosaic_0001>
module attributes {stable_mosaic.version = 11 : i64} {
  func.func @kernel(%arg0: memref<112x8xbf16, #tpu.memory_space<vmem>>, %arg1: memref<64x8xbf16, #tpu.memory_space<vmem>>, %arg2: memref<32x8xbf16, #tpu.memory_space<vmem>>, %arg3: memref<8x32xbf16, #tpu.memory_space<vmem>>, %arg4: memref<360x16xbf16, #tpu.memory_space<vmem>>, %arg5: memref<48x96xbf16, #tpu.memory_space<vmem>>, %arg6: memref<64x48xbf16, #tpu.memory_space<vmem>>, %arg7: memref<96x8xbf16, #tpu.memory_space<vmem>>, %arg8: memref<13x96xf32, #tpu.memory_space<vmem>>, %arg9: memref<8x8xf32, #tpu.memory_space<vmem>>, %arg10: memref<112x16xbf16, #tpu.memory_space<vmem>>, %arg11: memref<64x16xbf16, #tpu.memory_space<vmem>>, %arg12: memref<32x16xbf16, #tpu.memory_space<vmem>>) attributes {dimension_semantics = [], scalar_prefetch = 0 : i64, scratch_operands = 3 : i64, tpu.core_type = #tpu.core_type<tc>} {
    %c0 = arith.constant 0 : index
    %c0_0 = arith.constant 0 : index
    %0 = vector.load %arg8[%c0, %c0_0] : memref<13x96xf32, #tpu.memory_space<vmem>>, vector<13x96xf32>
    %c0_1 = arith.constant 0 : index
    %c0_2 = arith.constant 0 : index
    %1 = vector.load %arg0[%c0_1, %c0_2] : memref<112x8xbf16, #tpu.memory_space<vmem>>, vector<64x8xbf16>
    %c8 = arith.constant 8 : index
    %c0_3 = arith.constant 0 : index
    %2 = vector.load %arg0[%c8, %c0_3] : memref<112x8xbf16, #tpu.memory_space<vmem>>, vector<64x8xbf16>
    %c16 = arith.constant 16 : index
    %c0_4 = arith.constant 0 : index
    %3 = vector.load %arg0[%c16, %c0_4] : memref<112x8xbf16, #tpu.memory_space<vmem>>, vector<64x8xbf16>
    %c24 = arith.constant 24 : index
    %c0_5 = arith.constant 0 : index
    %4 = vector.load %arg0[%c24, %c0_5] : memref<112x8xbf16, #tpu.memory_space<vmem>>, vector<64x8xbf16>
    %c32 = arith.constant 32 : index
    %c0_6 = arith.constant 0 : index
    %5 = vector.load %arg0[%c32, %c0_6] : memref<112x8xbf16, #tpu.memory_space<vmem>>, vector<64x8xbf16>
    %c40 = arith.constant 40 : index
    %c0_7 = arith.constant 0 : index
    %6 = vector.load %arg0[%c40, %c0_7] : memref<112x8xbf16, #tpu.memory_space<vmem>>, vector<64x8xbf16>
    %c48 = arith.constant 48 : index
    %c0_8 = arith.constant 0 : index
    %7 = vector.load %arg0[%c48, %c0_8] : memref<112x8xbf16, #tpu.memory_space<vmem>>, vector<64x8xbf16>
    %8 = tpu.concatenate %1, %2, %3, %4, %5, %6, %7 in 1 : vector<64x8xbf16>, vector<64x8xbf16>, vector<64x8xbf16>, vector<64x8xbf16>, vector<64x8xbf16>, vector<64x8xbf16>, vector<64x8xbf16> -> vector<64x56xbf16>
    %c0_9 = arith.constant 0 : index
    %c0_10 = arith.constant 0 : index
    %9 = vector.load %arg4[%c0_9, %c0_10] : memref<360x16xbf16, #tpu.memory_space<vmem>>, vector<56x16xbf16>
    %cst = arith.constant dense<0.000000e+00> : vector<64x16xf32>
    %10 = tpu.matmul %8, %9, %cst {dimension_numbers = #tpu.dot_dimension_numbers<[1], [0], [0], [1], [0, 0, 1, 1], [], []>} : vector<64x56xbf16>, vector<56x16xbf16>, vector<64x16xf32> -> vector<64x16xf32>
    %11 = vector.extract_strided_slice %0 {offsets = [0, 0], sizes = [1, 16], strides = [1, 1]} : vector<13x96xf32> to vector<1x16xf32>
    %12 = vector.broadcast %11 : vector<1x16xf32> to vector<64x16xf32>
    %13 = arith.addf %10, %12 : vector<64x16xf32>
    %cst_11 = arith.constant 0.000000e+00 : f32
    %14 = vector.broadcast %cst_11 : f32 to vector<64x16xf32>
    %15 = arith.maximumf %13, %14 : vector<64x16xf32>
    %cst_12 = arith.constant 0.000000e+00 : bf16
    %16 = vector.broadcast %cst_12 : bf16 to vector<48x16xbf16>
    %c0_13 = arith.constant 0 : index
    %c0_14 = arith.constant 0 : index
    %17 = vector.load %arg10[%c0_13, %c0_14] : memref<112x16xbf16, #tpu.memory_space<vmem>>, vector<48x16xbf16>
    tpu.vector_store %arg10[%c0_13, %c0_14], %16 {strides = array<i32>} : memref<112x16xbf16, #tpu.memory_space<vmem>>, vector<48x16xbf16>,
    %18 = arith.truncf %15 : vector<64x16xf32> to vector<64x16xbf16>
    %c48_15 = arith.constant 48 : index
    %c0_16 = arith.constant 0 : index
    %19 = vector.load %arg10[%c48_15, %c0_16] : memref<112x16xbf16, #tpu.memory_space<vmem>>, vector<64x16xbf16>
    tpu.vector_store %arg10[%c48_15, %c0_16], %18 {strides = array<i32>} : memref<112x16xbf16, #tpu.memory_space<vmem>>, vector<64x16xbf16>,
    %c0_17 = arith.constant 0 : index
    %c0_18 = arith.constant 0 : index
    %20 = vector.load %arg10[%c0_17, %c0_18] : memref<112x16xbf16, #tpu.memory_space<vmem>>, vector<64x16xbf16>
    %c8_19 = arith.constant 8 : index
    %c0_20 = arith.constant 0 : index
    %21 = vector.load %arg10[%c8_19, %c0_20] : memref<112x16xbf16, #tpu.memory_space<vmem>>, vector<64x16xbf16>
    %c16_21 = arith.constant 16 : index
    %c0_22 = arith.constant 0 : index
    %22 = vector.load %arg10[%c16_21, %c0_22] : memref<112x16xbf16, #tpu.memory_space<vmem>>, vector<64x16xbf16>
    %c24_23 = arith.constant 24 : index
    %c0_24 = arith.constant 0 : index
    %23 = vector.load %arg10[%c24_23, %c0_24] : memref<112x16xbf16, #tpu.memory_space<vmem>>, vector<64x16xbf16>
    %c32_25 = arith.constant 32 : index
    %c0_26 = arith.constant 0 : index
    %24 = vector.load %arg10[%c32_25, %c0_26] : memref<112x16xbf16, #tpu.memory_space<vmem>>, vector<64x16xbf16>
    %c40_27 = arith.constant 40 : index
    %c0_28 = arith.constant 0 : index
    %25 = vector.load %arg10[%c40_27, %c0_28] : memref<112x16xbf16, #tpu.memory_space<vmem>>, vector<64x16xbf16>
    %c48_29 = arith.constant 48 : index
    %c0_30 = arith.constant 0 : index
    %26 = vector.load %arg10[%c48_29, %c0_30] : memref<112x16xbf16, #tpu.memory_space<vmem>>, vector<64x16xbf16>
    %27 = tpu.concatenate %20, %21, %22, %23, %24, %25, %26 in 1 : vector<64x16xbf16>, vector<64x16xbf16>, vector<64x16xbf16>, vector<64x16xbf16>, vector<64x16xbf16>, vector<64x16xbf16>, vector<64x16xbf16> -> vector<64x112xbf16>
    %c56 = arith.constant 56 : index
    %c0_31 = arith.constant 0 : index
    %28 = vector.load %arg4[%c56, %c0_31] : memref<360x16xbf16, #tpu.memory_space<vmem>>, vector<112x16xbf16>
    %cst_32 = arith.constant dense<0.000000e+00> : vector<64x16xf32>
    %29 = tpu.matmul %27, %28, %cst_32 {dimension_numbers = #tpu.dot_dimension_numbers<[1], [0], [0], [1], [0, 0, 1, 1], [], []>} : vector<64x112xbf16>, vector<112x16xbf16>, vector<64x16xf32> -> vector<64x16xf32>
    %30 = vector.extract_strided_slice %0 {offsets = [1, 0], sizes = [1, 16], strides = [1, 1]} : vector<13x96xf32> to vector<1x16xf32>
    %31 = vector.broadcast %30 : vector<1x16xf32> to vector<64x16xf32>
    %32 = arith.addf %29, %31 : vector<64x16xf32>
    %cst_33 = arith.constant 0.000000e+00 : f32
    %33 = vector.broadcast %cst_33 : f32 to vector<64x16xf32>
    %34 = arith.maximumf %32, %33 : vector<64x16xf32>
    %c0_34 = arith.constant 0 : index
    %c0_35 = arith.constant 0 : index
    %35 = vector.load %arg5[%c0_34, %c0_35] : memref<48x96xbf16, #tpu.memory_space<vmem>>, vector<16x96xbf16>
    %36 = arith.truncf %34 : vector<64x16xf32> to vector<64x16xbf16>
    %cst_36 = arith.constant dense<0.000000e+00> : vector<64x96xf32>
    %37 = tpu.matmul %36, %35, %cst_36 {dimension_numbers = #tpu.dot_dimension_numbers<[1], [0], [0], [1], [0, 0, 1, 1], [], []>} : vector<64x16xbf16>, vector<16x96xbf16>, vector<64x96xf32> -> vector<64x96xf32>
    %38 = vector.extract_strided_slice %0 {offsets = [6, 0], sizes = [1, 96], strides = [1, 1]} : vector<13x96xf32> to vector<1x96xf32>
    %39 = vector.broadcast %38 : vector<1x96xf32> to vector<64x96xf32>
    %40 = arith.addf %37, %39 : vector<64x96xf32>
    %c0_37 = arith.constant 0 : index
    %c0_38 = arith.constant 0 : index
    %41 = vector.load %arg1[%c0_37, %c0_38] : memref<64x8xbf16, #tpu.memory_space<vmem>>, vector<32x8xbf16>
    %c8_39 = arith.constant 8 : index
    %c0_40 = arith.constant 0 : index
    %42 = vector.load %arg1[%c8_39, %c0_40] : memref<64x8xbf16, #tpu.memory_space<vmem>>, vector<32x8xbf16>
    %c16_41 = arith.constant 16 : index
    %c0_42 = arith.constant 0 : index
    %43 = vector.load %arg1[%c16_41, %c0_42] : memref<64x8xbf16, #tpu.memory_space<vmem>>, vector<32x8xbf16>
    %c24_43 = arith.constant 24 : index
    %c0_44 = arith.constant 0 : index
    %44 = vector.load %arg1[%c24_43, %c0_44] : memref<64x8xbf16, #tpu.memory_space<vmem>>, vector<32x8xbf16>
    %c32_45 = arith.constant 32 : index
    %c0_46 = arith.constant 0 : index
    %45 = vector.load %arg1[%c32_45, %c0_46] : memref<64x8xbf16, #tpu.memory_space<vmem>>, vector<32x8xbf16>
    %46 = tpu.concatenate %41, %42, %43, %44, %45 in 1 : vector<32x8xbf16>, vector<32x8xbf16>, vector<32x8xbf16>, vector<32x8xbf16>, vector<32x8xbf16> -> vector<32x40xbf16>
    %c168 = arith.constant 168 : index
    %c0_47 = arith.constant 0 : index
    %47 = vector.load %arg4[%c168, %c0_47] : memref<360x16xbf16, #tpu.memory_space<vmem>>, vector<40x16xbf16>
    %cst_48 = arith.constant dense<0.000000e+00> : vector<32x16xf32>
    %48 = tpu.matmul %46, %47, %cst_48 {dimension_numbers = #tpu.dot_dimension_numbers<[1], [0], [0], [1], [0, 0, 1, 1], [], []>} : vector<32x40xbf16>, vector<40x16xbf16>, vector<32x16xf32> -> vector<32x16xf32>
    %49 = vector.extract_strided_slice %0 {offsets = [2, 0], sizes = [1, 16], strides = [1, 1]} : vector<13x96xf32> to vector<1x16xf32>
    %50 = vector.broadcast %49 : vector<1x16xf32> to vector<32x16xf32>
    %51 = arith.addf %48, %50 : vector<32x16xf32>
    %cst_49 = arith.constant 0.000000e+00 : f32
    %52 = vector.broadcast %cst_49 : f32 to vector<32x16xf32>
    %53 = arith.maximumf %51, %52 : vector<32x16xf32>
    %cst_50 = arith.constant 0.000000e+00 : bf16
    %54 = vector.broadcast %cst_50 : bf16 to vector<32x16xbf16>
    %c0_51 = arith.constant 0 : index
    %c0_52 = arith.constant 0 : index
    %55 = vector.load %arg11[%c0_51, %c0_52] : memref<64x16xbf16, #tpu.memory_space<vmem>>, vector<32x16xbf16>
    tpu.vector_store %arg11[%c0_51, %c0_52], %54 {strides = array<i32>} : memref<64x16xbf16, #tpu.memory_space<vmem>>, vector<32x16xbf16>,
    %56 = arith.truncf %53 : vector<32x16xf32> to vector<32x16xbf16>
    %c32_53 = arith.constant 32 : index
    %c0_54 = arith.constant 0 : index
    %57 = vector.load %arg11[%c32_53, %c0_54] : memref<64x16xbf16, #tpu.memory_space<vmem>>, vector<32x16xbf16>
    tpu.vector_store %arg11[%c32_53, %c0_54], %56 {strides = array<i32>} : memref<64x16xbf16, #tpu.memory_space<vmem>>, vector<32x16xbf16>,
    %c0_55 = arith.constant 0 : index
    %c0_56 = arith.constant 0 : index
    %58 = vector.load %arg11[%c0_55, %c0_56] : memref<64x16xbf16, #tpu.memory_space<vmem>>, vector<32x16xbf16>
    %c8_57 = arith.constant 8 : index
    %c0_58 = arith.constant 0 : index
    %59 = vector.load %arg11[%c8_57, %c0_58] : memref<64x16xbf16, #tpu.memory_space<vmem>>, vector<32x16xbf16>
    %c16_59 = arith.constant 16 : index
    %c0_60 = arith.constant 0 : index
    %60 = vector.load %arg11[%c16_59, %c0_60] : memref<64x16xbf16, #tpu.memory_space<vmem>>, vector<32x16xbf16>
    %c24_61 = arith.constant 24 : index
    %c0_62 = arith.constant 0 : index
    %61 = vector.load %arg11[%c24_61, %c0_62] : memref<64x16xbf16, #tpu.memory_space<vmem>>, vector<32x16xbf16>
    %c32_63 = arith.constant 32 : index
    %c0_64 = arith.constant 0 : index
    %62 = vector.load %arg11[%c32_63, %c0_64] : memref<64x16xbf16, #tpu.memory_space<vmem>>, vector<32x16xbf16>
    %63 = tpu.concatenate %58, %59, %60, %61, %62 in 1 : vector<32x16xbf16>, vector<32x16xbf16>, vector<32x16xbf16>, vector<32x16xbf16>, vector<32x16xbf16> -> vector<32x80xbf16>
    %c208 = arith.constant 208 : index
    %c0_65 = arith.constant 0 : index
    %64 = vector.load %arg4[%c208, %c0_65] : memref<360x16xbf16, #tpu.memory_space<vmem>>, vector<80x16xbf16>
    %cst_66 = arith.constant dense<0.000000e+00> : vector<32x16xf32>
    %65 = tpu.matmul %63, %64, %cst_66 {dimension_numbers = #tpu.dot_dimension_numbers<[1], [0], [0], [1], [0, 0, 1, 1], [], []>} : vector<32x80xbf16>, vector<80x16xbf16>, vector<32x16xf32> -> vector<32x16xf32>
    %66 = vector.extract_strided_slice %0 {offsets = [3, 0], sizes = [1, 16], strides = [1, 1]} : vector<13x96xf32> to vector<1x16xf32>
    %67 = vector.broadcast %66 : vector<1x16xf32> to vector<32x16xf32>
    %68 = arith.addf %65, %67 : vector<32x16xf32>
    %cst_67 = arith.constant 0.000000e+00 : f32
    %69 = vector.broadcast %cst_67 : f32 to vector<32x16xf32>
    %70 = arith.maximumf %68, %69 : vector<32x16xf32>
    %c0_68 = arith.constant 0 : index
    %c0_69 = arith.constant 0 : index
    %71 = vector.load %arg6[%c0_68, %c0_69] : memref<64x48xbf16, #tpu.memory_space<vmem>>, vector<16x48xbf16>
    %72 = arith.truncf %70 : vector<32x16xf32> to vector<32x16xbf16>
    %cst_70 = arith.constant dense<0.000000e+00> : vector<32x48xf32>
    %73 = tpu.matmul %72, %71, %cst_70 {dimension_numbers = #tpu.dot_dimension_numbers<[1], [0], [0], [1], [0, 0, 1, 1], [], []>} : vector<32x16xbf16>, vector<16x48xbf16>, vector<32x48xf32> -> vector<32x48xf32>
    %74 = vector.extract_strided_slice %0 {offsets = [8, 0], sizes = [1, 48], strides = [1, 1]} : vector<13x96xf32> to vector<1x48xf32>
    %75 = vector.broadcast %74 : vector<1x48xf32> to vector<32x48xf32>
    %76 = arith.addf %73, %75 : vector<32x48xf32>
    %c0_71 = arith.constant 0 : index
    %c0_72 = arith.constant 0 : index
    %77 = vector.load %arg2[%c0_71, %c0_72] : memref<32x8xbf16, #tpu.memory_space<vmem>>, vector<16x8xbf16>
    %c8_73 = arith.constant 8 : index
    %c0_74 = arith.constant 0 : index
    %78 = vector.load %arg2[%c8_73, %c0_74] : memref<32x8xbf16, #tpu.memory_space<vmem>>, vector<16x8xbf16>
    %c16_75 = arith.constant 16 : index
    %c0_76 = arith.constant 0 : index
    %79 = vector.load %arg2[%c16_75, %c0_76] : memref<32x8xbf16, #tpu.memory_space<vmem>>, vector<16x8xbf16>
    %80 = tpu.concatenate %77, %78, %79 in 1 : vector<16x8xbf16>, vector<16x8xbf16>, vector<16x8xbf16> -> vector<16x24xbf16>
    %c288 = arith.constant 288 : index
    %c0_77 = arith.constant 0 : index
    %81 = vector.load %arg4[%c288, %c0_77] : memref<360x16xbf16, #tpu.memory_space<vmem>>, vector<24x16xbf16>
    %cst_78 = arith.constant dense<0.000000e+00> : vector<16x16xf32>
    %82 = tpu.matmul %80, %81, %cst_78 {dimension_numbers = #tpu.dot_dimension_numbers<[1], [0], [0], [1], [0, 0, 1, 1], [], []>} : vector<16x24xbf16>, vector<24x16xbf16>, vector<16x16xf32> -> vector<16x16xf32>
    %83 = vector.extract_strided_slice %0 {offsets = [4, 0], sizes = [1, 16], strides = [1, 1]} : vector<13x96xf32> to vector<1x16xf32>
    %84 = vector.broadcast %83 : vector<1x16xf32> to vector<16x16xf32>
    %85 = arith.addf %82, %84 : vector<16x16xf32>
    %cst_79 = arith.constant 0.000000e+00 : f32
    %86 = vector.broadcast %cst_79 : f32 to vector<16x16xf32>
    %87 = arith.maximumf %85, %86 : vector<16x16xf32>
    %cst_80 = arith.constant 0.000000e+00 : bf16
    %88 = vector.broadcast %cst_80 : bf16 to vector<16x16xbf16>
    %c0_81 = arith.constant 0 : index
    %c0_82 = arith.constant 0 : index
    %89 = vector.load %arg12[%c0_81, %c0_82] : memref<32x16xbf16, #tpu.memory_space<vmem>>, vector<16x16xbf16>
    tpu.vector_store %arg12[%c0_81, %c0_82], %88 {strides = array<i32>} : memref<32x16xbf16, #tpu.memory_space<vmem>>, vector<16x16xbf16>,
    %90 = arith.truncf %87 : vector<16x16xf32> to vector<16x16xbf16>
    %c16_83 = arith.constant 16 : index
    %c0_84 = arith.constant 0 : index
    %91 = vector.load %arg12[%c16_83, %c0_84] : memref<32x16xbf16, #tpu.memory_space<vmem>>, vector<16x16xbf16>
    tpu.vector_store %arg12[%c16_83, %c0_84], %90 {strides = array<i32>} : memref<32x16xbf16, #tpu.memory_space<vmem>>, vector<16x16xbf16>,
    %c0_85 = arith.constant 0 : index
    %c0_86 = arith.constant 0 : index
    %92 = vector.load %arg12[%c0_85, %c0_86] : memref<32x16xbf16, #tpu.memory_space<vmem>>, vector<16x16xbf16>
    %c8_87 = arith.constant 8 : index
    %c0_88 = arith.constant 0 : index
    %93 = vector.load %arg12[%c8_87, %c0_88] : memref<32x16xbf16, #tpu.memory_space<vmem>>, vector<16x16xbf16>
    %c16_89 = arith.constant 16 : index
    %c0_90 = arith.constant 0 : index
    %94 = vector.load %arg12[%c16_89, %c0_90] : memref<32x16xbf16, #tpu.memory_space<vmem>>, vector<16x16xbf16>
    %95 = tpu.concatenate %92, %93, %94 in 1 : vector<16x16xbf16>, vector<16x16xbf16>, vector<16x16xbf16> -> vector<16x48xbf16>
    %c312 = arith.constant 312 : index
    %c0_91 = arith.constant 0 : index
    %96 = vector.load %arg4[%c312, %c0_91] : memref<360x16xbf16, #tpu.memory_space<vmem>>, vector<48x16xbf16>
    %cst_92 = arith.constant dense<0.000000e+00> : vector<16x16xf32>
    %97 = tpu.matmul %95, %96, %cst_92 {dimension_numbers = #tpu.dot_dimension_numbers<[1], [0], [0], [1], [0, 0, 1, 1], [], []>} : vector<16x48xbf16>, vector<48x16xbf16>, vector<16x16xf32> -> vector<16x16xf32>
    %98 = vector.extract_strided_slice %0 {offsets = [5, 0], sizes = [1, 16], strides = [1, 1]} : vector<13x96xf32> to vector<1x16xf32>
    %99 = vector.broadcast %98 : vector<1x16xf32> to vector<16x16xf32>
    %100 = arith.addf %97, %99 : vector<16x16xf32>
    %cst_93 = arith.constant 0.000000e+00 : f32
    %101 = vector.broadcast %cst_93 : f32 to vector<16x16xf32>
    %102 = arith.maximumf %100, %101 : vector<16x16xf32>
    %c32_94 = arith.constant 32 : index
    %c0_95 = arith.constant 0 : index
    %103 = vector.load %arg6[%c32_94, %c0_95] : memref<64x48xbf16, #tpu.memory_space<vmem>>, vector<16x48xbf16>
    %104 = arith.truncf %102 : vector<16x16xf32> to vector<16x16xbf16>
    %cst_96 = arith.constant dense<0.000000e+00> : vector<16x48xf32>
    %105 = tpu.matmul %104, %103, %cst_96 {dimension_numbers = #tpu.dot_dimension_numbers<[1], [0], [0], [1], [0, 0, 1, 1], [], []>} : vector<16x16xbf16>, vector<16x48xbf16>, vector<16x48xf32> -> vector<16x48xf32>
    %106 = vector.extract_strided_slice %0 {offsets = [10, 0], sizes = [1, 48], strides = [1, 1]} : vector<13x96xf32> to vector<1x48xf32>
    %107 = vector.broadcast %106 : vector<1x48xf32> to vector<16x48xf32>
    %108 = arith.addf %105, %107 : vector<16x48xf32>
    %c16_97 = arith.constant 16 : index
    %c0_98 = arith.constant 0 : index
    %109 = vector.load %arg5[%c16_97, %c0_98] : memref<48x96xbf16, #tpu.memory_space<vmem>>, vector<32x96xbf16>
    %110 = vector.extract_strided_slice %0 {offsets = [7, 0], sizes = [1, 96], strides = [1, 1]} : vector<13x96xf32> to vector<1x96xf32>
    %c16_99 = arith.constant 16 : index
    %c0_100 = arith.constant 0 : index
    %111 = vector.load %arg6[%c16_99, %c0_100] : memref<64x48xbf16, #tpu.memory_space<vmem>>, vector<16x48xbf16>
    %112 = vector.extract_strided_slice %0 {offsets = [9, 0], sizes = [1, 48], strides = [1, 1]} : vector<13x96xf32> to vector<1x48xf32>
    %c48_101 = arith.constant 48 : index
    %c0_102 = arith.constant 0 : index
    %113 = vector.load %arg6[%c48_101, %c0_102] : memref<64x48xbf16, #tpu.memory_space<vmem>>, vector<16x48xbf16>
    %114 = vector.extract_strided_slice %0 {offsets = [11, 0], sizes = [1, 48], strides = [1, 1]} : vector<13x96xf32> to vector<1x48xf32>
    %cst_103 = arith.constant 0.000000e+00 : f32
    %115 = vector.broadcast %cst_103 : f32 to vector<8x32xf32>
    %cst_104 = arith.constant 0.000000e+00 : f32
    %116 = vector.broadcast %cst_104 : f32 to vector<8x16xf32>
    %cst_105 = arith.constant 0.000000e+00 : f32
    %117 = vector.broadcast %cst_105 : f32 to vector<8x16xf32>
    %118 = vector.extract_strided_slice %40 {offsets = [0, 0], sizes = [8, 96], strides = [1, 1]} : vector<64x96xf32> to vector<8x96xf32>
    %119 = arith.truncf %115 : vector<8x32xf32> to vector<8x32xbf16>
    %cst_106 = arith.constant dense<0.000000e+00> : vector<8x96xf32>
    %120 = tpu.matmul %119, %109, %cst_106 {dimension_numbers = #tpu.dot_dimension_numbers<[1], [0], [0], [1], [0, 0, 1, 1], [], []>} : vector<8x32xbf16>, vector<32x96xbf16>, vector<8x96xf32> -> vector<8x96xf32>
    %121 = vector.broadcast %110 : vector<1x96xf32> to vector<8x96xf32>
    %122 = arith.addf %120, %121 : vector<8x96xf32>
    %123 = vector.extract_strided_slice %118 {offsets = [0, 0], sizes = [8, 32], strides = [1, 1]} : vector<8x96xf32> to vector<8x32xf32>
    %124 = vector.extract_strided_slice %122 {offsets = [0, 0], sizes = [8, 32], strides = [1, 1]} : vector<8x96xf32> to vector<8x32xf32>
    %125 = arith.addf %123, %124 : vector<8x32xf32>
    %126 = arith.negf %125 : vector<8x32xf32>
    %127 = math.exp %126 : vector<8x32xf32>
    %cst_107 = arith.constant 1.000000e+00 : f32
    %128 = vector.broadcast %cst_107 : f32 to vector<8x32xf32>
    %129 = arith.addf %128, %127 : vector<8x32xf32>
    %130 = arith.divf %128, %129 : vector<8x32xf32>
    %131 = vector.extract_strided_slice %118 {offsets = [0, 32], sizes = [8, 32], strides = [1, 1]} : vector<8x96xf32> to vector<8x32xf32>
    %132 = vector.extract_strided_slice %122 {offsets = [0, 32], sizes = [8, 32], strides = [1, 1]} : vector<8x96xf32> to vector<8x32xf32>
    %133 = arith.addf %131, %132 : vector<8x32xf32>
    %134 = arith.negf %133 : vector<8x32xf32>
    %135 = math.exp %134 : vector<8x32xf32>
    %cst_108 = arith.constant 1.000000e+00 : f32
    %136 = vector.broadcast %cst_108 : f32 to vector<8x32xf32>
    %137 = arith.addf %136, %135 : vector<8x32xf32>
    %138 = arith.divf %136, %137 : vector<8x32xf32>
    %139 = vector.extract_strided_slice %118 {offsets = [0, 64], sizes = [8, 32], strides = [1, 1]} : vector<8x96xf32> to vector<8x32xf32>
    %140 = vector.extract_strided_slice %122 {offsets = [0, 64], sizes = [8, 32], strides = [1, 1]} : vector<8x96xf32> to vector<8x32xf32>
    %141 = arith.mulf %130, %140 : vector<8x32xf32>
    %142 = arith.addf %139, %141 : vector<8x32xf32>
    %143 = math.tanh %142 : vector<8x32xf32>
    %cst_109 = arith.constant 1.000000e+00 : f32
    %144 = vector.broadcast %cst_109 : f32 to vector<8x32xf32>
    %145 = arith.subf %144, %138 : vector<8x32xf32>
    %146 = arith.mulf %145, %143 : vector<8x32xf32>
    %147 = arith.mulf %138, %115 : vector<8x32xf32>
    %148 = arith.addf %146, %147 : vector<8x32xf32>
    %149 = vector.extract_strided_slice %40 {offsets = [8, 0], sizes = [8, 96], strides = [1, 1]} : vector<64x96xf32> to vector<8x96xf32>
    %150 = arith.truncf %148 : vector<8x32xf32> to vector<8x32xbf16>
    %cst_110 = arith.constant dense<0.000000e+00> : vector<8x96xf32>
    %151 = tpu.matmul %150, %109, %cst_110 {dimension_numbers = #tpu.dot_dimension_numbers<[1], [0], [0], [1], [0, 0, 1, 1], [], []>} : vector<8x32xbf16>, vector<32x96xbf16>, vector<8x96xf32> -> vector<8x96xf32>
    %152 = vector.broadcast %110 : vector<1x96xf32> to vector<8x96xf32>
    %153 = arith.addf %151, %152 : vector<8x96xf32>
    %154 = vector.extract_strided_slice %149 {offsets = [0, 0], sizes = [8, 32], strides = [1, 1]} : vector<8x96xf32> to vector<8x32xf32>
    %155 = vector.extract_strided_slice %153 {offsets = [0, 0], sizes = [8, 32], strides = [1, 1]} : vector<8x96xf32> to vector<8x32xf32>
    %156 = arith.addf %154, %155 : vector<8x32xf32>
    %157 = arith.negf %156 : vector<8x32xf32>
    %158 = math.exp %157 : vector<8x32xf32>
    %cst_111 = arith.constant 1.000000e+00 : f32
    %159 = vector.broadcast %cst_111 : f32 to vector<8x32xf32>
    %160 = arith.addf %159, %158 : vector<8x32xf32>
    %161 = arith.divf %159, %160 : vector<8x32xf32>
    %162 = vector.extract_strided_slice %149 {offsets = [0, 32], sizes = [8, 32], strides = [1, 1]} : vector<8x96xf32> to vector<8x32xf32>
    %163 = vector.extract_strided_slice %153 {offsets = [0, 32], sizes = [8, 32], strides = [1, 1]} : vector<8x96xf32> to vector<8x32xf32>
    %164 = arith.addf %162, %163 : vector<8x32xf32>
    %165 = arith.negf %164 : vector<8x32xf32>
    %166 = math.exp %165 : vector<8x32xf32>
    %cst_112 = arith.constant 1.000000e+00 : f32
    %167 = vector.broadcast %cst_112 : f32 to vector<8x32xf32>
    %168 = arith.addf %167, %166 : vector<8x32xf32>
    %169 = arith.divf %167, %168 : vector<8x32xf32>
    %170 = vector.extract_strided_slice %149 {offsets = [0, 64], sizes = [8, 32], strides = [1, 1]} : vector<8x96xf32> to vector<8x32xf32>
    %171 = vector.extract_strided_slice %153 {offsets = [0, 64], sizes = [8, 32], strides = [1, 1]} : vector<8x96xf32> to vector<8x32xf32>
    %172 = arith.mulf %161, %171 : vector<8x32xf32>
    %173 = arith.addf %170, %172 : vector<8x32xf32>
    %174 = math.tanh %173 : vector<8x32xf32>
    %cst_113 = arith.constant 1.000000e+00 : f32
    %175 = vector.broadcast %cst_113 : f32 to vector<8x32xf32>
    %176 = arith.subf %175, %169 : vector<8x32xf32>
    %177 = arith.mulf %176, %174 : vector<8x32xf32>
    %178 = arith.mulf %169, %148 : vector<8x32xf32>
    %179 = arith.addf %177, %178 : vector<8x32xf32>
    %180 = vector.extract_strided_slice %76 {offsets = [0, 0], sizes = [8, 48], strides = [1, 1]} : vector<32x48xf32> to vector<8x48xf32>
    %181 = arith.truncf %116 : vector<8x16xf32> to vector<8x16xbf16>
    %cst_114 = arith.constant dense<0.000000e+00> : vector<8x48xf32>
    %182 = tpu.matmul %181, %111, %cst_114 {dimension_numbers = #tpu.dot_dimension_numbers<[1], [0], [0], [1], [0, 0, 1, 1], [], []>} : vector<8x16xbf16>, vector<16x48xbf16>, vector<8x48xf32> -> vector<8x48xf32>
    %183 = vector.broadcast %112 : vector<1x48xf32> to vector<8x48xf32>
    %184 = arith.addf %182, %183 : vector<8x48xf32>
    %185 = vector.extract_strided_slice %180 {offsets = [0, 0], sizes = [8, 16], strides = [1, 1]} : vector<8x48xf32> to vector<8x16xf32>
    %186 = vector.extract_strided_slice %184 {offsets = [0, 0], sizes = [8, 16], strides = [1, 1]} : vector<8x48xf32> to vector<8x16xf32>
    %187 = arith.addf %185, %186 : vector<8x16xf32>
    %188 = arith.negf %187 : vector<8x16xf32>
    %189 = math.exp %188 : vector<8x16xf32>
    %cst_115 = arith.constant 1.000000e+00 : f32
    %190 = vector.broadcast %cst_115 : f32 to vector<8x16xf32>
    %191 = arith.addf %190, %189 : vector<8x16xf32>
    %192 = arith.divf %190, %191 : vector<8x16xf32>
    %193 = vector.extract_strided_slice %180 {offsets = [0, 16], sizes = [8, 16], strides = [1, 1]} : vector<8x48xf32> to vector<8x16xf32>
    %194 = vector.extract_strided_slice %184 {offsets = [0, 16], sizes = [8, 16], strides = [1, 1]} : vector<8x48xf32> to vector<8x16xf32>
    %195 = arith.addf %193, %194 : vector<8x16xf32>
    %196 = arith.negf %195 : vector<8x16xf32>
    %197 = math.exp %196 : vector<8x16xf32>
    %cst_116 = arith.constant 1.000000e+00 : f32
    %198 = vector.broadcast %cst_116 : f32 to vector<8x16xf32>
    %199 = arith.addf %198, %197 : vector<8x16xf32>
    %200 = arith.divf %198, %199 : vector<8x16xf32>
    %201 = vector.extract_strided_slice %180 {offsets = [0, 32], sizes = [8, 16], strides = [1, 1]} : vector<8x48xf32> to vector<8x16xf32>
    %202 = vector.extract_strided_slice %184 {offsets = [0, 32], sizes = [8, 16], strides = [1, 1]} : vector<8x48xf32> to vector<8x16xf32>
    %203 = arith.mulf %192, %202 : vector<8x16xf32>
    %204 = arith.addf %201, %203 : vector<8x16xf32>
    %205 = math.tanh %204 : vector<8x16xf32>
    %cst_117 = arith.constant 1.000000e+00 : f32
    %206 = vector.broadcast %cst_117 : f32 to vector<8x16xf32>
    %207 = arith.subf %206, %200 : vector<8x16xf32>
    %208 = arith.mulf %207, %205 : vector<8x16xf32>
    %209 = arith.mulf %200, %116 : vector<8x16xf32>
    %210 = arith.addf %208, %209 : vector<8x16xf32>
    %211 = vector.extract_strided_slice %40 {offsets = [16, 0], sizes = [8, 96], strides = [1, 1]} : vector<64x96xf32> to vector<8x96xf32>
    %212 = arith.truncf %179 : vector<8x32xf32> to vector<8x32xbf16>
    %cst_118 = arith.constant dense<0.000000e+00> : vector<8x96xf32>
    %213 = tpu.matmul %212, %109, %cst_118 {dimension_numbers = #tpu.dot_dimension_numbers<[1], [0], [0], [1], [0, 0, 1, 1], [], []>} : vector<8x32xbf16>, vector<32x96xbf16>, vector<8x96xf32> -> vector<8x96xf32>
    %214 = vector.broadcast %110 : vector<1x96xf32> to vector<8x96xf32>
    %215 = arith.addf %213, %214 : vector<8x96xf32>
    %216 = vector.extract_strided_slice %211 {offsets = [0, 0], sizes = [8, 32], strides = [1, 1]} : vector<8x96xf32> to vector<8x32xf32>
    %217 = vector.extract_strided_slice %215 {offsets = [0, 0], sizes = [8, 32], strides = [1, 1]} : vector<8x96xf32> to vector<8x32xf32>
    %218 = arith.addf %216, %217 : vector<8x32xf32>
    %219 = arith.negf %218 : vector<8x32xf32>
    %220 = math.exp %219 : vector<8x32xf32>
    %cst_119 = arith.constant 1.000000e+00 : f32
    %221 = vector.broadcast %cst_119 : f32 to vector<8x32xf32>
    %222 = arith.addf %221, %220 : vector<8x32xf32>
    %223 = arith.divf %221, %222 : vector<8x32xf32>
    %224 = vector.extract_strided_slice %211 {offsets = [0, 32], sizes = [8, 32], strides = [1, 1]} : vector<8x96xf32> to vector<8x32xf32>
    %225 = vector.extract_strided_slice %215 {offsets = [0, 32], sizes = [8, 32], strides = [1, 1]} : vector<8x96xf32> to vector<8x32xf32>
    %226 = arith.addf %224, %225 : vector<8x32xf32>
    %227 = arith.negf %226 : vector<8x32xf32>
    %228 = math.exp %227 : vector<8x32xf32>
    %cst_120 = arith.constant 1.000000e+00 : f32
    %229 = vector.broadcast %cst_120 : f32 to vector<8x32xf32>
    %230 = arith.addf %229, %228 : vector<8x32xf32>
    %231 = arith.divf %229, %230 : vector<8x32xf32>
    %232 = vector.extract_strided_slice %211 {offsets = [0, 64], sizes = [8, 32], strides = [1, 1]} : vector<8x96xf32> to vector<8x32xf32>
    %233 = vector.extract_strided_slice %215 {offsets = [0, 64], sizes = [8, 32], strides = [1, 1]} : vector<8x96xf32> to vector<8x32xf32>
    %234 = arith.mulf %223, %233 : vector<8x32xf32>
    %235 = arith.addf %232, %234 : vector<8x32xf32>
    %236 = math.tanh %235 : vector<8x32xf32>
    %cst_121 = arith.constant 1.000000e+00 : f32
    %237 = vector.broadcast %cst_121 : f32 to vector<8x32xf32>
    %238 = arith.subf %237, %231 : vector<8x32xf32>
    %239 = arith.mulf %238, %236 : vector<8x32xf32>
    %240 = arith.mulf %231, %179 : vector<8x32xf32>
    %241 = arith.addf %239, %240 : vector<8x32xf32>
    %242 = vector.extract_strided_slice %40 {offsets = [24, 0], sizes = [8, 96], strides = [1, 1]} : vector<64x96xf32> to vector<8x96xf32>
    %243 = arith.truncf %241 : vector<8x32xf32> to vector<8x32xbf16>
    %cst_122 = arith.constant dense<0.000000e+00> : vector<8x96xf32>
    %244 = tpu.matmul %243, %109, %cst_122 {dimension_numbers = #tpu.dot_dimension_numbers<[1], [0], [0], [1], [0, 0, 1, 1], [], []>} : vector<8x32xbf16>, vector<32x96xbf16>, vector<8x96xf32> -> vector<8x96xf32>
    %245 = vector.broadcast %110 : vector<1x96xf32> to vector<8x96xf32>
    %246 = arith.addf %244, %245 : vector<8x96xf32>
    %247 = vector.extract_strided_slice %242 {offsets = [0, 0], sizes = [8, 32], strides = [1, 1]} : vector<8x96xf32> to vector<8x32xf32>
    %248 = vector.extract_strided_slice %246 {offsets = [0, 0], sizes = [8, 32], strides = [1, 1]} : vector<8x96xf32> to vector<8x32xf32>
    %249 = arith.addf %247, %248 : vector<8x32xf32>
    %250 = arith.negf %249 : vector<8x32xf32>
    %251 = math.exp %250 : vector<8x32xf32>
    %cst_123 = arith.constant 1.000000e+00 : f32
    %252 = vector.broadcast %cst_123 : f32 to vector<8x32xf32>
    %253 = arith.addf %252, %251 : vector<8x32xf32>
    %254 = arith.divf %252, %253 : vector<8x32xf32>
    %255 = vector.extract_strided_slice %242 {offsets = [0, 32], sizes = [8, 32], strides = [1, 1]} : vector<8x96xf32> to vector<8x32xf32>
    %256 = vector.extract_strided_slice %246 {offsets = [0, 32], sizes = [8, 32], strides = [1, 1]} : vector<8x96xf32> to vector<8x32xf32>
    %257 = arith.addf %255, %256 : vector<8x32xf32>
    %258 = arith.negf %257 : vector<8x32xf32>
    %259 = math.exp %258 : vector<8x32xf32>
    %cst_124 = arith.constant 1.000000e+00 : f32
    %260 = vector.broadcast %cst_124 : f32 to vector<8x32xf32>
    %261 = arith.addf %260, %259 : vector<8x32xf32>
    %262 = arith.divf %260, %261 : vector<8x32xf32>
    %263 = vector.extract_strided_slice %242 {offsets = [0, 64], sizes = [8, 32], strides = [1, 1]} : vector<8x96xf32> to vector<8x32xf32>
    %264 = vector.extract_strided_slice %246 {offsets = [0, 64], sizes = [8, 32], strides = [1, 1]} : vector<8x96xf32> to vector<8x32xf32>
    %265 = arith.mulf %254, %264 : vector<8x32xf32>
    %266 = arith.addf %263, %265 : vector<8x32xf32>
    %267 = math.tanh %266 : vector<8x32xf32>
    %cst_125 = arith.constant 1.000000e+00 : f32
    %268 = vector.broadcast %cst_125 : f32 to vector<8x32xf32>
    %269 = arith.subf %268, %262 : vector<8x32xf32>
    %270 = arith.mulf %269, %267 : vector<8x32xf32>
    %271 = arith.mulf %262, %241 : vector<8x32xf32>
    %272 = arith.addf %270, %271 : vector<8x32xf32>
    %273 = vector.extract_strided_slice %76 {offsets = [8, 0], sizes = [8, 48], strides = [1, 1]} : vector<32x48xf32> to vector<8x48xf32>
    %274 = arith.truncf %210 : vector<8x16xf32> to vector<8x16xbf16>
    %cst_126 = arith.constant dense<0.000000e+00> : vector<8x48xf32>
    %275 = tpu.matmul %274, %111, %cst_126 {dimension_numbers = #tpu.dot_dimension_numbers<[1], [0], [0], [1], [0, 0, 1, 1], [], []>} : vector<8x16xbf16>, vector<16x48xbf16>, vector<8x48xf32> -> vector<8x48xf32>
    %276 = vector.broadcast %112 : vector<1x48xf32> to vector<8x48xf32>
    %277 = arith.addf %275, %276 : vector<8x48xf32>
    %278 = vector.extract_strided_slice %273 {offsets = [0, 0], sizes = [8, 16], strides = [1, 1]} : vector<8x48xf32> to vector<8x16xf32>
    %279 = vector.extract_strided_slice %277 {offsets = [0, 0], sizes = [8, 16], strides = [1, 1]} : vector<8x48xf32> to vector<8x16xf32>
    %280 = arith.addf %278, %279 : vector<8x16xf32>
    %281 = arith.negf %280 : vector<8x16xf32>
    %282 = math.exp %281 : vector<8x16xf32>
    %cst_127 = arith.constant 1.000000e+00 : f32
    %283 = vector.broadcast %cst_127 : f32 to vector<8x16xf32>
    %284 = arith.addf %283, %282 : vector<8x16xf32>
    %285 = arith.divf %283, %284 : vector<8x16xf32>
    %286 = vector.extract_strided_slice %273 {offsets = [0, 16], sizes = [8, 16], strides = [1, 1]} : vector<8x48xf32> to vector<8x16xf32>
    %287 = vector.extract_strided_slice %277 {offsets = [0, 16], sizes = [8, 16], strides = [1, 1]} : vector<8x48xf32> to vector<8x16xf32>
    %288 = arith.addf %286, %287 : vector<8x16xf32>
    %289 = arith.negf %288 : vector<8x16xf32>
    %290 = math.exp %289 : vector<8x16xf32>
    %cst_128 = arith.constant 1.000000e+00 : f32
    %291 = vector.broadcast %cst_128 : f32 to vector<8x16xf32>
    %292 = arith.addf %291, %290 : vector<8x16xf32>
    %293 = arith.divf %291, %292 : vector<8x16xf32>
    %294 = vector.extract_strided_slice %273 {offsets = [0, 32], sizes = [8, 16], strides = [1, 1]} : vector<8x48xf32> to vector<8x16xf32>
    %295 = vector.extract_strided_slice %277 {offsets = [0, 32], sizes = [8, 16], strides = [1, 1]} : vector<8x48xf32> to vector<8x16xf32>
    %296 = arith.mulf %285, %295 : vector<8x16xf32>
    %297 = arith.addf %294, %296 : vector<8x16xf32>
    %298 = math.tanh %297 : vector<8x16xf32>
    %cst_129 = arith.constant 1.000000e+00 : f32
    %299 = vector.broadcast %cst_129 : f32 to vector<8x16xf32>
    %300 = arith.subf %299, %293 : vector<8x16xf32>
    %301 = arith.mulf %300, %298 : vector<8x16xf32>
    %302 = arith.mulf %293, %210 : vector<8x16xf32>
    %303 = arith.addf %301, %302 : vector<8x16xf32>
    %304 = vector.extract_strided_slice %108 {offsets = [0, 0], sizes = [8, 48], strides = [1, 1]} : vector<16x48xf32> to vector<8x48xf32>
    %305 = arith.truncf %117 : vector<8x16xf32> to vector<8x16xbf16>
    %cst_130 = arith.constant dense<0.000000e+00> : vector<8x48xf32>
    %306 = tpu.matmul %305, %113, %cst_130 {dimension_numbers = #tpu.dot_dimension_numbers<[1], [0], [0], [1], [0, 0, 1, 1], [], []>} : vector<8x16xbf16>, vector<16x48xbf16>, vector<8x48xf32> -> vector<8x48xf32>
    %307 = vector.broadcast %114 : vector<1x48xf32> to vector<8x48xf32>
    %308 = arith.addf %306, %307 : vector<8x48xf32>
    %309 = vector.extract_strided_slice %304 {offsets = [0, 0], sizes = [8, 16], strides = [1, 1]} : vector<8x48xf32> to vector<8x16xf32>
    %310 = vector.extract_strided_slice %308 {offsets = [0, 0], sizes = [8, 16], strides = [1, 1]} : vector<8x48xf32> to vector<8x16xf32>
    %311 = arith.addf %309, %310 : vector<8x16xf32>
    %312 = arith.negf %311 : vector<8x16xf32>
    %313 = math.exp %312 : vector<8x16xf32>
    %cst_131 = arith.constant 1.000000e+00 : f32
    %314 = vector.broadcast %cst_131 : f32 to vector<8x16xf32>
    %315 = arith.addf %314, %313 : vector<8x16xf32>
    %316 = arith.divf %314, %315 : vector<8x16xf32>
    %317 = vector.extract_strided_slice %304 {offsets = [0, 16], sizes = [8, 16], strides = [1, 1]} : vector<8x48xf32> to vector<8x16xf32>
    %318 = vector.extract_strided_slice %308 {offsets = [0, 16], sizes = [8, 16], strides = [1, 1]} : vector<8x48xf32> to vector<8x16xf32>
    %319 = arith.addf %317, %318 : vector<8x16xf32>
    %320 = arith.negf %319 : vector<8x16xf32>
    %321 = math.exp %320 : vector<8x16xf32>
    %cst_132 = arith.constant 1.000000e+00 : f32
    %322 = vector.broadcast %cst_132 : f32 to vector<8x16xf32>
    %323 = arith.addf %322, %321 : vector<8x16xf32>
    %324 = arith.divf %322, %323 : vector<8x16xf32>
    %325 = vector.extract_strided_slice %304 {offsets = [0, 32], sizes = [8, 16], strides = [1, 1]} : vector<8x48xf32> to vector<8x16xf32>
    %326 = vector.extract_strided_slice %308 {offsets = [0, 32], sizes = [8, 16], strides = [1, 1]} : vector<8x48xf32> to vector<8x16xf32>
    %327 = arith.mulf %316, %326 : vector<8x16xf32>
    %328 = arith.addf %325, %327 : vector<8x16xf32>
    %329 = math.tanh %328 : vector<8x16xf32>
    %cst_133 = arith.constant 1.000000e+00 : f32
    %330 = vector.broadcast %cst_133 : f32 to vector<8x16xf32>
    %331 = arith.subf %330, %324 : vector<8x16xf32>
    %332 = arith.mulf %331, %329 : vector<8x16xf32>
    %333 = arith.mulf %324, %117 : vector<8x16xf32>
    %334 = arith.addf %332, %333 : vector<8x16xf32>
    %335 = vector.extract_strided_slice %40 {offsets = [32, 0], sizes = [8, 96], strides = [1, 1]} : vector<64x96xf32> to vector<8x96xf32>
    %336 = arith.truncf %272 : vector<8x32xf32> to vector<8x32xbf16>
    %cst_134 = arith.constant dense<0.000000e+00> : vector<8x96xf32>
    %337 = tpu.matmul %336, %109, %cst_134 {dimension_numbers = #tpu.dot_dimension_numbers<[1], [0], [0], [1], [0, 0, 1, 1], [], []>} : vector<8x32xbf16>, vector<32x96xbf16>, vector<8x96xf32> -> vector<8x96xf32>
    %338 = vector.broadcast %110 : vector<1x96xf32> to vector<8x96xf32>
    %339 = arith.addf %337, %338 : vector<8x96xf32>
    %340 = vector.extract_strided_slice %335 {offsets = [0, 0], sizes = [8, 32], strides = [1, 1]} : vector<8x96xf32> to vector<8x32xf32>
    %341 = vector.extract_strided_slice %339 {offsets = [0, 0], sizes = [8, 32], strides = [1, 1]} : vector<8x96xf32> to vector<8x32xf32>
    %342 = arith.addf %340, %341 : vector<8x32xf32>
    %343 = arith.negf %342 : vector<8x32xf32>
    %344 = math.exp %343 : vector<8x32xf32>
    %cst_135 = arith.constant 1.000000e+00 : f32
    %345 = vector.broadcast %cst_135 : f32 to vector<8x32xf32>
    %346 = arith.addf %345, %344 : vector<8x32xf32>
    %347 = arith.divf %345, %346 : vector<8x32xf32>
    %348 = vector.extract_strided_slice %335 {offsets = [0, 32], sizes = [8, 32], strides = [1, 1]} : vector<8x96xf32> to vector<8x32xf32>
    %349 = vector.extract_strided_slice %339 {offsets = [0, 32], sizes = [8, 32], strides = [1, 1]} : vector<8x96xf32> to vector<8x32xf32>
    %350 = arith.addf %348, %349 : vector<8x32xf32>
    %351 = arith.negf %350 : vector<8x32xf32>
    %352 = math.exp %351 : vector<8x32xf32>
    %cst_136 = arith.constant 1.000000e+00 : f32
    %353 = vector.broadcast %cst_136 : f32 to vector<8x32xf32>
    %354 = arith.addf %353, %352 : vector<8x32xf32>
    %355 = arith.divf %353, %354 : vector<8x32xf32>
    %356 = vector.extract_strided_slice %335 {offsets = [0, 64], sizes = [8, 32], strides = [1, 1]} : vector<8x96xf32> to vector<8x32xf32>
    %357 = vector.extract_strided_slice %339 {offsets = [0, 64], sizes = [8, 32], strides = [1, 1]} : vector<8x96xf32> to vector<8x32xf32>
    %358 = arith.mulf %347, %357 : vector<8x32xf32>
    %359 = arith.addf %356, %358 : vector<8x32xf32>
    %360 = math.tanh %359 : vector<8x32xf32>
    %cst_137 = arith.constant 1.000000e+00 : f32
    %361 = vector.broadcast %cst_137 : f32 to vector<8x32xf32>
    %362 = arith.subf %361, %355 : vector<8x32xf32>
    %363 = arith.mulf %362, %360 : vector<8x32xf32>
    %364 = arith.mulf %355, %272 : vector<8x32xf32>
    %365 = arith.addf %363, %364 : vector<8x32xf32>
    %366 = vector.extract_strided_slice %40 {offsets = [40, 0], sizes = [8, 96], strides = [1, 1]} : vector<64x96xf32> to vector<8x96xf32>
    %367 = arith.truncf %365 : vector<8x32xf32> to vector<8x32xbf16>
    %cst_138 = arith.constant dense<0.000000e+00> : vector<8x96xf32>
    %368 = tpu.matmul %367, %109, %cst_138 {dimension_numbers = #tpu.dot_dimension_numbers<[1], [0], [0], [1], [0, 0, 1, 1], [], []>} : vector<8x32xbf16>, vector<32x96xbf16>, vector<8x96xf32> -> vector<8x96xf32>
    %369 = vector.broadcast %110 : vector<1x96xf32> to vector<8x96xf32>
    %370 = arith.addf %368, %369 : vector<8x96xf32>
    %371 = vector.extract_strided_slice %366 {offsets = [0, 0], sizes = [8, 32], strides = [1, 1]} : vector<8x96xf32> to vector<8x32xf32>
    %372 = vector.extract_strided_slice %370 {offsets = [0, 0], sizes = [8, 32], strides = [1, 1]} : vector<8x96xf32> to vector<8x32xf32>
    %373 = arith.addf %371, %372 : vector<8x32xf32>
    %374 = arith.negf %373 : vector<8x32xf32>
    %375 = math.exp %374 : vector<8x32xf32>
    %cst_139 = arith.constant 1.000000e+00 : f32
    %376 = vector.broadcast %cst_139 : f32 to vector<8x32xf32>
    %377 = arith.addf %376, %375 : vector<8x32xf32>
    %378 = arith.divf %376, %377 : vector<8x32xf32>
    %379 = vector.extract_strided_slice %366 {offsets = [0, 32], sizes = [8, 32], strides = [1, 1]} : vector<8x96xf32> to vector<8x32xf32>
    %380 = vector.extract_strided_slice %370 {offsets = [0, 32], sizes = [8, 32], strides = [1, 1]} : vector<8x96xf32> to vector<8x32xf32>
    %381 = arith.addf %379, %380 : vector<8x32xf32>
    %382 = arith.negf %381 : vector<8x32xf32>
    %383 = math.exp %382 : vector<8x32xf32>
    %cst_140 = arith.constant 1.000000e+00 : f32
    %384 = vector.broadcast %cst_140 : f32 to vector<8x32xf32>
    %385 = arith.addf %384, %383 : vector<8x32xf32>
    %386 = arith.divf %384, %385 : vector<8x32xf32>
    %387 = vector.extract_strided_slice %366 {offsets = [0, 64], sizes = [8, 32], strides = [1, 1]} : vector<8x96xf32> to vector<8x32xf32>
    %388 = vector.extract_strided_slice %370 {offsets = [0, 64], sizes = [8, 32], strides = [1, 1]} : vector<8x96xf32> to vector<8x32xf32>
    %389 = arith.mulf %378, %388 : vector<8x32xf32>
    %390 = arith.addf %387, %389 : vector<8x32xf32>
    %391 = math.tanh %390 : vector<8x32xf32>
    %cst_141 = arith.constant 1.000000e+00 : f32
    %392 = vector.broadcast %cst_141 : f32 to vector<8x32xf32>
    %393 = arith.subf %392, %386 : vector<8x32xf32>
    %394 = arith.mulf %393, %391 : vector<8x32xf32>
    %395 = arith.mulf %386, %365 : vector<8x32xf32>
    %396 = arith.addf %394, %395 : vector<8x32xf32>
    %397 = vector.extract_strided_slice %76 {offsets = [16, 0], sizes = [8, 48], strides = [1, 1]} : vector<32x48xf32> to vector<8x48xf32>
    %398 = arith.truncf %303 : vector<8x16xf32> to vector<8x16xbf16>
    %cst_142 = arith.constant dense<0.000000e+00> : vector<8x48xf32>
    %399 = tpu.matmul %398, %111, %cst_142 {dimension_numbers = #tpu.dot_dimension_numbers<[1], [0], [0], [1], [0, 0, 1, 1], [], []>} : vector<8x16xbf16>, vector<16x48xbf16>, vector<8x48xf32> -> vector<8x48xf32>
    %400 = vector.broadcast %112 : vector<1x48xf32> to vector<8x48xf32>
    %401 = arith.addf %399, %400 : vector<8x48xf32>
    %402 = vector.extract_strided_slice %397 {offsets = [0, 0], sizes = [8, 16], strides = [1, 1]} : vector<8x48xf32> to vector<8x16xf32>
    %403 = vector.extract_strided_slice %401 {offsets = [0, 0], sizes = [8, 16], strides = [1, 1]} : vector<8x48xf32> to vector<8x16xf32>
    %404 = arith.addf %402, %403 : vector<8x16xf32>
    %405 = arith.negf %404 : vector<8x16xf32>
    %406 = math.exp %405 : vector<8x16xf32>
    %cst_143 = arith.constant 1.000000e+00 : f32
    %407 = vector.broadcast %cst_143 : f32 to vector<8x16xf32>
    %408 = arith.addf %407, %406 : vector<8x16xf32>
    %409 = arith.divf %407, %408 : vector<8x16xf32>
    %410 = vector.extract_strided_slice %397 {offsets = [0, 16], sizes = [8, 16], strides = [1, 1]} : vector<8x48xf32> to vector<8x16xf32>
    %411 = vector.extract_strided_slice %401 {offsets = [0, 16], sizes = [8, 16], strides = [1, 1]} : vector<8x48xf32> to vector<8x16xf32>
    %412 = arith.addf %410, %411 : vector<8x16xf32>
    %413 = arith.negf %412 : vector<8x16xf32>
    %414 = math.exp %413 : vector<8x16xf32>
    %cst_144 = arith.constant 1.000000e+00 : f32
    %415 = vector.broadcast %cst_144 : f32 to vector<8x16xf32>
    %416 = arith.addf %415, %414 : vector<8x16xf32>
    %417 = arith.divf %415, %416 : vector<8x16xf32>
    %418 = vector.extract_strided_slice %397 {offsets = [0, 32], sizes = [8, 16], strides = [1, 1]} : vector<8x48xf32> to vector<8x16xf32>
    %419 = vector.extract_strided_slice %401 {offsets = [0, 32], sizes = [8, 16], strides = [1, 1]} : vector<8x48xf32> to vector<8x16xf32>
    %420 = arith.mulf %409, %419 : vector<8x16xf32>
    %421 = arith.addf %418, %420 : vector<8x16xf32>
    %422 = math.tanh %421 : vector<8x16xf32>
    %cst_145 = arith.constant 1.000000e+00 : f32
    %423 = vector.broadcast %cst_145 : f32 to vector<8x16xf32>
    %424 = arith.subf %423, %417 : vector<8x16xf32>
    %425 = arith.mulf %424, %422 : vector<8x16xf32>
    %426 = arith.mulf %417, %303 : vector<8x16xf32>
    %427 = arith.addf %425, %426 : vector<8x16xf32>
    %428 = vector.extract_strided_slice %40 {offsets = [48, 0], sizes = [8, 96], strides = [1, 1]} : vector<64x96xf32> to vector<8x96xf32>
    %429 = arith.truncf %396 : vector<8x32xf32> to vector<8x32xbf16>
    %cst_146 = arith.constant dense<0.000000e+00> : vector<8x96xf32>
    %430 = tpu.matmul %429, %109, %cst_146 {dimension_numbers = #tpu.dot_dimension_numbers<[1], [0], [0], [1], [0, 0, 1, 1], [], []>} : vector<8x32xbf16>, vector<32x96xbf16>, vector<8x96xf32> -> vector<8x96xf32>
    %431 = vector.broadcast %110 : vector<1x96xf32> to vector<8x96xf32>
    %432 = arith.addf %430, %431 : vector<8x96xf32>
    %433 = vector.extract_strided_slice %428 {offsets = [0, 0], sizes = [8, 32], strides = [1, 1]} : vector<8x96xf32> to vector<8x32xf32>
    %434 = vector.extract_strided_slice %432 {offsets = [0, 0], sizes = [8, 32], strides = [1, 1]} : vector<8x96xf32> to vector<8x32xf32>
    %435 = arith.addf %433, %434 : vector<8x32xf32>
    %436 = arith.negf %435 : vector<8x32xf32>
    %437 = math.exp %436 : vector<8x32xf32>
    %cst_147 = arith.constant 1.000000e+00 : f32
    %438 = vector.broadcast %cst_147 : f32 to vector<8x32xf32>
    %439 = arith.addf %438, %437 : vector<8x32xf32>
    %440 = arith.divf %438, %439 : vector<8x32xf32>
    %441 = vector.extract_strided_slice %428 {offsets = [0, 32], sizes = [8, 32], strides = [1, 1]} : vector<8x96xf32> to vector<8x32xf32>
    %442 = vector.extract_strided_slice %432 {offsets = [0, 32], sizes = [8, 32], strides = [1, 1]} : vector<8x96xf32> to vector<8x32xf32>
    %443 = arith.addf %441, %442 : vector<8x32xf32>
    %444 = arith.negf %443 : vector<8x32xf32>
    %445 = math.exp %444 : vector<8x32xf32>
    %cst_148 = arith.constant 1.000000e+00 : f32
    %446 = vector.broadcast %cst_148 : f32 to vector<8x32xf32>
    %447 = arith.addf %446, %445 : vector<8x32xf32>
    %448 = arith.divf %446, %447 : vector<8x32xf32>
    %449 = vector.extract_strided_slice %428 {offsets = [0, 64], sizes = [8, 32], strides = [1, 1]} : vector<8x96xf32> to vector<8x32xf32>
    %450 = vector.extract_strided_slice %432 {offsets = [0, 64], sizes = [8, 32], strides = [1, 1]} : vector<8x96xf32> to vector<8x32xf32>
    %451 = arith.mulf %440, %450 : vector<8x32xf32>
    %452 = arith.addf %449, %451 : vector<8x32xf32>
    %453 = math.tanh %452 : vector<8x32xf32>
    %cst_149 = arith.constant 1.000000e+00 : f32
    %454 = vector.broadcast %cst_149 : f32 to vector<8x32xf32>
    %455 = arith.subf %454, %448 : vector<8x32xf32>
    %456 = arith.mulf %455, %453 : vector<8x32xf32>
    %457 = arith.mulf %448, %396 : vector<8x32xf32>
    %458 = arith.addf %456, %457 : vector<8x32xf32>
    %459 = vector.extract_strided_slice %40 {offsets = [56, 0], sizes = [8, 96], strides = [1, 1]} : vector<64x96xf32> to vector<8x96xf32>
    %460 = arith.truncf %458 : vector<8x32xf32> to vector<8x32xbf16>
    %cst_150 = arith.constant dense<0.000000e+00> : vector<8x96xf32>
    %461 = tpu.matmul %460, %109, %cst_150 {dimension_numbers = #tpu.dot_dimension_numbers<[1], [0], [0], [1], [0, 0, 1, 1], [], []>} : vector<8x32xbf16>, vector<32x96xbf16>, vector<8x96xf32> -> vector<8x96xf32>
    %462 = vector.broadcast %110 : vector<1x96xf32> to vector<8x96xf32>
    %463 = arith.addf %461, %462 : vector<8x96xf32>
    %464 = vector.extract_strided_slice %459 {offsets = [0, 0], sizes = [8, 32], strides = [1, 1]} : vector<8x96xf32> to vector<8x32xf32>
    %465 = vector.extract_strided_slice %463 {offsets = [0, 0], sizes = [8, 32], strides = [1, 1]} : vector<8x96xf32> to vector<8x32xf32>
    %466 = arith.addf %464, %465 : vector<8x32xf32>
    %467 = arith.negf %466 : vector<8x32xf32>
    %468 = math.exp %467 : vector<8x32xf32>
    %cst_151 = arith.constant 1.000000e+00 : f32
    %469 = vector.broadcast %cst_151 : f32 to vector<8x32xf32>
    %470 = arith.addf %469, %468 : vector<8x32xf32>
    %471 = arith.divf %469, %470 : vector<8x32xf32>
    %472 = vector.extract_strided_slice %459 {offsets = [0, 32], sizes = [8, 32], strides = [1, 1]} : vector<8x96xf32> to vector<8x32xf32>
    %473 = vector.extract_strided_slice %463 {offsets = [0, 32], sizes = [8, 32], strides = [1, 1]} : vector<8x96xf32> to vector<8x32xf32>
    %474 = arith.addf %472, %473 : vector<8x32xf32>
    %475 = arith.negf %474 : vector<8x32xf32>
    %476 = math.exp %475 : vector<8x32xf32>
    %cst_152 = arith.constant 1.000000e+00 : f32
    %477 = vector.broadcast %cst_152 : f32 to vector<8x32xf32>
    %478 = arith.addf %477, %476 : vector<8x32xf32>
    %479 = arith.divf %477, %478 : vector<8x32xf32>
    %480 = vector.extract_strided_slice %459 {offsets = [0, 64], sizes = [8, 32], strides = [1, 1]} : vector<8x96xf32> to vector<8x32xf32>
    %481 = vector.extract_strided_slice %463 {offsets = [0, 64], sizes = [8, 32], strides = [1, 1]} : vector<8x96xf32> to vector<8x32xf32>
    %482 = arith.mulf %471, %481 : vector<8x32xf32>
    %483 = arith.addf %480, %482 : vector<8x32xf32>
    %484 = math.tanh %483 : vector<8x32xf32>
    %cst_153 = arith.constant 1.000000e+00 : f32
    %485 = vector.broadcast %cst_153 : f32 to vector<8x32xf32>
    %486 = arith.subf %485, %479 : vector<8x32xf32>
    %487 = arith.mulf %486, %484 : vector<8x32xf32>
    %488 = arith.mulf %479, %458 : vector<8x32xf32>
    %489 = arith.addf %487, %488 : vector<8x32xf32>
    %490 = vector.extract_strided_slice %76 {offsets = [24, 0], sizes = [8, 48], strides = [1, 1]} : vector<32x48xf32> to vector<8x48xf32>
    %491 = arith.truncf %427 : vector<8x16xf32> to vector<8x16xbf16>
    %cst_154 = arith.constant dense<0.000000e+00> : vector<8x48xf32>
    %492 = tpu.matmul %491, %111, %cst_154 {dimension_numbers = #tpu.dot_dimension_numbers<[1], [0], [0], [1], [0, 0, 1, 1], [], []>} : vector<8x16xbf16>, vector<16x48xbf16>, vector<8x48xf32> -> vector<8x48xf32>
    %493 = vector.broadcast %112 : vector<1x48xf32> to vector<8x48xf32>
    %494 = arith.addf %492, %493 : vector<8x48xf32>
    %495 = vector.extract_strided_slice %490 {offsets = [0, 0], sizes = [8, 16], strides = [1, 1]} : vector<8x48xf32> to vector<8x16xf32>
    %496 = vector.extract_strided_slice %494 {offsets = [0, 0], sizes = [8, 16], strides = [1, 1]} : vector<8x48xf32> to vector<8x16xf32>
    %497 = arith.addf %495, %496 : vector<8x16xf32>
    %498 = arith.negf %497 : vector<8x16xf32>
    %499 = math.exp %498 : vector<8x16xf32>
    %cst_155 = arith.constant 1.000000e+00 : f32
    %500 = vector.broadcast %cst_155 : f32 to vector<8x16xf32>
    %501 = arith.addf %500, %499 : vector<8x16xf32>
    %502 = arith.divf %500, %501 : vector<8x16xf32>
    %503 = vector.extract_strided_slice %490 {offsets = [0, 16], sizes = [8, 16], strides = [1, 1]} : vector<8x48xf32> to vector<8x16xf32>
    %504 = vector.extract_strided_slice %494 {offsets = [0, 16], sizes = [8, 16], strides = [1, 1]} : vector<8x48xf32> to vector<8x16xf32>
    %505 = arith.addf %503, %504 : vector<8x16xf32>
    %506 = arith.negf %505 : vector<8x16xf32>
    %507 = math.exp %506 : vector<8x16xf32>
    %cst_156 = arith.constant 1.000000e+00 : f32
    %508 = vector.broadcast %cst_156 : f32 to vector<8x16xf32>
    %509 = arith.addf %508, %507 : vector<8x16xf32>
    %510 = arith.divf %508, %509 : vector<8x16xf32>
    %511 = vector.extract_strided_slice %490 {offsets = [0, 32], sizes = [8, 16], strides = [1, 1]} : vector<8x48xf32> to vector<8x16xf32>
    %512 = vector.extract_strided_slice %494 {offsets = [0, 32], sizes = [8, 16], strides = [1, 1]} : vector<8x48xf32> to vector<8x16xf32>
    %513 = arith.mulf %502, %512 : vector<8x16xf32>
    %514 = arith.addf %511, %513 : vector<8x16xf32>
    %515 = math.tanh %514 : vector<8x16xf32>
    %cst_157 = arith.constant 1.000000e+00 : f32
    %516 = vector.broadcast %cst_157 : f32 to vector<8x16xf32>
    %517 = arith.subf %516, %510 : vector<8x16xf32>
    %518 = arith.mulf %517, %515 : vector<8x16xf32>
    %519 = arith.mulf %510, %427 : vector<8x16xf32>
    %520 = arith.addf %518, %519 : vector<8x16xf32>
    %521 = vector.extract_strided_slice %108 {offsets = [8, 0], sizes = [8, 48], strides = [1, 1]} : vector<16x48xf32> to vector<8x48xf32>
    %522 = arith.truncf %334 : vector<8x16xf32> to vector<8x16xbf16>
    %cst_158 = arith.constant dense<0.000000e+00> : vector<8x48xf32>
    %523 = tpu.matmul %522, %113, %cst_158 {dimension_numbers = #tpu.dot_dimension_numbers<[1], [0], [0], [1], [0, 0, 1, 1], [], []>} : vector<8x16xbf16>, vector<16x48xbf16>, vector<8x48xf32> -> vector<8x48xf32>
    %524 = vector.broadcast %114 : vector<1x48xf32> to vector<8x48xf32>
    %525 = arith.addf %523, %524 : vector<8x48xf32>
    %526 = vector.extract_strided_slice %521 {offsets = [0, 0], sizes = [8, 16], strides = [1, 1]} : vector<8x48xf32> to vector<8x16xf32>
    %527 = vector.extract_strided_slice %525 {offsets = [0, 0], sizes = [8, 16], strides = [1, 1]} : vector<8x48xf32> to vector<8x16xf32>
    %528 = arith.addf %526, %527 : vector<8x16xf32>
    %529 = arith.negf %528 : vector<8x16xf32>
    %530 = math.exp %529 : vector<8x16xf32>
    %cst_159 = arith.constant 1.000000e+00 : f32
    %531 = vector.broadcast %cst_159 : f32 to vector<8x16xf32>
    %532 = arith.addf %531, %530 : vector<8x16xf32>
    %533 = arith.divf %531, %532 : vector<8x16xf32>
    %534 = vector.extract_strided_slice %521 {offsets = [0, 16], sizes = [8, 16], strides = [1, 1]} : vector<8x48xf32> to vector<8x16xf32>
    %535 = vector.extract_strided_slice %525 {offsets = [0, 16], sizes = [8, 16], strides = [1, 1]} : vector<8x48xf32> to vector<8x16xf32>
    %536 = arith.addf %534, %535 : vector<8x16xf32>
    %537 = arith.negf %536 : vector<8x16xf32>
    %538 = math.exp %537 : vector<8x16xf32>
    %cst_160 = arith.constant 1.000000e+00 : f32
    %539 = vector.broadcast %cst_160 : f32 to vector<8x16xf32>
    %540 = arith.addf %539, %538 : vector<8x16xf32>
    %541 = arith.divf %539, %540 : vector<8x16xf32>
    %542 = vector.extract_strided_slice %521 {offsets = [0, 32], sizes = [8, 16], strides = [1, 1]} : vector<8x48xf32> to vector<8x16xf32>
    %543 = vector.extract_strided_slice %525 {offsets = [0, 32], sizes = [8, 16], strides = [1, 1]} : vector<8x48xf32> to vector<8x16xf32>
    %544 = arith.mulf %533, %543 : vector<8x16xf32>
    %545 = arith.addf %542, %544 : vector<8x16xf32>
    %546 = math.tanh %545 : vector<8x16xf32>
    %cst_161 = arith.constant 1.000000e+00 : f32
    %547 = vector.broadcast %cst_161 : f32 to vector<8x16xf32>
    %548 = arith.subf %547, %541 : vector<8x16xf32>
    %549 = arith.mulf %548, %546 : vector<8x16xf32>
    %550 = arith.mulf %541, %334 : vector<8x16xf32>
    %551 = arith.addf %549, %550 : vector<8x16xf32>
    %552 = arith.truncf %489 : vector<8x32xf32> to vector<8x32xbf16>
    %553 = arith.truncf %520 : vector<8x16xf32> to vector<8x16xbf16>
    %554 = arith.truncf %551 : vector<8x16xf32> to vector<8x16xbf16>
    %c0_162 = arith.constant 0 : index
    %c0_163 = arith.constant 0 : index
    %555 = vector.load %arg3[%c0_162, %c0_163] : memref<8x32xbf16, #tpu.memory_space<vmem>>, vector<8x32xbf16>
    %556 = tpu.concatenate %552, %553, %554, %555 in 1 : vector<8x32xbf16>, vector<8x16xbf16>, vector<8x16xbf16>, vector<8x32xbf16> -> vector<8x96xbf16>
    %c0_164 = arith.constant 0 : index
    %c0_165 = arith.constant 0 : index
    %557 = vector.load %arg7[%c0_164, %c0_165] : memref<96x8xbf16, #tpu.memory_space<vmem>>, vector<96x8xbf16>
    %cst_166 = arith.constant dense<0.000000e+00> : vector<8x8xf32>
    %558 = tpu.matmul %556, %557, %cst_166 {dimension_numbers = #tpu.dot_dimension_numbers<[1], [0], [0], [1], [0, 0, 1, 1], [], []>} : vector<8x96xbf16>, vector<96x8xbf16>, vector<8x8xf32> -> vector<8x8xf32>
    %559 = vector.extract_strided_slice %0 {offsets = [12, 0], sizes = [1, 8], strides = [1, 1]} : vector<13x96xf32> to vector<1x8xf32>
    %560 = vector.broadcast %559 : vector<1x8xf32> to vector<8x8xf32>
    %561 = arith.addf %558, %560 : vector<8x8xf32>
    %c0_167 = arith.constant 0 : index
    %c0_168 = arith.constant 0 : index
    %562 = vector.load %arg9[%c0_167, %c0_168] : memref<8x8xf32, #tpu.memory_space<vmem>>, vector<8x8xf32>
    tpu.vector_store %arg9[%c0_167, %c0_168], %561 {strides = array<i32>} : memref<8x8xf32, #tpu.memory_space<vmem>>, vector<8x8xf32>,
    return
  }
}

</mosaic_0001>

<llo_original>
// kernel: tpu_custom_call.1
$region0: #{tpu_custom_call.1}
  #allocation0 [shape = 'u32[]', space=smem, size = 0x4, offset = 0x4, fixed_abs, tag = 'smem constant byte address 0x4 - core index']
  #allocation1 [shape = 'u32[144,128]{1,0:T(1,128)}', space=vmem, size = 0x12000, scoped, tag = 'internal scratch']
  #allocation2 [shape = 'bf16[112,16]{1,0:T(8,128)(2,1)}', space=vmem, size = 0x7000, scoped, tag = 'scratch operand']
  #allocation3 [shape = 'bf16[64,16]{1,0:T(8,128)(2,1)}', space=vmem, size = 0x4000, scoped, tag = 'scratch operand']
  #allocation4 [shape = 'bf16[32,16]{1,0:T(8,128)(2,1)}', space=vmem, size = 0x2000, scoped, tag = 'scratch operand']
  %s0 = inlined_call_operand.vmem [shape: bf16[112,8], index: 0, kind: input, shape index: {}]
  %s1 = inlined_call_operand.vmem [shape: bf16[64,8], index: 1, kind: input, shape index: {}]
  %s2 = inlined_call_operand.vmem [shape: bf16[32,8], index: 2, kind: input, shape index: {}]
  %s3 = inlined_call_operand.vmem [shape: bf16[8,32], index: 3, kind: input, shape index: {}]
  %s4 = inlined_call_operand.vmem [shape: bf16[360,16], index: 4, kind: input, shape index: {}]
  %s5 = inlined_call_operand.vmem [shape: bf16[48,96], index: 5, kind: input, shape index: {}]
  %s6 = inlined_call_operand.vmem [shape: bf16[64,48], index: 6, kind: input, shape index: {}]
  %s7 = inlined_call_operand.vmem [shape: bf16[96,8], index: 7, kind: input, shape index: {}]
  %s8 = inlined_call_operand.vmem [shape: f32[13,96], index: 8, kind: input, shape index: {}]
  %s9 = inlined_call_operand.hbm [shape: f32[8,8], index: 9, kind: output, shape index: {}]
  %s10 = sld [smem:[#allocation0]]
  $region46: #{tpu_custom_call.1} parent=0
    _
  %s12 = ssub.s32 1, %s10
  %s13 = scalar_select 0, %s12, %s10
  $region1: #{tpu_custom_call.1} parent=0
    #allocation5 [shape = 'u8[4096]{0}', space=vmem, size = 0x1000, scoped, tag = 'output window, operand 0, single buffered']
    #allocation6 [shape = 's32[1]{0}', space=sflag, size = 0x4, scoped, tag = 'scoped memory for tpu_custom_call.1']
    %14 = vsyncpa [#allocation6], 0
    // Predicated region
    $region2: #{tpu_custom_call.1} parent=1 // pred_check
      _
    $region3: #{tpu_custom_call.1} parent=1 // pred_check_branch
      %16 = sbr.rel (0) target = $region5
    $region4: #{tpu_custom_call.1} parent=1 // pred_region
      _
    $region5: #{tpu_custom_call.1} parent=1 // pred_fallthru
      _
    // Predicated region
    $region6: #{tpu_custom_call.1} parent=1 // pred_check
      _
    $region7: #{tpu_custom_call.1} parent=1 // pred_check_branch
      %18 = sbr.rel (0) target = $region9
    $region8: #{tpu_custom_call.1} parent=1 // pred_region
      _
    $region9: #{tpu_custom_call.1} parent=1 // pred_fallthru
      _
    // Predicated region
    $region10: #{tpu_custom_call.1} parent=1 // pred_check
      _
    $region11: #{tpu_custom_call.1} parent=1 // pred_check_branch
      %20 = sbr.rel (0) target = $region13
    $region12: #{tpu_custom_call.1} parent=1 // pred_region
      _
    $region13: #{tpu_custom_call.1} parent=1 // pred_fallthru
      _
    // Predicated region
    $region14: #{tpu_custom_call.1} parent=1 // pred_check
      _
    $region15: #{tpu_custom_call.1} parent=1 // pred_check_branch
      %22 = sbr.rel (0) target = $region17
    $region16: #{tpu_custom_call.1} parent=1 // pred_region
      _
    $region17: #{tpu_custom_call.1} parent=1 // pred_fallthru
      _
    // Predicated region
    $region18: #{tpu_custom_call.1} parent=1 // pred_check
      _
    $region19: #{tpu_custom_call.1} parent=1 // pred_check_branch
      %24 = sbr.rel (0) target = $region21
    $region20: #{tpu_custom_call.1} parent=1 // pred_region
      _
    $region21: #{tpu_custom_call.1} parent=1 // pred_fallthru
      _
    // Predicated region
    $region22: #{tpu_custom_call.1} parent=1 // pred_check
      _
    $region23: #{tpu_custom_call.1} parent=1 // pred_check_branch
      %26 = sbr.rel (0) target = $region25
    $region24: #{tpu_custom_call.1} parent=1 // pred_region
      _
    $region25: #{tpu_custom_call.1} parent=1 // pred_fallthru
      _
    // Predicated region
    $region26: #{tpu_custom_call.1} parent=1 // pred_check
      _
    $region27: #{tpu_custom_call.1} parent=1 // pred_check_branch
      %28 = sbr.rel (0) target = $region29
    $region28: #{tpu_custom_call.1} parent=1 // pred_region
      _
    $region29: #{tpu_custom_call.1} parent=1 // pred_fallthru
      _
    // Predicated region
    $region30: #{tpu_custom_call.1} parent=1 // pred_check
      _
    $region31: #{tpu_custom_call.1} parent=1 // pred_check_branch
      %30 = sbr.rel (0) target = $region33
    $region32: #{tpu_custom_call.1} parent=1 // pred_region
      _
    $region33: #{tpu_custom_call.1} parent=1 // pred_fallthru
      _
    // Predicated region
    $region34: #{tpu_custom_call.1} parent=1 // pred_check
      _
    $region35: #{tpu_custom_call.1} parent=1 // pred_check_branch
      %32 = sbr.rel (0) target = $region37
    $region36: #{tpu_custom_call.1} parent=1 // pred_region
      _
    $region37: #{tpu_custom_call.1} parent=1 // pred_fallthru
      _
    %v34 = vld [vmem:[%s8] sm:$0xff]
    %v35 = vld [vmem:[%s8 + $0x8] sm:$0x1f]
    %v36 = vld [vmem:[%s0] sm:$0xf]
    %v37 = vld [vmem:[%s0 + $0x4] sm:$0xf]
    %v38 = vld [vmem:[%s0 + $0x8] sm:$0xf]
    %v39 = vld [vmem:[%s0 + $0xc] sm:$0xf]
    %v40 = vld [vmem:[%s0 + $0x10] sm:$0xf]
    %v41 = vld [vmem:[%s0 + $0x14] sm:$0xf]
    %v42 = vld [vmem:[%s0 + $0x18] sm:$0xf]
    %v43 = vld [vmem:[%s0 + $0x1c] sm:$0xf]
    %v44 = vld [vmem:[%s0 + $0x20] sm:$0xf]
    %v45 = vld [vmem:[%s0 + $0x24] sm:$0xf]
    %v46 = vld [vmem:[%s0 + $0x28] sm:$0xf]
    %v47 = vld [vmem:[%s0 + $0x2c] sm:$0xf]
    %v48 = vld [vmem:[%s0 + $0x30] sm:$0xf]
    %v49 = vld [vmem:[%s0 + $0x34] sm:$0xf]
    %v58 = vunpack.c.l.b16 %v36
    %v59 = vunpack.c.l.b16 %v37
    %v60 = vunpack.c.l.b16 %v38
    %v61 = vunpack.c.l.b16 %v39
    %v62 = vunpack.c.l.b16 %v40
    %v63 = vunpack.c.l.b16 %v41
    %v64 = vunpack.c.l.b16 %v42
    %v65 = vunpack.c.l.b16 %v43
    %v66 = vpack.c.b16 %v59, %v58
    %v67 = vpack.c.b16 %v61, %v60
    %v68 = vpack.c.b16 %v63, %v62
    %v69 = vpack.c.b16 %v65, %v64
    %v71 = vunpack.c.l.b16 %v44
    %v72 = vpack.c.b16 %v60, %v59
    %v73 = vpack.c.b16 %v62, %v61
    %v74 = vpack.c.b16 %v64, %v63
    %v75 = vpack.c.b16 %v71, %v65
    %76 = vrot.lane.b32.xlu0 %v72, 8
    %v77 = vpop.permute.xlu0 %76
    %78 = vrot.lane.b32.xlu0 %v73, 8
    %v79 = vpop.permute.xlu0 %78
    %80 = vrot.lane.b32.xlu0 %v74, 8
    %v81 = vpop.permute.xlu0 %80
    %82 = vrot.lane.b32.xlu0 %v75, 8
    %v83 = vpop.permute.xlu0 %82
    %v85 = vunpack.c.l.b16 %v45
    %v86 = vpack.c.b16 %v85, %v71
    %87 = vrot.lane.b32.xlu0 %v67, 16
    %v88 = vpop.permute.xlu0 %87
    %89 = vrot.lane.b32.xlu0 %v68, 16
    %v90 = vpop.permute.xlu0 %89
    %91 = vrot.lane.b32.xlu0 %v69, 16
    %v92 = vpop.permute.xlu0 %91
    %93 = vrot.lane.b32.xlu0 %v86, 16
    %v94 = vpop.permute.xlu0 %93
    %v96 = vunpack.c.l.b16 %v46
    %v97 = vpack.c.b16 %v96, %v85
    %98 = vrot.lane.b32.xlu0 %v73, 24
    %v99 = vpop.permute.xlu0 %98
    %100 = vrot.lane.b32.xlu0 %v74, 24
    %v101 = vpop.permute.xlu0 %100
    %102 = vrot.lane.b32.xlu0 %v75, 24
    %v103 = vpop.permute.xlu0 %102
    %104 = vrot.lane.b32.xlu0 %v97, 24
    %v105 = vpop.permute.xlu0 %104
    %v107 = vunpack.c.l.b16 %v47
    %v108 = vpack.c.b16 %v107, %v96
    %109 = vrot.lane.b32.xlu0 %v68, 32
    %v110 = vpop.permute.xlu0 %109
    %111 = vrot.lane.b32.xlu0 %v69, 32
    %v112 = vpop.permute.xlu0 %111
    %113 = vrot.lane.b32.xlu0 %v86, 32
    %v114 = vpop.permute.xlu0 %113
    %115 = vrot.lane.b32.xlu0 %v108, 32
    %v116 = vpop.permute.xlu0 %115
    %v118 = vunpack.c.l.b16 %v48
    %v119 = vpack.c.b16 %v118, %v107
    %120 = vrot.lane.b32.xlu0 %v74, 40
    %v121 = vpop.permute.xlu0 %120
    %122 = vrot.lane.b32.xlu0 %v75, 40
    %v123 = vpop.permute.xlu0 %122
    %124 = vrot.lane.b32.xlu0 %v97, 40
    %v125 = vpop.permute.xlu0 %124
    %126 = vrot.lane.b32.xlu0 %v119, 40
    %v127 = vpop.permute.xlu0 %126
    %v129 = vunpack.c.l.b16 %v49
    %v130 = vpack.c.b16 %v129, %v118
    %131 = vrot.lane.b32.xlu0 %v69, 48
    %v132 = vpop.permute.xlu0 %131
    %133 = vrot.lane.b32.xlu0 %v86, 48
    %v134 = vpop.permute.xlu0 %133
    %135 = vrot.lane.b32.xlu0 %v108, 48
    %v136 = vpop.permute.xlu0 %135
    %137 = vrot.lane.b32.xlu0 %v130, 48
    %v138 = vpop.permute.xlu0 %137
    %vm139 = vcmask 64512
    %v142 = vsel %vm139, %v66, %v77
    %v145 = vsel %vm139, %v67, %v79
    %v148 = vsel %vm139, %v68, %v81
    %v151 = vsel %vm139, %v69, %v83
    %vm152 = vcmask 130048
    %v154 = vsel %vm152, %v142, %v88
    %v156 = vsel %vm152, %v145, %v90
    %v158 = vsel %vm152, %v148, %v92
    %v160 = vsel %vm152, %v151, %v94
    %vm161 = vcmask 195584
    %v163 = vsel %vm161, %v154, %v99
    %v165 = vsel %vm161, %v156, %v101
    %v167 = vsel %vm161, %v158, %v103
    %v169 = vsel %vm161, %v160, %v105
    %vm170 = vcmask 261120
    %v172 = vsel %vm170, %v163, %v110
    %v174 = vsel %vm170, %v165, %v112
    %v176 = vsel %vm170, %v167, %v114
    %v178 = vsel %vm170, %v169, %v116
    %vm179 = vcmask 326656
    %v181 = vsel %vm179, %v172, %v121
    %v183 = vsel %vm179, %v174, %v123
    %v185 = vsel %vm179, %v176, %v125
    %v187 = vsel %vm179, %v178, %v127
    %vm188 = vcmask 392192
    %v190 = vsel %vm188, %v181, %v132
    %v192 = vsel %vm188, %v183, %v134
    %v194 = vsel %vm188, %v185, %v136
    %v196 = vsel %vm188, %v187, %v138
    %v197 = vld [vmem:[%s4] sm:$0xf]
    %v198 = vld [vmem:[%s4 + $0x4] sm:$0xf]
    %v199 = vld [vmem:[%s4 + $0x8] sm:$0xf]
    %v200 = vld [vmem:[%s4 + $0xc] sm:$0xf]
    %v201 = vld [vmem:[%s4 + $0x10] sm:$0xf]
    %v202 = vld [vmem:[%s4 + $0x14] sm:$0xf]
    %v203 = vld [vmem:[%s4 + $0x18] sm:$0xf]
    %v204 = vlaneseq
    %v205 = vshrl.u32 %v204, 7
    %v206 = vsub.s32 0, %v205
    %v207 = vrot.slane %v34, %v206
    %v215 = vunpack.c.l.b16 %v197
    %v216 = vunpack.c.l.b16 %v198
    %v217 = vunpack.c.l.b16 %v199
    %v218 = vunpack.c.l.b16 %v200
    %v219 = vunpack.c.l.b16 %v201
    %v220 = vunpack.c.l.b16 %v202
    %v221 = vunpack.c.l.b16 %v203
    %v222 = vpack.c.b16 %v216, %v215
    %v223 = vpack.c.b16 %v218, %v217
    %v224 = vpack.c.b16 %v220, %v219
    %v225 = vpack.c.b16 %v221, %v221
    %vm229 = vcmask 457728
    %v230 = vsel %vm229, %v190, 0
    %v232 = vsel %vm229, %v192, 0
    %v234 = vsel %vm229, %v194, 0
    %v236 = vsel %vm229, %v196, 0
    %vm238 = vcmask 1043456
    %v240 = vsel %vm238, %v225, 0
    %242 = vmatprep.subr.bf16.mxu0 0
    %243 = vmatpush1.bf16.msra.mxu0 0
    %244 = vmatprep.subr.bf16.mxu0 0
    %245 = vmatpush1.bf16.msra.mxu0 0
    %246 = vmatprep.subr.bf16.mxu0 0
    %247 = vmatpush1.bf16.msra.mxu0 0
    %248 = vmatprep.subr.bf16.mxu0 0
    %249 = vmatpush1.bf16.msra.mxu0 0
    %250 = vmatprep.subr.bf16.mxu0 0
    %251 = vmatpush1.bf16.msra.mxu0 %v240
    %252 = vmatprep.subr.bf16.mxu0 0
    %253 = vmatpush1.bf16.msra.mxu0 %v224
    %254 = vmatprep.subr.bf16.mxu0 0
    %255 = vmatpush1.bf16.msra.mxu0 %v223
    %256 = vmatprep.subr.bf16.mxu0 0
    %257 = vmatpush1.bf16.msra.mxu0 %v222
    %258 = vmatprep.subr.bf16.mxu0 0
    %259 = vmatpush2.bf16.msra.mxu0 0
    %260 = vmatprep.subr.bf16.mxu0 0
    %261 = vmatpush2.bf16.msra.mxu0 0
    %262 = vmatprep.subr.bf16.mxu0 0
    %263 = vmatpush2.bf16.msra.mxu0 0
    %264 = vmatprep.subr.bf16.mxu0 0
    %265 = vmatpush2.bf16.msra.mxu0 0
    %266 = vmatprep.subr.bf16.mxu0 0
    %267 = vmatpush2.bf16.msra.mxu0 0
    %268 = vmatprep.subr.bf16.mxu0 0
    %269 = vmatpush2.bf16.msra.mxu0 0
    %270 = vmatprep.subr.bf16.mxu0 0
    %271 = vmatpush2.bf16.msra.mxu0 0
    %272 = vmatprep.subr.bf16.mxu0 0
    %273 = vmatpush2.bf16.msra.mxu0 0
    %274 = vmatprep.mubr.bf16.mxu0 0
    %275 = vmatmul.mubr.bf16.gmra.mxu0 %v230
    %v276 = vpop.f32.mrf.mxu0
    %v277 = vadd.f32 %v207, %v276
    %v278 = vpop.f32.mrf.mxu0
    %v279 = vpop.f32.mrf.mxu0
    %v280 = vadd.f32 %v207, %v279
    %v281 = vpop.f32.mrf.mxu0
    %282 = vmatprep.mubr.bf16.mxu0 0
    %283 = vmatmul.mubr.bf16.gmra.mxu0 %v232
    %v284 = vpop.f32.mrf.mxu0
    %v285 = vadd.f32 %v207, %v284
    %v286 = vpop.f32.mrf.mxu0
    %v287 = vpop.f32.mrf.mxu0
    %v288 = vadd.f32 %v207, %v287
    %v289 = vpop.f32.mrf.mxu0
    %290 = vmatprep.mubr.bf16.mxu0 0
    %291 = vmatmul.mubr.bf16.gmra.mxu0 %v234
    %v292 = vpop.f32.mrf.mxu0
    %v293 = vadd.f32 %v207, %v292
    %v294 = vpop.f32.mrf.mxu0
    %v295 = vpop.f32.mrf.mxu0
    %v296 = vadd.f32 %v207, %v295
    %v297 = vpop.f32.mrf.mxu0
    %298 = vmatprep.mubr.bf16.mxu0 0
    %299 = vmatmul.mubr.bf16.gmra.mxu0 %v236
    %v300 = vpop.f32.mrf.mxu0
    %v301 = vadd.f32 %v207, %v300
    %v302 = vpop.f32.mrf.mxu0
    %v303 = vpop.f32.mrf.mxu0
    %v304 = vadd.f32 %v207, %v303
    %v305 = vpop.f32.mrf.mxu0
    %306 = vdwg.mxu0
    %v307 = vmax.f32 %v277, 0.0
    %v308 = vmax.f32 %v280, 0.0
    %v309 = vmax.f32 %v285, 0.0
    %v310 = vmax.f32 %v288, 0.0
    %v311 = vmax.f32 %v293, 0.0
    %v312 = vmax.f32 %v296, 0.0
    %v313 = vmax.f32 %v301, 0.0
    %v314 = vmax.f32 %v304, 0.0
    %vm315 = vcmask 125952
    %316 = vst.msk [vmem:[#allocation2] sm:$0xf] %vm315, 0
    %317 = vst.msk [vmem:[#allocation2 + $0x4] sm:$0xf] %vm315, 0
    %318 = vst.msk [vmem:[#allocation2 + $0x8] sm:$0xf] %vm315, 0
    %319 = vst.msk [vmem:[#allocation2 + $0xc] sm:$0xf] %vm315, 0
    %320 = vst.msk [vmem:[#allocation2 + $0x10] sm:$0xf] %vm315, 0
    %321 = vst.msk [vmem:[#allocation2 + $0x14] sm:$0xf] %vm315, 0
    %v322 = vpack.c.bf16 %v308, %v307
    %v323 = vpack.c.bf16 %v310, %v309
    %v324 = vpack.c.bf16 %v312, %v311
    %v325 = vpack.c.bf16 %v314, %v313
    %v330 = vunpack.c.l.b16 %v322
    %v331 = vunpack.c.h.b16 %v322
    %v332 = vunpack.c.l.b16 %v323
    %v333 = vunpack.c.h.b16 %v323
    %v334 = vunpack.c.l.b16 %v324
    %v335 = vunpack.c.h.b16 %v324
    %v336 = vunpack.c.l.b16 %v325
    %v337 = vunpack.c.h.b16 %v325
    %v338 = vpack.c.b16 %v330, %v330
    %v339 = vpack.c.b16 %v331, %v331
    %v340 = vpack.c.b16 %v332, %v332
    %v341 = vpack.c.b16 %v333, %v333
    %v342 = vpack.c.b16 %v334, %v334
    %v343 = vpack.c.b16 %v335, %v335
    %v344 = vpack.c.b16 %v336, %v336
    %v345 = vpack.c.b16 %v337, %v337
    %354 = vst.msk [vmem:[#allocation2 + $0x18] sm:$0xf] %vm315, %v338
    %355 = vst.msk [vmem:[#allocation2 + $0x1c] sm:$0xf] %vm315, %v339
    %356 = vst.msk [vmem:[#allocation2 + $0x20] sm:$0xf] %vm315, %v340
    %357 = vst.msk [vmem:[#allocation2 + $0x24] sm:$0xf] %vm315, %v341
    %358 = vst.msk [vmem:[#allocation2 + $0x28] sm:$0xf] %vm315, %v342
    %359 = vst.msk [vmem:[#allocation2 + $0x2c] sm:$0xf] %vm315, %v343
    %360 = vst.msk [vmem:[#allocation2 + $0x30] sm:$0xf] %vm315, %v344
    %361 = vst.msk [vmem:[#allocation2 + $0x34] sm:$0xf] %vm315, %v345
    %v362 = vld [vmem:[#allocation2] sm:$0xf]
    %v363 = vld [vmem:[#allocation2 + $0x4] sm:$0xf]
    %v364 = vld [vmem:[#allocation2 + $0x8] sm:$0xf]
    %v365 = vld [vmem:[#allocation2 + $0xc] sm:$0xf]
    %v366 = vld [vmem:[#allocation2 + $0x10] sm:$0xf]
    %v367 = vld [vmem:[#allocation2 + $0x14] sm:$0xf]
    %v368 = vld [vmem:[#allocation2 + $0x18] sm:$0xf]
    %v369 = vld [vmem:[#allocation2 + $0x1c] sm:$0xf]
    %v370 = vld [vmem:[#allocation2 + $0x20] sm:$0xf]
    %v371 = vld [vmem:[#allocation2 + $0x24] sm:$0xf]
    %v372 = vld [vmem:[#allocation2 + $0x28] sm:$0xf]
    %v373 = vld [vmem:[#allocation2 + $0x2c] sm:$0xf]
    %v374 = vld [vmem:[#allocation2 + $0x30] sm:$0xf]
    %v375 = vld [vmem:[#allocation2 + $0x34] sm:$0xf]
    %v384 = vunpack.c.l.b16 %v362
    %v385 = vunpack.c.l.b16 %v363
    %v386 = vunpack.c.l.b16 %v364
    %v387 = vunpack.c.l.b16 %v365
    %v388 = vunpack.c.l.b16 %v366
    %v389 = vunpack.c.l.b16 %v367
    %v390 = vunpack.c.l.b16 %v368
    %v391 = vunpack.c.l.b16 %v369
    %v392 = vpack.c.b16 %v385, %v384
    %v393 = vpack.c.b16 %v387, %v386
    %v394 = vpack.c.b16 %v389, %v388
    %v395 = vpack.c.b16 %v391, %v390
    %v397 = vunpack.c.l.b16 %v370
    %v398 = vpack.c.b16 %v386, %v385
    %v399 = vpack.c.b16 %v388, %v387
    %v400 = vpack.c.b16 %v390, %v389
    %v401 = vpack.c.b16 %v397, %v391
    %402 = vrot.lane.b32.xlu0 %v398, 16
    %v403 = vpop.permute.xlu0 %402
    %404 = vrot.lane.b32.xlu0 %v399, 16
    %v405 = vpop.permute.xlu0 %404
    %406 = vrot.lane.b32.xlu0 %v400, 16
    %v407 = vpop.permute.xlu0 %406
    %408 = vrot.lane.b32.xlu0 %v401, 16
    %v409 = vpop.permute.xlu0 %408
    %v411 = vunpack.c.l.b16 %v371
    %v412 = vpack.c.b16 %v411, %v397
    %413 = vrot.lane.b32.xlu0 %v393, 32
    %v414 = vpop.permute.xlu0 %413
    %415 = vrot.lane.b32.xlu0 %v394, 32
    %v416 = vpop.permute.xlu0 %415
    %417 = vrot.lane.b32.xlu0 %v395, 32
    %v418 = vpop.permute.xlu0 %417
    %419 = vrot.lane.b32.xlu0 %v412, 32
    %v420 = vpop.permute.xlu0 %419
    %v422 = vunpack.c.l.b16 %v372
    %v423 = vpack.c.b16 %v422, %v411
    %424 = vrot.lane.b32.xlu0 %v399, 48
    %v425 = vpop.permute.xlu0 %424
    %426 = vrot.lane.b32.xlu0 %v400, 48
    %v427 = vpop.permute.xlu0 %426
    %428 = vrot.lane.b32.xlu0 %v401, 48
    %v429 = vpop.permute.xlu0 %428
    %430 = vrot.lane.b32.xlu0 %v423, 48
    %v431 = vpop.permute.xlu0 %430
    %v433 = vunpack.c.l.b16 %v373
    %v434 = vpack.c.b16 %v433, %v422
    %435 = vrot.lane.b32.xlu0 %v394, 64
    %v436 = vpop.permute.xlu0 %435
    %437 = vrot.lane.b32.xlu0 %v395, 64
    %v438 = vpop.permute.xlu0 %437
    %439 = vrot.lane.b32.xlu0 %v412, 64
    %v440 = vpop.permute.xlu0 %439
    %441 = vrot.lane.b32.xlu0 %v434, 64
    %v442 = vpop.permute.xlu0 %441
    %v444 = vunpack.c.l.b16 %v374
    %v445 = vpack.c.b16 %v444, %v433
    %446 = vrot.lane.b32.xlu0 %v400, 80
    %v447 = vpop.permute.xlu0 %446
    %448 = vrot.lane.b32.xlu0 %v401, 80
    %v449 = vpop.permute.xlu0 %448
    %450 = vrot.lane.b32.xlu0 %v423, 80
    %v451 = vpop.permute.xlu0 %450
    %452 = vrot.lane.b32.xlu0 %v445, 80
    %v453 = vpop.permute.xlu0 %452
    %v455 = vunpack.c.l.b16 %v375
    %v456 = vpack.c.b16 %v455, %v444
    %457 = vrot.lane.b32.xlu0 %v395, 96
    %v458 = vpop.permute.xlu0 %457
    %459 = vrot.lane.b32.xlu0 %v412, 96
    %v460 = vpop.permute.xlu0 %459
    %461 = vrot.lane.b32.xlu0 %v434, 96
    %v462 = vpop.permute.xlu0 %461
    %463 = vrot.lane.b32.xlu0 %v456, 96
    %v464 = vpop.permute.xlu0 %463
    %v467 = vsel %vm152, %v392, %v403
    %v470 = vsel %vm152, %v393, %v405
    %v473 = vsel %vm152, %v394, %v407
    %v476 = vsel %vm152, %v395, %v409
    %v478 = vsel %vm170, %v467, %v414
    %v480 = vsel %vm170, %v470, %v416
    %v482 = vsel %vm170, %v473, %v418
    %v484 = vsel %vm170, %v476, %v420
    %v486 = vsel %vm188, %v478, %v425
    %v488 = vsel %vm188, %v480, %v427
    %v490 = vsel %vm188, %v482, %v429
    %v492 = vsel %vm188, %v484, %v431
    %vm493 = vcmask 523264
    %v495 = vsel %vm493, %v486, %v436
    %v497 = vsel %vm493, %v488, %v438
    %v499 = vsel %vm493, %v490, %v440
    %v501 = vsel %vm493, %v492, %v442
    %vm502 = vcmask 654336
    %v504 = vsel %vm502, %v495, %v447
    %v506 = vsel %vm502, %v497, %v449
    %v508 = vsel %vm502, %v499, %v451
    %v510 = vsel %vm502, %v501, %v453
    %vm511 = vcmask 785408
    %v513 = vsel %vm511, %v504, %v458
    %v515 = vsel %vm511, %v506, %v460
    %v517 = vsel %vm511, %v508, %v462
    %v519 = vsel %vm511, %v510, %v464
    %v520 = vld [vmem:[%s4 + $0x1c] sm:$0xf]
    %v521 = vld [vmem:[%s4 + $0x20] sm:$0xf]
    %v522 = vld [vmem:[%s4 + $0x24] sm:$0xf]
    %v523 = vld [vmem:[%s4 + $0x28] sm:$0xf]
    %v524 = vld [vmem:[%s4 + $0x2c] sm:$0xf]
    %v525 = vld [vmem:[%s4 + $0x30] sm:$0xf]
    %v526 = vld [vmem:[%s4 + $0x34] sm:$0xf]
    %v527 = vld [vmem:[%s4 + $0x38] sm:$0xf]
    %v528 = vld [vmem:[%s4 + $0x3c] sm:$0xf]
    %v529 = vld [vmem:[%s4 + $0x40] sm:$0xf]
    %v530 = vld [vmem:[%s4 + $0x44] sm:$0xf]
    %v531 = vld [vmem:[%s4 + $0x48] sm:$0xf]
    %v532 = vld [vmem:[%s4 + $0x4c] sm:$0xf]
    %v533 = vld [vmem:[%s4 + $0x50] sm:$0xf]
    %v534 = vlaneseq
    %v535 = vshrl.u32 %v534, 7
    %v536 = vsub.s32 1, %v535
    %v537 = vrot.slane %v34, %v536
    %v552 = vunpack.c.l.b16 %v520
    %v553 = vunpack.c.l.b16 %v521
    %v554 = vunpack.c.l.b16 %v522
    %v555 = vunpack.c.l.b16 %v523
    %v556 = vunpack.c.l.b16 %v524
    %v557 = vunpack.c.l.b16 %v525
    %v558 = vunpack.c.l.b16 %v526
    %v559 = vunpack.c.l.b16 %v527
    %v560 = vunpack.c.l.b16 %v528
    %v561 = vunpack.c.l.b16 %v529
    %v562 = vunpack.c.l.b16 %v530
    %v563 = vunpack.c.l.b16 %v531
    %v564 = vunpack.c.l.b16 %v532
    %v565 = vunpack.c.l.b16 %v533
    %v566 = vpack.c.b16 %v553, %v552
    %v567 = vpack.c.b16 %v555, %v554
    %v568 = vpack.c.b16 %v557, %v556
    %v569 = vpack.c.b16 %v559, %v558
    %v570 = vpack.c.b16 %v561, %v560
    %v571 = vpack.c.b16 %v563, %v562
    %v572 = vpack.c.b16 %v565, %v564
    %vm580 = vcmask 916480
    %v581 = vsel %vm580, %v513, 0
    %v583 = vsel %vm580, %v515, 0
    %v585 = vsel %vm580, %v517, 0
    %v587 = vsel %vm580, %v519, 0
    %589 = vmatprep.subr.bf16.mxu0 0
    %590 = vmatpush1.bf16.msra.mxu0 0
    %591 = vmatprep.subr.bf16.mxu0 0
    %592 = vmatpush1.bf16.msra.mxu0 %v572
    %593 = vmatprep.subr.bf16.mxu0 0
    %594 = vmatpush1.bf16.msra.mxu0 %v571
    %595 = vmatprep.subr.bf16.mxu0 0
    %596 = vmatpush1.bf16.msra.mxu0 %v570
    %597 = vmatprep.subr.bf16.mxu0 0
    %598 = vmatpush1.bf16.msra.mxu0 %v569
    %599 = vmatprep.subr.bf16.mxu0 0
    %600 = vmatpush1.bf16.msra.mxu0 %v568
    %601 = vmatprep.subr.bf16.mxu0 0
    %602 = vmatpush1.bf16.msra.mxu0 %v567
    %603 = vmatprep.subr.bf16.mxu0 0
    %604 = vmatpush1.bf16.msra.mxu0 %v566
    %605 = vmatprep.subr.bf16.mxu0 0
    %606 = vmatpush2.bf16.msra.mxu0 0
    %607 = vmatprep.subr.bf16.mxu0 0
    %608 = vmatpush2.bf16.msra.mxu0 0
    %609 = vmatprep.subr.bf16.mxu0 0
    %610 = vmatpush2.bf16.msra.mxu0 0
    %611 = vmatprep.subr.bf16.mxu0 0
    %612 = vmatpush2.bf16.msra.mxu0 0
    %613 = vmatprep.subr.bf16.mxu0 0
    %614 = vmatpush2.bf16.msra.mxu0 0
    %615 = vmatprep.subr.bf16.mxu0 0
    %616 = vmatpush2.bf16.msra.mxu0 0
    %617 = vmatprep.subr.bf16.mxu0 0
    %618 = vmatpush2.bf16.msra.mxu0 0
    %619 = vmatprep.subr.bf16.mxu0 0
    %620 = vmatpush2.bf16.msra.mxu0 0
    %621 = vmatprep.mubr.bf16.mxu0 0
    %622 = vmatmul.mubr.bf16.gmra.mxu0 %v581
    %v623 = vpop.f32.mrf.mxu0
    %v624 = vadd.f32 %v537, %v623
    %v625 = vpop.f32.mrf.mxu0
    %v626 = vpop.f32.mrf.mxu0
    %v627 = vadd.f32 %v537, %v626
    %v628 = vpop.f32.mrf.mxu0
    %629 = vmatprep.mubr.bf16.mxu0 0
    %630 = vmatmul.mubr.bf16.gmra.mxu0 %v583
    %v631 = vpop.f32.mrf.mxu0
    %v632 = vadd.f32 %v537, %v631
    %v633 = vpop.f32.mrf.mxu0
    %v634 = vpop.f32.mrf.mxu0
    %v635 = vadd.f32 %v537, %v634
    %v636 = vpop.f32.mrf.mxu0
    %637 = vmatprep.mubr.bf16.mxu0 0
    %638 = vmatmul.mubr.bf16.gmra.mxu0 %v585
    %v639 = vpop.f32.mrf.mxu0
    %v640 = vadd.f32 %v537, %v639
    %v641 = vpop.f32.mrf.mxu0
    %v642 = vpop.f32.mrf.mxu0
    %v643 = vadd.f32 %v537, %v642
    %v644 = vpop.f32.mrf.mxu0
    %645 = vmatprep.mubr.bf16.mxu0 0
    %646 = vmatmul.mubr.bf16.gmra.mxu0 %v587
    %v647 = vpop.f32.mrf.mxu0
    %v648 = vadd.f32 %v537, %v647
    %v649 = vpop.f32.mrf.mxu0
    %v650 = vpop.f32.mrf.mxu0
    %v651 = vadd.f32 %v537, %v650
    %v652 = vpop.f32.mrf.mxu0
    %653 = vdwg.mxu0
    %v654 = vmax.f32 %v624, 0.0
    %v655 = vmax.f32 %v627, 0.0
    %v656 = vmax.f32 %v632, 0.0
    %v657 = vmax.f32 %v635, 0.0
    %v658 = vmax.f32 %v640, 0.0
    %v659 = vmax.f32 %v643, 0.0
    %v660 = vmax.f32 %v648, 0.0
    %v661 = vmax.f32 %v651, 0.0
    %v662 = vld [vmem:[%s5] sm:$0xf]
    %v663 = vld [vmem:[%s5 + $0x4] sm:$0xf]
    %v664 = vpack.c.bf16 %v655, %v654
    %v665 = vpack.c.bf16 %v657, %v656
    %v666 = vpack.c.bf16 %v659, %v658
    %v667 = vpack.c.bf16 %v661, %v660
    %v668 = vlaneseq
    %v669 = vshrl.u32 %v668, 7
    %v670 = vsub.s32 6, %v669
    %v671 = vrot.slane %v34, %v670
    %v674 = vunpack.c.l.b16 %v662
    %v675 = vunpack.c.l.b16 %v663
    %v676 = vpack.c.b16 %v675, %v674
    %v679 = vsel %vm152, %v664, 0
    %v682 = vsel %vm152, %v665, 0
    %v685 = vsel %vm152, %v666, 0
    %v688 = vsel %vm152, %v667, 0
    %690 = vmatprep.subr.bf16.mxu0 0
    %691 = vmatpush1.bf16.msra.mxu0 0
    %692 = vmatprep.subr.bf16.mxu0 0
    %693 = vmatpush1.bf16.msra.mxu0 0
    %694 = vmatprep.subr.bf16.mxu0 0
    %695 = vmatpush1.bf16.msra.mxu0 0
    %696 = vmatprep.subr.bf16.mxu0 0
    %697 = vmatpush1.bf16.msra.mxu0 0
    %698 = vmatprep.subr.bf16.mxu0 0
    %699 = vmatpush1.bf16.msra.mxu0 0
    %700 = vmatprep.subr.bf16.mxu0 0
    %701 = vmatpush1.bf16.msra.mxu0 0
    %702 = vmatprep.subr.bf16.mxu0 0
    %703 = vmatpush1.bf16.msra.mxu0 0
    %704 = vmatprep.subr.bf16.mxu0 0
    %705 = vmatpush1.bf16.msra.mxu0 %v676
    %706 = vmatprep.subr.bf16.mxu0 0
    %707 = vmatpush2.bf16.msra.mxu0 0
    %708 = vmatprep.subr.bf16.mxu0 0
    %709 = vmatpush2.bf16.msra.mxu0 0
    %710 = vmatprep.subr.bf16.mxu0 0
    %711 = vmatpush2.bf16.msra.mxu0 0
    %712 = vmatprep.subr.bf16.mxu0 0
    %713 = vmatpush2.bf16.msra.mxu0 0
    %714 = vmatprep.subr.bf16.mxu0 0
    %715 = vmatpush2.bf16.msra.mxu0 0
    %716 = vmatprep.subr.bf16.mxu0 0
    %717 = vmatpush2.bf16.msra.mxu0 0
    %718 = vmatprep.subr.bf16.mxu0 0
    %719 = vmatpush2.bf16.msra.mxu0 0
    %720 = vmatprep.subr.bf16.mxu0 0
    %721 = vmatpush2.bf16.msra.mxu0 0
    %722 = vmatprep.mubr.bf16.mxu0 0
    %723 = vmatmul.mubr.bf16.gmra.mxu0 %v679
    %v724 = vpop.f32.mrf.mxu0
    %v725 = vadd.f32 %v671, %v724
    %v726 = vpop.f32.mrf.mxu0
    %v727 = vpop.f32.mrf.mxu0
    %v728 = vadd.f32 %v671, %v727
    %v729 = vpop.f32.mrf.mxu0
    %730 = vmatprep.mubr.bf16.mxu0 0
    %731 = vmatmul.mubr.bf16.gmra.mxu0 %v682
    %v732 = vpop.f32.mrf.mxu0
    %v733 = vadd.f32 %v671, %v732
    %v734 = vpop.f32.mrf.mxu0
    %v735 = vpop.f32.mrf.mxu0
    %v736 = vadd.f32 %v671, %v735
    %v737 = vpop.f32.mrf.mxu0
    %738 = vmatprep.mubr.bf16.mxu0 0
    %739 = vmatmul.mubr.bf16.gmra.mxu0 %v685
    %v740 = vpop.f32.mrf.mxu0
    %v741 = vadd.f32 %v671, %v740
    %v742 = vpop.f32.mrf.mxu0
    %v743 = vpop.f32.mrf.mxu0
    %v744 = vadd.f32 %v671, %v743
    %v745 = vpop.f32.mrf.mxu0
    %746 = vmatprep.mubr.bf16.mxu0 0
    %747 = vmatmul.mubr.bf16.gmra.mxu0 %v688
    %v748 = vpop.f32.mrf.mxu0
    %v749 = vadd.f32 %v671, %v748
    %v750 = vpop.f32.mrf.mxu0
    %v751 = vpop.f32.mrf.mxu0
    %v752 = vadd.f32 %v671, %v751
    %v753 = vpop.f32.mrf.mxu0
    %754 = vdwg.mxu0
    %v755 = vld [vmem:[%s1] sm:$0xf]
    %v756 = vld [vmem:[%s1 + $0x4] sm:$0xf]
    %v757 = vld [vmem:[%s1 + $0x8] sm:$0xf]
    %v758 = vld [vmem:[%s1 + $0xc] sm:$0xf]
    %v759 = vld [vmem:[%s1 + $0x10] sm:$0xf]
    %v760 = vld [vmem:[%s1 + $0x14] sm:$0xf]
    %v761 = vld [vmem:[%s1 + $0x18] sm:$0xf]
    %v762 = vld [vmem:[%s1 + $0x1c] sm:$0xf]
    %v767 = vunpack.c.l.b16 %v755
    %v768 = vunpack.c.l.b16 %v756
    %v769 = vunpack.c.l.b16 %v757
    %v770 = vunpack.c.l.b16 %v758
    %v771 = vpack.c.b16 %v768, %v767
    %v772 = vpack.c.b16 %v770, %v769
    %v774 = vunpack.c.l.b16 %v759
    %v775 = vpack.c.b16 %v769, %v768
    %v776 = vpack.c.b16 %v774, %v770
    %777 = vrot.lane.b32.xlu0 %v775, 8
    %v778 = vpop.permute.xlu0 %777
    %779 = vrot.lane.b32.xlu0 %v776, 8
    %v780 = vpop.permute.xlu0 %779
    %v782 = vunpack.c.l.b16 %v760
    %v783 = vpack.c.b16 %v782, %v774
    %784 = vrot.lane.b32.xlu0 %v772, 16
    %v785 = vpop.permute.xlu0 %784
    %786 = vrot.lane.b32.xlu0 %v783, 16
    %v787 = vpop.permute.xlu0 %786
    %v789 = vunpack.c.l.b16 %v761
    %v790 = vpack.c.b16 %v789, %v782
    %791 = vrot.lane.b32.xlu0 %v776, 24
    %v792 = vpop.permute.xlu0 %791
    %793 = vrot.lane.b32.xlu0 %v790, 24
    %v794 = vpop.permute.xlu0 %793
    %v796 = vunpack.c.l.b16 %v762
    %v797 = vpack.c.b16 %v796, %v789
    %798 = vrot.lane.b32.xlu0 %v783, 32
    %v799 = vpop.permute.xlu0 %798
    %800 = vrot.lane.b32.xlu0 %v797, 32
    %v801 = vpop.permute.xlu0 %800
    %v804 = vsel %vm139, %v771, %v778
    %v807 = vsel %vm139, %v772, %v780
    %v809 = vsel %vm152, %v804, %v785
    %v811 = vsel %vm152, %v807, %v787
    %v813 = vsel %vm161, %v809, %v792
    %v815 = vsel %vm161, %v811, %v794
    %v817 = vsel %vm170, %v813, %v799
    %v819 = vsel %vm170, %v815, %v801
    %v820 = vld [vmem:[%s4 + $0x54] sm:$0xf]
    %v821 = vld [vmem:[%s4 + $0x58] sm:$0xf]
    %v822 = vld [vmem:[%s4 + $0x5c] sm:$0xf]
    %v823 = vld [vmem:[%s4 + $0x60] sm:$0xf]
    %v824 = vld [vmem:[%s4 + $0x64] sm:$0xf]
    %v825 = vlaneseq
    %v826 = vshrl.u32 %v825, 7
    %v827 = vsub.s32 2, %v826
    %v828 = vrot.slane %v34, %v827
    %v834 = vunpack.c.l.b16 %v820
    %v835 = vunpack.c.l.b16 %v821
    %v836 = vunpack.c.l.b16 %v822
    %v837 = vunpack.c.l.b16 %v823
    %v838 = vunpack.c.l.b16 %v824
    %v839 = vpack.c.b16 %v835, %v834
    %v840 = vpack.c.b16 %v837, %v836
    %v841 = vpack.c.b16 %v838, %v838
    %v844 = vsel %vm179, %v817, 0
    %v846 = vsel %vm179, %v819, 0
    %v849 = vsel %vm238, %v841, 0
    %851 = vmatprep.subr.bf16.mxu0 0
    %852 = vmatpush1.bf16.msra.mxu0 0
    %853 = vmatprep.subr.bf16.mxu0 0
    %854 = vmatpush1.bf16.msra.mxu0 0
    %855 = vmatprep.subr.bf16.mxu0 0
    %856 = vmatpush1.bf16.msra.mxu0 0
    %857 = vmatprep.subr.bf16.mxu0 0
    %858 = vmatpush1.bf16.msra.mxu0 0
    %859 = vmatprep.subr.bf16.mxu0 0
    %860 = vmatpush1.bf16.msra.mxu0 0
    %861 = vmatprep.subr.bf16.mxu0 0
    %862 = vmatpush1.bf16.msra.mxu0 %v849
    %863 = vmatprep.subr.bf16.mxu0 0
    %864 = vmatpush1.bf16.msra.mxu0 %v840
    %865 = vmatprep.subr.bf16.mxu0 0
    %866 = vmatpush1.bf16.msra.mxu0 %v839
    %867 = vmatprep.subr.bf16.mxu0 0
    %868 = vmatpush2.bf16.msra.mxu0 0
    %869 = vmatprep.subr.bf16.mxu0 0
    %870 = vmatpush2.bf16.msra.mxu0 0
    %871 = vmatprep.subr.bf16.mxu0 0
    %872 = vmatpush2.bf16.msra.mxu0 0
    %873 = vmatprep.subr.bf16.mxu0 0
    %874 = vmatpush2.bf16.msra.mxu0 0
    %875 = vmatprep.subr.bf16.mxu0 0
    %876 = vmatpush2.bf16.msra.mxu0 0
    %877 = vmatprep.subr.bf16.mxu0 0
    %878 = vmatpush2.bf16.msra.mxu0 0
    %879 = vmatprep.subr.bf16.mxu0 0
    %880 = vmatpush2.bf16.msra.mxu0 0
    %881 = vmatprep.subr.bf16.mxu0 0
    %882 = vmatpush2.bf16.msra.mxu0 0
    %883 = vmatprep.mubr.bf16.mxu0 0
    %884 = vmatmul.mubr.bf16.gmra.mxu0 %v844
    %v885 = vpop.f32.mrf.mxu0
    %v886 = vadd.f32 %v828, %v885
    %v887 = vpop.f32.mrf.mxu0
    %v888 = vpop.f32.mrf.mxu0
    %v889 = vadd.f32 %v828, %v888
    %v890 = vpop.f32.mrf.mxu0
    %891 = vmatprep.mubr.bf16.mxu0 0
    %892 = vmatmul.mubr.bf16.gmra.mxu0 %v846
    %v893 = vpop.f32.mrf.mxu0
    %v894 = vadd.f32 %v828, %v893
    %v895 = vpop.f32.mrf.mxu0
    %v896 = vpop.f32.mrf.mxu0
    %v897 = vadd.f32 %v828, %v896
    %v898 = vpop.f32.mrf.mxu0
    %899 = vdwg.mxu0
    %v900 = vmax.f32 %v886, 0.0
    %v901 = vmax.f32 %v889, 0.0
    %v902 = vmax.f32 %v894, 0.0
    %v903 = vmax.f32 %v897, 0.0
    %904 = vst.msk [vmem:[#allocation3] sm:$0xf] %vm315, 0
    %905 = vst.msk [vmem:[#allocation3 + $0x4] sm:$0xf] %vm315, 0
    %906 = vst.msk [vmem:[#allocation3 + $0x8] sm:$0xf] %vm315, 0
    %907 = vst.msk [vmem:[#allocation3 + $0xc] sm:$0xf] %vm315, 0
    %v908 = vpack.c.bf16 %v901, %v900
    %v909 = vpack.c.bf16 %v903, %v902
    %v912 = vunpack.c.l.b16 %v908
    %v913 = vunpack.c.h.b16 %v908
    %v914 = vunpack.c.l.b16 %v909
    %v915 = vunpack.c.h.b16 %v909
    %v916 = vpack.c.b16 %v912, %v912
    %v917 = vpack.c.b16 %v913, %v913
    %v918 = vpack.c.b16 %v914, %v914
    %v919 = vpack.c.b16 %v915, %v915
    %924 = vst.msk [vmem:[#allocation3 + $0x10] sm:$0xf] %vm315, %v916
    %925 = vst.msk [vmem:[#allocation3 + $0x14] sm:$0xf] %vm315, %v917
    %926 = vst.msk [vmem:[#allocation3 + $0x18] sm:$0xf] %vm315, %v918
    %927 = vst.msk [vmem:[#allocation3 + $0x1c] sm:$0xf] %vm315, %v919
    %v928 = vld [vmem:[#allocation3] sm:$0xf]
    %v929 = vld [vmem:[#allocation3 + $0x4] sm:$0xf]
    %v930 = vld [vmem:[#allocation3 + $0x8] sm:$0xf]
    %v931 = vld [vmem:[#allocation3 + $0xc] sm:$0xf]
    %v932 = vld [vmem:[#allocation3 + $0x10] sm:$0xf]
    %v933 = vld [vmem:[#allocation3 + $0x14] sm:$0xf]
    %v934 = vld [vmem:[#allocation3 + $0x18] sm:$0xf]
    %v935 = vld [vmem:[#allocation3 + $0x1c] sm:$0xf]
    %v940 = vunpack.c.l.b16 %v928
    %v941 = vunpack.c.l.b16 %v929
    %v942 = vunpack.c.l.b16 %v930
    %v943 = vunpack.c.l.b16 %v931
    %v944 = vpack.c.b16 %v941, %v940
    %v945 = vpack.c.b16 %v943, %v942
    %v947 = vunpack.c.l.b16 %v932
    %v948 = vpack.c.b16 %v942, %v941
    %v949 = vpack.c.b16 %v947, %v943
    %950 = vrot.lane.b32.xlu0 %v948, 16
    %v951 = vpop.permute.xlu0 %950
    %952 = vrot.lane.b32.xlu0 %v949, 16
    %v953 = vpop.permute.xlu0 %952
    %v955 = vunpack.c.l.b16 %v933
    %v956 = vpack.c.b16 %v955, %v947
    %957 = vrot.lane.b32.xlu0 %v945, 32
    %v958 = vpop.permute.xlu0 %957
    %959 = vrot.lane.b32.xlu0 %v956, 32
    %v960 = vpop.permute.xlu0 %959
    %v962 = vunpack.c.l.b16 %v934
    %v963 = vpack.c.b16 %v962, %v955
    %964 = vrot.lane.b32.xlu0 %v949, 48
    %v965 = vpop.permute.xlu0 %964
    %966 = vrot.lane.b32.xlu0 %v963, 48
    %v967 = vpop.permute.xlu0 %966
    %v969 = vunpack.c.l.b16 %v935
    %v970 = vpack.c.b16 %v969, %v962
    %971 = vrot.lane.b32.xlu0 %v956, 64
    %v972 = vpop.permute.xlu0 %971
    %973 = vrot.lane.b32.xlu0 %v970, 64
    %v974 = vpop.permute.xlu0 %973
    %v977 = vsel %vm152, %v944, %v951
    %v980 = vsel %vm152, %v945, %v953
    %v982 = vsel %vm170, %v977, %v958
    %v984 = vsel %vm170, %v980, %v960
    %v986 = vsel %vm188, %v982, %v965
    %v988 = vsel %vm188, %v984, %v967
    %v990 = vsel %vm493, %v986, %v972
    %v992 = vsel %vm493, %v988, %v974
    %v993 = vld [vmem:[%s4 + $0x68] sm:$0xf]
    %v994 = vld [vmem:[%s4 + $0x6c] sm:$0xf]
    %v995 = vld [vmem:[%s4 + $0x70] sm:$0xf]
    %v996 = vld [vmem:[%s4 + $0x74] sm:$0xf]
    %v997 = vld [vmem:[%s4 + $0x78] sm:$0xf]
    %v998 = vld [vmem:[%s4 + $0x7c] sm:$0xf]
    %v999 = vld [vmem:[%s4 + $0x80] sm:$0xf]
    %v1000 = vld [vmem:[%s4 + $0x84] sm:$0xf]
    %v1001 = vld [vmem:[%s4 + $0x88] sm:$0xf]
    %v1002 = vld [vmem:[%s4 + $0x8c] sm:$0xf]
    %v1003 = vlaneseq
    %v1004 = vshrl.u32 %v1003, 7
    %v1005 = vsub.s32 3, %v1004
    %v1006 = vrot.slane %v34, %v1005
    %v1017 = vunpack.c.l.b16 %v993
    %v1018 = vunpack.c.l.b16 %v994
    %v1019 = vunpack.c.l.b16 %v995
    %v1020 = vunpack.c.l.b16 %v996
    %v1021 = vunpack.c.l.b16 %v997
    %v1022 = vunpack.c.l.b16 %v998
    %v1023 = vunpack.c.l.b16 %v999
    %v1024 = vunpack.c.l.b16 %v1000
    %v1025 = vunpack.c.l.b16 %v1001
    %v1026 = vunpack.c.l.b16 %v1002
    %v1027 = vpack.c.b16 %v1018, %v1017
    %v1028 = vpack.c.b16 %v1020, %v1019
    %v1029 = vpack.c.b16 %v1022, %v1021
    %v1030 = vpack.c.b16 %v1024, %v1023
    %v1031 = vpack.c.b16 %v1026, %v1025
    %v1037 = vsel %vm502, %v990, 0
    %v1039 = vsel %vm502, %v992, 0
    %1041 = vmatprep.subr.bf16.mxu0 0
    %1042 = vmatpush1.bf16.msra.mxu0 0
    %1043 = vmatprep.subr.bf16.mxu0 0
    %1044 = vmatpush1.bf16.msra.mxu0 0
    %1045 = vmatprep.subr.bf16.mxu0 0
    %1046 = vmatpush1.bf16.msra.mxu0 0
    %1047 = vmatprep.subr.bf16.mxu0 0
    %1048 = vmatpush1.bf16.msra.mxu0 %v1031
    %1049 = vmatprep.subr.bf16.mxu0 0
    %1050 = vmatpush1.bf16.msra.mxu0 %v1030
    %1051 = vmatprep.subr.bf16.mxu0 0
    %1052 = vmatpush1.bf16.msra.mxu0 %v1029
    %1053 = vmatprep.subr.bf16.mxu0 0
    %1054 = vmatpush1.bf16.msra.mxu0 %v1028
    %1055 = vmatprep.subr.bf16.mxu0 0
    %1056 = vmatpush1.bf16.msra.mxu0 %v1027
    %1057 = vmatprep.subr.bf16.mxu0 0
    %1058 = vmatpush2.bf16.msra.mxu0 0
    %1059 = vmatprep.subr.bf16.mxu0 0
    %1060 = vmatpush2.bf16.msra.mxu0 0
    %1061 = vmatprep.subr.bf16.mxu0 0
    %1062 = vmatpush2.bf16.msra.mxu0 0
    %1063 = vmatprep.subr.bf16.mxu0 0
    %1064 = vmatpush2.bf16.msra.mxu0 0
    %1065 = vmatprep.subr.bf16.mxu0 0
    %1066 = vmatpush2.bf16.msra.mxu0 0
    %1067 = vmatprep.subr.bf16.mxu0 0
    %1068 = vmatpush2.bf16.msra.mxu0 0
    %1069 = vmatprep.subr.bf16.mxu0 0
    %1070 = vmatpush2.bf16.msra.mxu0 0
    %1071 = vmatprep.subr.bf16.mxu0 0
    %1072 = vmatpush2.bf16.msra.mxu0 0
    %1073 = vmatprep.mubr.bf16.mxu0 0
    %1074 = vmatmul.mubr.bf16.gmra.mxu0 %v1037
    %v1075 = vpop.f32.mrf.mxu0
    %v1076 = vadd.f32 %v1006, %v1075
    %v1077 = vpop.f32.mrf.mxu0
    %v1078 = vpop.f32.mrf.mxu0
    %v1079 = vadd.f32 %v1006, %v1078
    %v1080 = vpop.f32.mrf.mxu0
    %1081 = vmatprep.mubr.bf16.mxu0 0
    %1082 = vmatmul.mubr.bf16.gmra.mxu0 %v1039
    %v1083 = vpop.f32.mrf.mxu0
    %v1084 = vadd.f32 %v1006, %v1083
    %v1085 = vpop.f32.mrf.mxu0
    %v1086 = vpop.f32.mrf.mxu0
    %v1087 = vadd.f32 %v1006, %v1086
    %v1088 = vpop.f32.mrf.mxu0
    %1089 = vdwg.mxu0
    %v1090 = vmax.f32 %v1076, 0.0
    %v1091 = vmax.f32 %v1079, 0.0
    %v1092 = vmax.f32 %v1084, 0.0
    %v1093 = vmax.f32 %v1087, 0.0
    %v1094 = vld [vmem:[%s6] sm:$0xf]
    %v1095 = vld [vmem:[%s6 + $0x4] sm:$0xf]
    %v1096 = vpack.c.bf16 %v1091, %v1090
    %v1097 = vpack.c.bf16 %v1093, %v1092
    %v1098 = vlaneseq
    %v1099 = vshrl.u32 %v1098, 7
    %v1100 = vsub.s32 0, %v1099
    %v1101 = vrot.slane %v35, %v1100
    %v1104 = vunpack.c.l.b16 %v1094
    %v1105 = vunpack.c.l.b16 %v1095
    %v1106 = vpack.c.b16 %v1105, %v1104
    %v1109 = vsel %vm152, %v1096, 0
    %v1112 = vsel %vm152, %v1097, 0
    %1114 = vmatprep.subr.bf16.mxu0 0
    %1115 = vmatpush1.bf16.msra.mxu0 0
    %1116 = vmatprep.subr.bf16.mxu0 0
    %1117 = vmatpush1.bf16.msra.mxu0 0
    %1118 = vmatprep.subr.bf16.mxu0 0
    %1119 = vmatpush1.bf16.msra.mxu0 0
    %1120 = vmatprep.subr.bf16.mxu0 0
    %1121 = vmatpush1.bf16.msra.mxu0 0
    %1122 = vmatprep.subr.bf16.mxu0 0
    %1123 = vmatpush1.bf16.msra.mxu0 0
    %1124 = vmatprep.subr.bf16.mxu0 0
    %1125 = vmatpush1.bf16.msra.mxu0 0
    %1126 = vmatprep.subr.bf16.mxu0 0
    %1127 = vmatpush1.bf16.msra.mxu0 0
    %1128 = vmatprep.subr.bf16.mxu0 0
    %1129 = vmatpush1.bf16.msra.mxu0 %v1106
    %1130 = vmatprep.subr.bf16.mxu0 0
    %1131 = vmatpush2.bf16.msra.mxu0 0
    %1132 = vmatprep.subr.bf16.mxu0 0
    %1133 = vmatpush2.bf16.msra.mxu0 0
    %1134 = vmatprep.subr.bf16.mxu0 0
    %1135 = vmatpush2.bf16.msra.mxu0 0
    %1136 = vmatprep.subr.bf16.mxu0 0
    %1137 = vmatpush2.bf16.msra.mxu0 0
    %1138 = vmatprep.subr.bf16.mxu0 0
    %1139 = vmatpush2.bf16.msra.mxu0 0
    %1140 = vmatprep.subr.bf16.mxu0 0
    %1141 = vmatpush2.bf16.msra.mxu0 0
    %1142 = vmatprep.subr.bf16.mxu0 0
    %1143 = vmatpush2.bf16.msra.mxu0 0
    %1144 = vmatprep.subr.bf16.mxu0 0
    %1145 = vmatpush2.bf16.msra.mxu0 0
    %1146 = vmatprep.mubr.bf16.mxu0 0
    %1147 = vmatmul.mubr.bf16.gmra.mxu0 %v1109
    %v1148 = vpop.f32.mrf.mxu0
    %v1149 = vadd.f32 %v1101, %v1148
    %v1150 = vpop.f32.mrf.mxu0
    %v1151 = vpop.f32.mrf.mxu0
    %v1152 = vadd.f32 %v1101, %v1151
    %v1153 = vpop.f32.mrf.mxu0
    %1154 = vmatprep.mubr.bf16.mxu0 0
    %1155 = vmatmul.mubr.bf16.gmra.mxu0 %v1112
    %v1156 = vpop.f32.mrf.mxu0
    %v1157 = vadd.f32 %v1101, %v1156
    %v1158 = vpop.f32.mrf.mxu0
    %v1159 = vpop.f32.mrf.mxu0
    %v1160 = vadd.f32 %v1101, %v1159
    %v1161 = vpop.f32.mrf.mxu0
    %1162 = vdwg.mxu0
    %v1163 = vld [vmem:[%s2] sm:$0xf]
    %v1164 = vld [vmem:[%s2 + $0x4] sm:$0xf]
    %v1165 = vld [vmem:[%s2 + $0x8] sm:$0xf]
    %v1166 = vld [vmem:[%s2 + $0xc] sm:$0xf]
    %v1169 = vunpack.c.l.b16 %v1163
    %v1170 = vunpack.c.l.b16 %v1164
    %v1171 = vpack.c.b16 %v1170, %v1169
    %v1173 = vunpack.c.l.b16 %v1165
    %v1174 = vpack.c.b16 %v1173, %v1170
    %1175 = vrot.lane.b32.xlu0 %v1174, 8
    %v1176 = vpop.permute.xlu0 %1175
    %v1178 = vunpack.c.l.b16 %v1166
    %v1179 = vpack.c.b16 %v1178, %v1173
    %1180 = vrot.lane.b32.xlu0 %v1179, 16
    %v1181 = vpop.permute.xlu0 %1180
    %v1184 = vsel %vm139, %v1171, %v1176
    %v1186 = vsel %vm152, %v1184, %v1181
    %v1187 = vld [vmem:[%s4 + $0x90] sm:$0xf]
    %v1188 = vld [vmem:[%s4 + $0x94] sm:$0xf]
    %v1189 = vld [vmem:[%s4 + $0x98] sm:$0xf]
    %v1190 = vlaneseq
    %v1191 = vshrl.u32 %v1190, 7
    %v1192 = vsub.s32 4, %v1191
    %v1193 = vrot.slane %v34, %v1192
    %v1197 = vunpack.c.l.b16 %v1187
    %v1198 = vunpack.c.l.b16 %v1188
    %v1199 = vunpack.c.l.b16 %v1189
    %v1200 = vpack.c.b16 %v1198, %v1197
    %v1201 = vpack.c.b16 %v1199, %v1199
    %v1203 = vsel %vm161, %v1186, 0
    %v1206 = vsel %vm238, %v1201, 0
    %1208 = vmatprep.subr.bf16.mxu0 0
    %1209 = vmatpush1.bf16.msra.mxu0 0
    %1210 = vmatprep.subr.bf16.mxu0 0
    %1211 = vmatpush1.bf16.msra.mxu0 0
    %1212 = vmatprep.subr.bf16.mxu0 0
    %1213 = vmatpush1.bf16.msra.mxu0 0
    %1214 = vmatprep.subr.bf16.mxu0 0
    %1215 = vmatpush1.bf16.msra.mxu0 0
    %1216 = vmatprep.subr.bf16.mxu0 0
    %1217 = vmatpush1.bf16.msra.mxu0 0
    %1218 = vmatprep.subr.bf16.mxu0 0
    %1219 = vmatpush1.bf16.msra.mxu0 0
    %1220 = vmatprep.subr.bf16.mxu0 0
    %1221 = vmatpush1.bf16.msra.mxu0 %v1206
    %1222 = vmatprep.subr.bf16.mxu0 0
    %1223 = vmatpush1.bf16.msra.mxu0 %v1200
    %1224 = vmatprep.subr.bf16.mxu0 0
    %1225 = vmatpush2.bf16.msra.mxu0 0
    %1226 = vmatprep.subr.bf16.mxu0 0
    %1227 = vmatpush2.bf16.msra.mxu0 0
    %1228 = vmatprep.subr.bf16.mxu0 0
    %1229 = vmatpush2.bf16.msra.mxu0 0
    %1230 = vmatprep.subr.bf16.mxu0 0
    %1231 = vmatpush2.bf16.msra.mxu0 0
    %1232 = vmatprep.subr.bf16.mxu0 0
    %1233 = vmatpush2.bf16.msra.mxu0 0
    %1234 = vmatprep.subr.bf16.mxu0 0
    %1235 = vmatpush2.bf16.msra.mxu0 0
    %1236 = vmatprep.subr.bf16.mxu0 0
    %1237 = vmatpush2.bf16.msra.mxu0 0
    %1238 = vmatprep.subr.bf16.mxu0 0
    %1239 = vmatpush2.bf16.msra.mxu0 0
    %1240 = vmatprep.mubr.bf16.mxu0 0
    %1241 = vmatmul.mubr.bf16.gmra.mxu0 %v1203
    %v1242 = vpop.f32.mrf.mxu0
    %v1243 = vadd.f32 %v1193, %v1242
    %v1244 = vpop.f32.mrf.mxu0
    %v1245 = vpop.f32.mrf.mxu0
    %v1246 = vadd.f32 %v1193, %v1245
    %v1247 = vpop.f32.mrf.mxu0
    %1248 = vdwg.mxu0
    %v1249 = vmax.f32 %v1243, 0.0
    %v1250 = vmax.f32 %v1246, 0.0
    %1251 = vst.msk [vmem:[#allocation4] sm:$0xf] %vm315, 0
    %1252 = vst.msk [vmem:[#allocation4 + $0x4] sm:$0xf] %vm315, 0
    %v1253 = vpack.c.bf16 %v1250, %v1249
    %v1255 = vunpack.c.l.b16 %v1253
    %v1256 = vunpack.c.h.b16 %v1253
    %v1257 = vpack.c.b16 %v1255, %v1255
    %v1258 = vpack.c.b16 %v1256, %v1256
    %1261 = vst.msk [vmem:[#allocation4 + $0x8] sm:$0xf] %vm315, %v1257
    %1262 = vst.msk [vmem:[#allocation4 + $0xc] sm:$0xf] %vm315, %v1258
    %v1263 = vld [vmem:[#allocation4] sm:$0xf]
    %v1264 = vld [vmem:[#allocation4 + $0x4] sm:$0xf]
    %v1265 = vld [vmem:[#allocation4 + $0x8] sm:$0xf]
    %v1266 = vld [vmem:[#allocation4 + $0xc] sm:$0xf]
    %v1269 = vunpack.c.l.b16 %v1263
    %v1270 = vunpack.c.l.b16 %v1264
    %v1271 = vpack.c.b16 %v1270, %v1269
    %v1273 = vunpack.c.l.b16 %v1265
    %v1274 = vpack.c.b16 %v1273, %v1270
    %1275 = vrot.lane.b32.xlu0 %v1274, 16
    %v1276 = vpop.permute.xlu0 %1275
    %v1278 = vunpack.c.l.b16 %v1266
    %v1279 = vpack.c.b16 %v1278, %v1273
    %1280 = vrot.lane.b32.xlu0 %v1279, 32
    %v1281 = vpop.permute.xlu0 %1280
    %v1284 = vsel %vm152, %v1271, %v1276
    %v1286 = vsel %vm170, %v1284, %v1281
    %v1287 = vld [vmem:[%s4 + $0x9c] sm:$0xf]
    %v1288 = vld [vmem:[%s4 + $0xa0] sm:$0xf]
    %v1289 = vld [vmem:[%s4 + $0xa4] sm:$0xf]
    %v1290 = vld [vmem:[%s4 + $0xa8] sm:$0xf]
    %v1291 = vld [vmem:[%s4 + $0xac] sm:$0xf]
    %v1292 = vld [vmem:[%s4 + $0xb0] sm:$0xf]
    %v1293 = vlaneseq
    %v1294 = vshrl.u32 %v1293, 7
    %v1295 = vsub.s32 5, %v1294
    %v1296 = vrot.slane %v34, %v1295
    %v1303 = vunpack.c.l.b16 %v1287
    %v1304 = vunpack.c.l.b16 %v1288
    %v1305 = vunpack.c.l.b16 %v1289
    %v1306 = vunpack.c.l.b16 %v1290
    %v1307 = vunpack.c.l.b16 %v1291
    %v1308 = vunpack.c.l.b16 %v1292
    %v1309 = vpack.c.b16 %v1304, %v1303
    %v1310 = vpack.c.b16 %v1306, %v1305
    %v1311 = vpack.c.b16 %v1308, %v1307
    %v1315 = vsel %vm188, %v1286, 0
    %1317 = vmatprep.subr.bf16.mxu0 0
    %1318 = vmatpush1.bf16.msra.mxu0 0
    %1319 = vmatprep.subr.bf16.mxu0 0
    %1320 = vmatpush1.bf16.msra.mxu0 0
    %1321 = vmatprep.subr.bf16.mxu0 0
    %1322 = vmatpush1.bf16.msra.mxu0 0
    %1323 = vmatprep.subr.bf16.mxu0 0
    %1324 = vmatpush1.bf16.msra.mxu0 0
    %1325 = vmatprep.subr.bf16.mxu0 0
    %1326 = vmatpush1.bf16.msra.mxu0 0
    %1327 = vmatprep.subr.bf16.mxu0 0
    %1328 = vmatpush1.bf16.msra.mxu0 %v1311
    %1329 = vmatprep.subr.bf16.mxu0 0
    %1330 = vmatpush1.bf16.msra.mxu0 %v1310
    %1331 = vmatprep.subr.bf16.mxu0 0
    %1332 = vmatpush1.bf16.msra.mxu0 %v1309
    %1333 = vmatprep.subr.bf16.mxu0 0
    %1334 = vmatpush2.bf16.msra.mxu0 0
    %1335 = vmatprep.subr.bf16.mxu0 0
    %1336 = vmatpush2.bf16.msra.mxu0 0
    %1337 = vmatprep.subr.bf16.mxu0 0
    %1338 = vmatpush2.bf16.msra.mxu0 0
    %1339 = vmatprep.subr.bf16.mxu0 0
    %1340 = vmatpush2.bf16.msra.mxu0 0
    %1341 = vmatprep.subr.bf16.mxu0 0
    %1342 = vmatpush2.bf16.msra.mxu0 0
    %1343 = vmatprep.subr.bf16.mxu0 0
    %1344 = vmatpush2.bf16.msra.mxu0 0
    %1345 = vmatprep.subr.bf16.mxu0 0
    %1346 = vmatpush2.bf16.msra.mxu0 0
    %1347 = vmatprep.subr.bf16.mxu0 0
    %1348 = vmatpush2.bf16.msra.mxu0 0
    %1349 = vmatprep.mubr.bf16.mxu0 0
    %1350 = vmatmul.mubr.bf16.gmra.mxu0 %v1315
    %v1351 = vpop.f32.mrf.mxu0
    %v1352 = vadd.f32 %v1296, %v1351
    %v1353 = vpop.f32.mrf.mxu0
    %v1354 = vpop.f32.mrf.mxu0
    %v1355 = vadd.f32 %v1296, %v1354
    %v1356 = vpop.f32.mrf.mxu0
    %1357 = vdwg.mxu0
    %v1358 = vmax.f32 %v1352, 0.0
    %v1359 = vmax.f32 %v1355, 0.0
    %v1360 = vld [vmem:[%s6 + $0x10] sm:$0xf]
    %v1361 = vld [vmem:[%s6 + $0x14] sm:$0xf]
    %v1362 = vpack.c.bf16 %v1359, %v1358
    %v1363 = vlaneseq
    %v1364 = vshrl.u32 %v1363, 7
    %v1365 = vsub.s32 2, %v1364
    %v1366 = vrot.slane %v35, %v1365
    %v1369 = vunpack.c.l.b16 %v1360
    %v1370 = vunpack.c.l.b16 %v1361
    %v1371 = vpack.c.b16 %v1370, %v1369
    %v1374 = vsel %vm152, %v1362, 0
    %1376 = vmatprep.subr.bf16.mxu0 0
    %1377 = vmatpush1.bf16.msra.mxu0 0
    %1378 = vmatprep.subr.bf16.mxu0 0
    %1379 = vmatpush1.bf16.msra.mxu0 0
    %1380 = vmatprep.subr.bf16.mxu0 0
    %1381 = vmatpush1.bf16.msra.mxu0 0
    %1382 = vmatprep.subr.bf16.mxu0 0
    %1383 = vmatpush1.bf16.msra.mxu0 0
    %1384 = vmatprep.subr.bf16.mxu0 0
    %1385 = vmatpush1.bf16.msra.mxu0 0
    %1386 = vmatprep.subr.bf16.mxu0 0
    %1387 = vmatpush1.bf16.msra.mxu0 0
    %1388 = vmatprep.subr.bf16.mxu0 0
    %1389 = vmatpush1.bf16.msra.mxu0 0
    %1390 = vmatprep.subr.bf16.mxu0 0
    %1391 = vmatpush1.bf16.msra.mxu0 %v1371
    %1392 = vmatprep.subr.bf16.mxu0 0
    %1393 = vmatpush2.bf16.msra.mxu0 0
    %1394 = vmatprep.subr.bf16.mxu0 0
    %1395 = vmatpush2.bf16.msra.mxu0 0
    %1396 = vmatprep.subr.bf16.mxu0 0
    %1397 = vmatpush2.bf16.msra.mxu0 0
    %1398 = vmatprep.subr.bf16.mxu0 0
    %1399 = vmatpush2.bf16.msra.mxu0 0
    %1400 = vmatprep.subr.bf16.mxu0 0
    %1401 = vmatpush2.bf16.msra.mxu0 0
    %1402 = vmatprep.subr.bf16.mxu0 0
    %1403 = vmatpush2.bf16.msra.mxu0 0
    %1404 = vmatprep.subr.bf16.mxu0 0
    %1405 = vmatpush2.bf16.msra.mxu0 0
    %1406 = vmatprep.subr.bf16.mxu0 0
    %1407 = vmatpush2.bf16.msra.mxu0 0
    %1408 = vmatprep.mubr.bf16.mxu0 0
    %1409 = vmatmul.mubr.bf16.gmra.mxu0 %v1374
    %v1410 = vpop.f32.mrf.mxu0
    %v1411 = vadd.f32 %v1366, %v1410
    %v1412 = vpop.f32.mrf.mxu0
    %v1413 = vpop.f32.mrf.mxu0
    %v1414 = vadd.f32 %v1366, %v1413
    %v1415 = vpop.f32.mrf.mxu0
    %1416 = vdwg.mxu0
    %v1417 = vld [vmem:[%s5 + $0x8] sm:$0xf]
    %v1418 = vld [vmem:[%s5 + $0xc] sm:$0xf]
    %v1419 = vld [vmem:[%s5 + $0x10] sm:$0xf]
    %v1420 = vld [vmem:[%s5 + $0x14] sm:$0xf]
    %v1421 = vld [vmem:[%s6 + $0x8] sm:$0xf]
    %v1422 = vld [vmem:[%s6 + $0xc] sm:$0xf]
    %v1423 = vld [vmem:[%s6 + $0x18] sm:$0xf]
    %v1424 = vld [vmem:[%s6 + $0x1c] sm:$0xf]
    %v1425 = vlaneseq
    %v1426 = vshrl.u32 %v1425, 7
    %v1427 = vsub.s32 7, %v1426
    %v1428 = vrot.slane %v34, %v1427
    %v1433 = vunpack.c.l.b16 %v1417
    %v1434 = vunpack.c.l.b16 %v1418
    %v1435 = vunpack.c.l.b16 %v1419
    %v1436 = vunpack.c.l.b16 %v1420
    %v1437 = vpack.c.b16 %v1434, %v1433
    %v1438 = vpack.c.b16 %v1436, %v1435
    %v1442 = vsel %vm170, 0, 0
    %1444 = vmatprep.subr.bf16.mxu0 0
    %1445 = vmatpush1.bf16.msra.mxu0 0
    %1446 = vmatprep.subr.bf16.mxu0 0
    %1447 = vmatpush1.bf16.msra.mxu0 0
    %1448 = vmatprep.subr.bf16.mxu0 0
    %1449 = vmatpush1.bf16.msra.mxu0 0
    %1450 = vmatprep.subr.bf16.mxu0 0
    %1451 = vmatpush1.bf16.msra.mxu0 0
    %1452 = vmatprep.subr.bf16.mxu0 0
    %1453 = vmatpush1.bf16.msra.mxu0 0
    %1454 = vmatprep.subr.bf16.mxu0 0
    %1455 = vmatpush1.bf16.msra.mxu0 0
    %1456 = vmatprep.subr.bf16.mxu0 0
    %1457 = vmatpush1.bf16.msra.mxu0 %v1438
    %1458 = vmatprep.subr.bf16.mxu0 0
    %1459 = vmatpush1.bf16.msra.mxu0 %v1437
    %1460 = vmatprep.subr.bf16.mxu0 0
    %1461 = vmatpush2.bf16.msra.mxu0 0
    %1462 = vmatprep.subr.bf16.mxu0 0
    %1463 = vmatpush2.bf16.msra.mxu0 0
    %1464 = vmatprep.subr.bf16.mxu0 0
    %1465 = vmatpush2.bf16.msra.mxu0 0
    %1466 = vmatprep.subr.bf16.mxu0 0
    %1467 = vmatpush2.bf16.msra.mxu0 0
    %1468 = vmatprep.subr.bf16.mxu0 0
    %1469 = vmatpush2.bf16.msra.mxu0 0
    %1470 = vmatprep.subr.bf16.mxu0 0
    %1471 = vmatpush2.bf16.msra.mxu0 0
    %1472 = vmatprep.subr.bf16.mxu0 0
    %1473 = vmatpush2.bf16.msra.mxu0 0
    %1474 = vmatprep.subr.bf16.mxu0 0
    %1475 = vmatpush2.bf16.msra.mxu0 0
    %1476 = vmatprep.mubr.bf16.mxu0 0
    %1477 = vmatmul.mubr.bf16.gmra.mxu0 %v1442
    %v1478 = vpop.f32.mrf.mxu0
    %v1479 = vadd.f32 %v1428, %v1478
    %v1480 = vpop.f32.mrf.mxu0
    %v1481 = vpop.f32.mrf.mxu0
    %v1482 = vpop.f32.mrf.mxu0
    %1483 = vdwg.mxu0
    %v1484 = vadd.f32 %v725, %v1479
    %v1485 = vxor.u32 %v1484, 2147483648
    %v1486 = vmul.f32 %v1485, 1.442695
    %v1487 = vpow.pop %v1486
    %v1488 = vadd.f32 %v1487, 1.0
    %v1489 = vrcp.pop %v1488
    %v1490 = vmul.f32 1.0, %v1489
    %1492 = vrot.lane.b32.xlu0 %v1479, 64
    %v1493 = vpop.permute.xlu0 %1492
    %v1495 = vmul.f32 %v1490, %v1493
    %1497 = vrot.lane.b32.xlu0 %v1495, 64
    %v1498 = vpop.permute.xlu0 %1497
    %v1500 = vadd.f32 %v725, %v1498
    %v1501 = vtanh.pop %v1500
    %v1502 = vsub.f32 1.0, %v1490
    %1504 = vrot.lane.b32.xlu0 %v1501, 96
    %v1505 = vpop.permute.xlu0 %1504
    %v1507 = vmul.f32 %v1502, %v1505
    %v1508 = vmul.f32 %v1490, 0.0
    %v1509 = vadd.f32 %v1507, %v1508
    %v1510 = vpack.c.bf16 %v1509, %v1509
    %1512 = vrot.lane.b32.xlu0 %v1510, 96
    %v1513 = vpop.permute.xlu0 %1512
    %v1515 = vsel %vm170, %v1513, 0
    %1517 = vmatprep.subr.bf16.mxu0 0
    %1518 = vmatpush1.bf16.msra.mxu0 0
    %1519 = vmatprep.subr.bf16.mxu0 0
    %1520 = vmatpush1.bf16.msra.mxu0 0
    %1521 = vmatprep.subr.bf16.mxu0 0
    %1522 = vmatpush1.bf16.msra.mxu0 0
    %1523 = vmatprep.subr.bf16.mxu0 0
    %1524 = vmatpush1.bf16.msra.mxu0 0
    %1525 = vmatprep.subr.bf16.mxu0 0
    %1526 = vmatpush1.bf16.msra.mxu0 0
    %1527 = vmatprep.subr.bf16.mxu0 0
    %1528 = vmatpush1.bf16.msra.mxu0 0
    %1529 = vmatprep.subr.bf16.mxu0 0
    %1530 = vmatpush1.bf16.msra.mxu0 %v1438
    %1531 = vmatprep.subr.bf16.mxu0 0
    %1532 = vmatpush1.bf16.msra.mxu0 %v1437
    %1533 = vmatprep.subr.bf16.mxu0 0
    %1534 = vmatpush2.bf16.msra.mxu0 0
    %1535 = vmatprep.subr.bf16.mxu0 0
    %1536 = vmatpush2.bf16.msra.mxu0 0
    %1537 = vmatprep.subr.bf16.mxu0 0
    %1538 = vmatpush2.bf16.msra.mxu0 0
    %1539 = vmatprep.subr.bf16.mxu0 0
    %1540 = vmatpush2.bf16.msra.mxu0 0
    %1541 = vmatprep.subr.bf16.mxu0 0
    %1542 = vmatpush2.bf16.msra.mxu0 0
    %1543 = vmatprep.subr.bf16.mxu0 0
    %1544 = vmatpush2.bf16.msra.mxu0 0
    %1545 = vmatprep.subr.bf16.mxu0 0
    %1546 = vmatpush2.bf16.msra.mxu0 0
    %1547 = vmatprep.subr.bf16.mxu0 0
    %1548 = vmatpush2.bf16.msra.mxu0 0
    %1549 = vmatprep.mubr.bf16.mxu0 0
    %1550 = vmatmul.mubr.bf16.gmra.mxu0 %v1515
    %v1551 = vpop.f32.mrf.mxu0
    %v1552 = vadd.f32 %v1428, %v1551
    %v1553 = vpop.f32.mrf.mxu0
    %v1554 = vpop.f32.mrf.mxu0
    %v1555 = vpop.f32.mrf.mxu0
    %1556 = vdwg.mxu0
    %v1557 = vadd.f32 %v728, %v1552
    %v1558 = vxor.u32 %v1557, 2147483648
    %v1559 = vmul.f32 %v1558, 1.442695
    %v1560 = vpow.pop %v1559
    %v1561 = vadd.f32 %v1560, 1.0
    %v1562 = vrcp.pop %v1561
    %v1563 = vmul.f32 1.0, %v1562
    %1565 = vrot.lane.b32.xlu0 %v1552, 64
    %v1566 = vpop.permute.xlu0 %1565
    %v1568 = vmul.f32 %v1563, %v1566
    %1570 = vrot.lane.b32.xlu0 %v1568, 64
    %v1571 = vpop.permute.xlu0 %1570
    %v1573 = vadd.f32 %v728, %v1571
    %v1574 = vtanh.pop %v1573
    %v1575 = vsub.f32 1.0, %v1563
    %1577 = vrot.lane.b32.xlu0 %v1574, 96
    %v1578 = vpop.permute.xlu0 %1577
    %v1580 = vmul.f32 %v1575, %v1578
    %v1581 = vmul.f32 %v1563, %v1509
    %v1582 = vadd.f32 %v1580, %v1581
    %v1583 = vlaneseq
    %v1584 = vshrl.u32 %v1583, 7
    %v1585 = vsub.s32 1, %v1584
    %v1586 = vrot.slane %v35, %v1585
    %v1589 = vunpack.c.l.b16 %v1421
    %v1590 = vunpack.c.l.b16 %v1422
    %v1591 = vpack.c.b16 %v1590, %v1589
    %v1593 = vsel %vm152, 0, 0
    %1595 = vmatprep.subr.bf16.mxu0 0
    %1596 = vmatpush1.bf16.msra.mxu0 0
    %1597 = vmatprep.subr.bf16.mxu0 0
    %1598 = vmatpush1.bf16.msra.mxu0 0
    %1599 = vmatprep.subr.bf16.mxu0 0
    %1600 = vmatpush1.bf16.msra.mxu0 0
    %1601 = vmatprep.subr.bf16.mxu0 0
    %1602 = vmatpush1.bf16.msra.mxu0 0
    %1603 = vmatprep.subr.bf16.mxu0 0
    %1604 = vmatpush1.bf16.msra.mxu0 0
    %1605 = vmatprep.subr.bf16.mxu0 0
    %1606 = vmatpush1.bf16.msra.mxu0 0
    %1607 = vmatprep.subr.bf16.mxu0 0
    %1608 = vmatpush1.bf16.msra.mxu0 0
    %1609 = vmatprep.subr.bf16.mxu0 0
    %1610 = vmatpush1.bf16.msra.mxu0 %v1591
    %1611 = vmatprep.subr.bf16.mxu0 0
    %1612 = vmatpush2.bf16.msra.mxu0 0
    %1613 = vmatprep.subr.bf16.mxu0 0
    %1614 = vmatpush2.bf16.msra.mxu0 0
    %1615 = vmatprep.subr.bf16.mxu0 0
    %1616 = vmatpush2.bf16.msra.mxu0 0
    %1617 = vmatprep.subr.bf16.mxu0 0
    %1618 = vmatpush2.bf16.msra.mxu0 0
    %1619 = vmatprep.subr.bf16.mxu0 0
    %1620 = vmatpush2.bf16.msra.mxu0 0
    %1621 = vmatprep.subr.bf16.mxu0 0
    %1622 = vmatpush2.bf16.msra.mxu0 0
    %1623 = vmatprep.subr.bf16.mxu0 0
    %1624 = vmatpush2.bf16.msra.mxu0 0
    %1625 = vmatprep.subr.bf16.mxu0 0
    %1626 = vmatpush2.bf16.msra.mxu0 0
    %1627 = vmatprep.mubr.bf16.mxu0 0
    %1628 = vmatmul.mubr.bf16.gmra.mxu0 %v1593
    %v1629 = vpop.f32.mrf.mxu0
    %v1630 = vadd.f32 %v1586, %v1629
    %v1631 = vpop.f32.mrf.mxu0
    %v1632 = vpop.f32.mrf.mxu0
    %v1633 = vpop.f32.mrf.mxu0
    %1634 = vdwg.mxu0
    %v1635 = vadd.f32 %v1149, %v1630
    %v1636 = vxor.u32 %v1635, 2147483648
    %v1637 = vmul.f32 %v1636, 1.442695
    %v1638 = vpow.pop %v1637
    %v1639 = vadd.f32 %v1638, 1.0
    %v1640 = vrcp.pop %v1639
    %v1641 = vmul.f32 1.0, %v1640
    %1643 = vrot.lane.b32.xlu0 %v1630, 96
    %v1644 = vpop.permute.xlu0 %1643
    %v1646 = vmul.f32 %v1641, %v1644
    %1648 = vrot.lane.b32.xlu0 %v1646, 32
    %v1649 = vpop.permute.xlu0 %1648
    %v1651 = vadd.f32 %v1149, %v1649
    %v1652 = vtanh.pop %v1651
    %v1653 = vsub.f32 1.0, %v1641
    %1655 = vrot.lane.b32.xlu0 %v1652, 112
    %v1656 = vpop.permute.xlu0 %1655
    %v1658 = vmul.f32 %v1653, %v1656
    %v1659 = vmul.f32 %v1641, 0.0
    %v1660 = vadd.f32 %v1658, %v1659
    %v1661 = vpack.c.bf16 %v1582, %v1582
    %1663 = vrot.lane.b32.xlu0 %v1661, 96
    %v1664 = vpop.permute.xlu0 %1663
    %v1666 = vsel %vm170, %v1664, 0
    %1668 = vmatprep.subr.bf16.mxu0 0
    %1669 = vmatpush1.bf16.msra.mxu0 0
    %1670 = vmatprep.subr.bf16.mxu0 0
    %1671 = vmatpush1.bf16.msra.mxu0 0
    %1672 = vmatprep.subr.bf16.mxu0 0
    %1673 = vmatpush1.bf16.msra.mxu0 0
    %1674 = vmatprep.subr.bf16.mxu0 0
    %1675 = vmatpush1.bf16.msra.mxu0 0
    %1676 = vmatprep.subr.bf16.mxu0 0
    %1677 = vmatpush1.bf16.msra.mxu0 0
    %1678 = vmatprep.subr.bf16.mxu0 0
    %1679 = vmatpush1.bf16.msra.mxu0 0
    %1680 = vmatprep.subr.bf16.mxu0 0
    %1681 = vmatpush1.bf16.msra.mxu0 %v1438
    %1682 = vmatprep.subr.bf16.mxu0 0
    %1683 = vmatpush1.bf16.msra.mxu0 %v1437
    %1684 = vmatprep.subr.bf16.mxu0 0
    %1685 = vmatpush2.bf16.msra.mxu0 0
    %1686 = vmatprep.subr.bf16.mxu0 0
    %1687 = vmatpush2.bf16.msra.mxu0 0
    %1688 = vmatprep.subr.bf16.mxu0 0
    %1689 = vmatpush2.bf16.msra.mxu0 0
    %1690 = vmatprep.subr.bf16.mxu0 0
    %1691 = vmatpush2.bf16.msra.mxu0 0
    %1692 = vmatprep.subr.bf16.mxu0 0
    %1693 = vmatpush2.bf16.msra.mxu0 0
    %1694 = vmatprep.subr.bf16.mxu0 0
    %1695 = vmatpush2.bf16.msra.mxu0 0
    %1696 = vmatprep.subr.bf16.mxu0 0
    %1697 = vmatpush2.bf16.msra.mxu0 0
    %1698 = vmatprep.subr.bf16.mxu0 0
    %1699 = vmatpush2.bf16.msra.mxu0 0
    %1700 = vmatprep.mubr.bf16.mxu0 0
    %1701 = vmatmul.mubr.bf16.gmra.mxu0 %v1666
    %v1702 = vpop.f32.mrf.mxu0
    %v1703 = vadd.f32 %v1428, %v1702
    %v1704 = vpop.f32.mrf.mxu0
    %v1705 = vpop.f32.mrf.mxu0
    %v1706 = vpop.f32.mrf.mxu0
    %1707 = vdwg.mxu0
    %v1708 = vadd.f32 %v733, %v1703
    %v1709 = vxor.u32 %v1708, 2147483648
    %v1710 = vmul.f32 %v1709, 1.442695
    %v1711 = vpow.pop %v1710
    %v1712 = vadd.f32 %v1711, 1.0
    %v1713 = vrcp.pop %v1712
    %v1714 = vmul.f32 1.0, %v1713
    %1716 = vrot.lane.b32.xlu0 %v1703, 64
    %v1717 = vpop.permute.xlu0 %1716
    %v1719 = vmul.f32 %v1714, %v1717
    %1721 = vrot.lane.b32.xlu0 %v1719, 64
    %v1722 = vpop.permute.xlu0 %1721
    %v1724 = vadd.f32 %v733, %v1722
    %v1725 = vtanh.pop %v1724
    %v1726 = vsub.f32 1.0, %v1714
    %1728 = vrot.lane.b32.xlu0 %v1725, 96
    %v1729 = vpop.permute.xlu0 %1728
    %v1731 = vmul.f32 %v1726, %v1729
    %v1732 = vmul.f32 %v1714, %v1582
    %v1733 = vadd.f32 %v1731, %v1732
    %v1734 = vpack.c.bf16 %v1733, %v1733
    %1736 = vrot.lane.b32.xlu0 %v1734, 96
    %v1737 = vpop.permute.xlu0 %1736
    %v1739 = vsel %vm170, %v1737, 0
    %1741 = vmatprep.subr.bf16.mxu0 0
    %1742 = vmatpush1.bf16.msra.mxu0 0
    %1743 = vmatprep.subr.bf16.mxu0 0
    %1744 = vmatpush1.bf16.msra.mxu0 0
    %1745 = vmatprep.subr.bf16.mxu0 0
    %1746 = vmatpush1.bf16.msra.mxu0 0
    %1747 = vmatprep.subr.bf16.mxu0 0
    %1748 = vmatpush1.bf16.msra.mxu0 0
    %1749 = vmatprep.subr.bf16.mxu0 0
    %1750 = vmatpush1.bf16.msra.mxu0 0
    %1751 = vmatprep.subr.bf16.mxu0 0
    %1752 = vmatpush1.bf16.msra.mxu0 0
    %1753 = vmatprep.subr.bf16.mxu0 0
    %1754 = vmatpush1.bf16.msra.mxu0 %v1438
    %1755 = vmatprep.subr.bf16.mxu0 0
    %1756 = vmatpush1.bf16.msra.mxu0 %v1437
    %1757 = vmatprep.subr.bf16.mxu0 0
    %1758 = vmatpush2.bf16.msra.mxu0 0
    %1759 = vmatprep.subr.bf16.mxu0 0
    %1760 = vmatpush2.bf16.msra.mxu0 0
    %1761 = vmatprep.subr.bf16.mxu0 0
    %1762 = vmatpush2.bf16.msra.mxu0 0
    %1763 = vmatprep.subr.bf16.mxu0 0
    %1764 = vmatpush2.bf16.msra.mxu0 0
    %1765 = vmatprep.subr.bf16.mxu0 0
    %1766 = vmatpush2.bf16.msra.mxu0 0
    %1767 = vmatprep.subr.bf16.mxu0 0
    %1768 = vmatpush2.bf16.msra.mxu0 0
    %1769 = vmatprep.subr.bf16.mxu0 0
    %1770 = vmatpush2.bf16.msra.mxu0 0
    %1771 = vmatprep.subr.bf16.mxu0 0
    %1772 = vmatpush2.bf16.msra.mxu0 0
    %1773 = vmatprep.mubr.bf16.mxu0 0
    %1774 = vmatmul.mubr.bf16.gmra.mxu0 %v1739
    %v1775 = vpop.f32.mrf.mxu0
    %v1776 = vadd.f32 %v1428, %v1775
    %v1777 = vpop.f32.mrf.mxu0
    %v1778 = vpop.f32.mrf.mxu0
    %v1779 = vpop.f32.mrf.mxu0
    %1780 = vdwg.mxu0
    %v1781 = vadd.f32 %v736, %v1776
    %v1782 = vxor.u32 %v1781, 2147483648
    %v1783 = vmul.f32 %v1782, 1.442695
    %v1784 = vpow.pop %v1783
    %v1785 = vadd.f32 %v1784, 1.0
    %v1786 = vrcp.pop %v1785
    %v1787 = vmul.f32 1.0, %v1786
    %1789 = vrot.lane.b32.xlu0 %v1776, 64
    %v1790 = vpop.permute.xlu0 %1789
    %v1792 = vmul.f32 %v1787, %v1790
    %1794 = vrot.lane.b32.xlu0 %v1792, 64
    %v1795 = vpop.permute.xlu0 %1794
    %v1797 = vadd.f32 %v736, %v1795
    %v1798 = vtanh.pop %v1797
    %v1799 = vsub.f32 1.0, %v1787
    %1801 = vrot.lane.b32.xlu0 %v1798, 96
    %v1802 = vpop.permute.xlu0 %1801
    %v1804 = vmul.f32 %v1799, %v1802
    %v1805 = vmul.f32 %v1787, %v1733
    %v1806 = vadd.f32 %v1804, %v1805
    %v1807 = vpack.c.bf16 %v1660, %v1660
    %1809 = vrot.lane.b32.xlu0 %v1807, 112
    %v1810 = vpop.permute.xlu0 %1809
    %v1812 = vsel %vm152, %v1810, 0
    %1814 = vmatprep.subr.bf16.mxu0 0
    %1815 = vmatpush1.bf16.msra.mxu0 0
    %1816 = vmatprep.subr.bf16.mxu0 0
    %1817 = vmatpush1.bf16.msra.mxu0 0
    %1818 = vmatprep.subr.bf16.mxu0 0
    %1819 = vmatpush1.bf16.msra.mxu0 0
    %1820 = vmatprep.subr.bf16.mxu0 0
    %1821 = vmatpush1.bf16.msra.mxu0 0
    %1822 = vmatprep.subr.bf16.mxu0 0
    %1823 = vmatpush1.bf16.msra.mxu0 0
    %1824 = vmatprep.subr.bf16.mxu0 0
    %1825 = vmatpush1.bf16.msra.mxu0 0
    %1826 = vmatprep.subr.bf16.mxu0 0
    %1827 = vmatpush1.bf16.msra.mxu0 0
    %1828 = vmatprep.subr.bf16.mxu0 0
    %1829 = vmatpush1.bf16.msra.mxu0 %v1591
    %1830 = vmatprep.subr.bf16.mxu0 0
    %1831 = vmatpush2.bf16.msra.mxu0 0
    %1832 = vmatprep.subr.bf16.mxu0 0
    %1833 = vmatpush2.bf16.msra.mxu0 0
    %1834 = vmatprep.subr.bf16.mxu0 0
    %1835 = vmatpush2.bf16.msra.mxu0 0
    %1836 = vmatprep.subr.bf16.mxu0 0
    %1837 = vmatpush2.bf16.msra.mxu0 0
    %1838 = vmatprep.subr.bf16.mxu0 0
    %1839 = vmatpush2.bf16.msra.mxu0 0
    %1840 = vmatprep.subr.bf16.mxu0 0
    %1841 = vmatpush2.bf16.msra.mxu0 0
    %1842 = vmatprep.subr.bf16.mxu0 0
    %1843 = vmatpush2.bf16.msra.mxu0 0
    %1844 = vmatprep.subr.bf16.mxu0 0
    %1845 = vmatpush2.bf16.msra.mxu0 0
    %1846 = vmatprep.mubr.bf16.mxu0 0
    %1847 = vmatmul.mubr.bf16.gmra.mxu0 %v1812
    %v1848 = vpop.f32.mrf.mxu0
    %v1849 = vadd.f32 %v1586, %v1848
    %v1850 = vpop.f32.mrf.mxu0
    %v1851 = vpop.f32.mrf.mxu0
    %v1852 = vpop.f32.mrf.mxu0
    %1853 = vdwg.mxu0
    %v1854 = vadd.f32 %v1152, %v1849
    %v1855 = vxor.u32 %v1854, 2147483648
    %v1856 = vmul.f32 %v1855, 1.442695
    %v1857 = vpow.pop %v1856
    %v1858 = vadd.f32 %v1857, 1.0
    %v1859 = vrcp.pop %v1858
    %v1860 = vmul.f32 1.0, %v1859
    %1862 = vrot.lane.b32.xlu0 %v1849, 96
    %v1863 = vpop.permute.xlu0 %1862
    %v1865 = vmul.f32 %v1860, %v1863
    %1867 = vrot.lane.b32.xlu0 %v1865, 32
    %v1868 = vpop.permute.xlu0 %1867
    %v1870 = vadd.f32 %v1152, %v1868
    %v1871 = vtanh.pop %v1870
    %v1872 = vsub.f32 1.0, %v1860
    %1874 = vrot.lane.b32.xlu0 %v1871, 112
    %v1875 = vpop.permute.xlu0 %1874
    %v1877 = vmul.f32 %v1872, %v1875
    %v1878 = vmul.f32 %v1860, %v1660
    %v1879 = vadd.f32 %v1877, %v1878
    %v1880 = vlaneseq
    %v1881 = vshrl.u32 %v1880, 7
    %v1882 = vsub.s32 3, %v1881
    %v1883 = vrot.slane %v35, %v1882
    %v1886 = vunpack.c.l.b16 %v1423
    %v1887 = vunpack.c.l.b16 %v1424
    %v1888 = vpack.c.b16 %v1887, %v1886
    %1890 = vmatprep.subr.bf16.mxu0 0
    %1891 = vmatpush1.bf16.msra.mxu0 0
    %1892 = vmatprep.subr.bf16.mxu0 0
    %1893 = vmatpush1.bf16.msra.mxu0 0
    %1894 = vmatprep.subr.bf16.mxu0 0
    %1895 = vmatpush1.bf16.msra.mxu0 0
    %1896 = vmatprep.subr.bf16.mxu0 0
    %1897 = vmatpush1.bf16.msra.mxu0 0
    %1898 = vmatprep.subr.bf16.mxu0 0
    %1899 = vmatpush1.bf16.msra.mxu0 0
    %1900 = vmatprep.subr.bf16.mxu0 0
    %1901 = vmatpush1.bf16.msra.mxu0 0
    %1902 = vmatprep.subr.bf16.mxu0 0
    %1903 = vmatpush1.bf16.msra.mxu0 0
    %1904 = vmatprep.subr.bf16.mxu0 0
    %1905 = vmatpush1.bf16.msra.mxu0 %v1888
    %1906 = vmatprep.subr.bf16.mxu0 0
    %1907 = vmatpush2.bf16.msra.mxu0 0
    %1908 = vmatprep.subr.bf16.mxu0 0
    %1909 = vmatpush2.bf16.msra.mxu0 0
    %1910 = vmatprep.subr.bf16.mxu0 0
    %1911 = vmatpush2.bf16.msra.mxu0 0
    %1912 = vmatprep.subr.bf16.mxu0 0
    %1913 = vmatpush2.bf16.msra.mxu0 0
    %1914 = vmatprep.subr.bf16.mxu0 0
    %1915 = vmatpush2.bf16.msra.mxu0 0
    %1916 = vmatprep.subr.bf16.mxu0 0
    %1917 = vmatpush2.bf16.msra.mxu0 0
    %1918 = vmatprep.subr.bf16.mxu0 0
    %1919 = vmatpush2.bf16.msra.mxu0 0
    %1920 = vmatprep.subr.bf16.mxu0 0
    %1921 = vmatpush2.bf16.msra.mxu0 0
    %1922 = vmatprep.mubr.bf16.mxu0 0
    %1923 = vmatmul.mubr.bf16.gmra.mxu0 %v1593
    %v1924 = vpop.f32.mrf.mxu0
    %v1925 = vadd.f32 %v1883, %v1924
    %v1926 = vpop.f32.mrf.mxu0
    %v1927 = vpop.f32.mrf.mxu0
    %v1928 = vpop.f32.mrf.mxu0
    %1929 = vdwg.mxu0
    %v1930 = vadd.f32 %v1411, %v1925
    %v1931 = vxor.u32 %v1930, 2147483648
    %v1932 = vmul.f32 %v1931, 1.442695
    %v1933 = vpow.pop %v1932
    %v1934 = vadd.f32 %v1933, 1.0
    %v1935 = vrcp.pop %v1934
    %v1936 = vmul.f32 1.0, %v1935
    %1938 = vrot.lane.b32.xlu0 %v1925, 96
    %v1939 = vpop.permute.xlu0 %1938
    %v1941 = vmul.f32 %v1936, %v1939
    %1943 = vrot.lane.b32.xlu0 %v1941, 32
    %v1944 = vpop.permute.xlu0 %1943
    %v1946 = vadd.f32 %v1411, %v1944
    %v1947 = vtanh.pop %v1946
    %v1948 = vsub.f32 1.0, %v1936
    %1950 = vrot.lane.b32.xlu0 %v1947, 112
    %v1951 = vpop.permute.xlu0 %1950
    %v1953 = vmul.f32 %v1948, %v1951
    %v1954 = vmul.f32 %v1936, 0.0
    %v1955 = vadd.f32 %v1953, %v1954
    %v1956 = vpack.c.bf16 %v1806, %v1806
    %1958 = vrot.lane.b32.xlu0 %v1956, 96
    %v1959 = vpop.permute.xlu0 %1958
    %v1961 = vsel %vm170, %v1959, 0
    %1963 = vmatprep.subr.bf16.mxu0 0
    %1964 = vmatpush1.bf16.msra.mxu0 0
    %1965 = vmatprep.subr.bf16.mxu0 0
    %1966 = vmatpush1.bf16.msra.mxu0 0
    %1967 = vmatprep.subr.bf16.mxu0 0
    %1968 = vmatpush1.bf16.msra.mxu0 0
    %1969 = vmatprep.subr.bf16.mxu0 0
    %1970 = vmatpush1.bf16.msra.mxu0 0
    %1971 = vmatprep.subr.bf16.mxu0 0
    %1972 = vmatpush1.bf16.msra.mxu0 0
    %1973 = vmatprep.subr.bf16.mxu0 0
    %1974 = vmatpush1.bf16.msra.mxu0 0
    %1975 = vmatprep.subr.bf16.mxu0 0
    %1976 = vmatpush1.bf16.msra.mxu0 %v1438
    %1977 = vmatprep.subr.bf16.mxu0 0
    %1978 = vmatpush1.bf16.msra.mxu0 %v1437
    %1979 = vmatprep.subr.bf16.mxu0 0
    %1980 = vmatpush2.bf16.msra.mxu0 0
    %1981 = vmatprep.subr.bf16.mxu0 0
    %1982 = vmatpush2.bf16.msra.mxu0 0
    %1983 = vmatprep.subr.bf16.mxu0 0
    %1984 = vmatpush2.bf16.msra.mxu0 0
    %1985 = vmatprep.subr.bf16.mxu0 0
    %1986 = vmatpush2.bf16.msra.mxu0 0
    %1987 = vmatprep.subr.bf16.mxu0 0
    %1988 = vmatpush2.bf16.msra.mxu0 0
    %1989 = vmatprep.subr.bf16.mxu0 0
    %1990 = vmatpush2.bf16.msra.mxu0 0
    %1991 = vmatprep.subr.bf16.mxu0 0
    %1992 = vmatpush2.bf16.msra.mxu0 0
    %1993 = vmatprep.subr.bf16.mxu0 0
    %1994 = vmatpush2.bf16.msra.mxu0 0
    %1995 = vmatprep.mubr.bf16.mxu0 0
    %1996 = vmatmul.mubr.bf16.gmra.mxu0 %v1961
    %v1997 = vpop.f32.mrf.mxu0
    %v1998 = vadd.f32 %v1428, %v1997
    %v1999 = vpop.f32.mrf.mxu0
    %v2000 = vpop.f32.mrf.mxu0
    %v2001 = vpop.f32.mrf.mxu0
    %2002 = vdwg.mxu0
    %v2003 = vadd.f32 %v741, %v1998
    %v2004 = vxor.u32 %v2003, 2147483648
    %v2005 = vmul.f32 %v2004, 1.442695
    %v2006 = vpow.pop %v2005
    %v2007 = vadd.f32 %v2006, 1.0
    %v2008 = vrcp.pop %v2007
    %v2009 = vmul.f32 1.0, %v2008
    %2011 = vrot.lane.b32.xlu0 %v1998, 64
    %v2012 = vpop.permute.xlu0 %2011
    %v2014 = vmul.f32 %v2009, %v2012
    %2016 = vrot.lane.b32.xlu0 %v2014, 64
    %v2017 = vpop.permute.xlu0 %2016
    %v2019 = vadd.f32 %v741, %v2017
    %v2020 = vtanh.pop %v2019
    %v2021 = vsub.f32 1.0, %v2009
    %2023 = vrot.lane.b32.xlu0 %v2020, 96
    %v2024 = vpop.permute.xlu0 %2023
    %v2026 = vmul.f32 %v2021, %v2024
    %v2027 = vmul.f32 %v2009, %v1806
    %v2028 = vadd.f32 %v2026, %v2027
    %v2029 = vpack.c.bf16 %v2028, %v2028
    %2031 = vrot.lane.b32.xlu0 %v2029, 96
    %v2032 = vpop.permute.xlu0 %2031
    %v2034 = vsel %vm170, %v2032, 0
    %2036 = vmatprep.subr.bf16.mxu0 0
    %2037 = vmatpush1.bf16.msra.mxu0 0
    %2038 = vmatprep.subr.bf16.mxu0 0
    %2039 = vmatpush1.bf16.msra.mxu0 0
    %2040 = vmatprep.subr.bf16.mxu0 0
    %2041 = vmatpush1.bf16.msra.mxu0 0
    %2042 = vmatprep.subr.bf16.mxu0 0
    %2043 = vmatpush1.bf16.msra.mxu0 0
    %2044 = vmatprep.subr.bf16.mxu0 0
    %2045 = vmatpush1.bf16.msra.mxu0 0
    %2046 = vmatprep.subr.bf16.mxu0 0
    %2047 = vmatpush1.bf16.msra.mxu0 0
    %2048 = vmatprep.subr.bf16.mxu0 0
    %2049 = vmatpush1.bf16.msra.mxu0 %v1438
    %2050 = vmatprep.subr.bf16.mxu0 0
    %2051 = vmatpush1.bf16.msra.mxu0 %v1437
    %2052 = vmatprep.subr.bf16.mxu0 0
    %2053 = vmatpush2.bf16.msra.mxu0 0
    %2054 = vmatprep.subr.bf16.mxu0 0
    %2055 = vmatpush2.bf16.msra.mxu0 0
    %2056 = vmatprep.subr.bf16.mxu0 0
    %2057 = vmatpush2.bf16.msra.mxu0 0
    %2058 = vmatprep.subr.bf16.mxu0 0
    %2059 = vmatpush2.bf16.msra.mxu0 0
    %2060 = vmatprep.subr.bf16.mxu0 0
    %2061 = vmatpush2.bf16.msra.mxu0 0
    %2062 = vmatprep.subr.bf16.mxu0 0
    %2063 = vmatpush2.bf16.msra.mxu0 0
    %2064 = vmatprep.subr.bf16.mxu0 0
    %2065 = vmatpush2.bf16.msra.mxu0 0
    %2066 = vmatprep.subr.bf16.mxu0 0
    %2067 = vmatpush2.bf16.msra.mxu0 0
    %2068 = vmatprep.mubr.bf16.mxu0 0
    %2069 = vmatmul.mubr.bf16.gmra.mxu0 %v2034
    %v2070 = vpop.f32.mrf.mxu0
    %v2071 = vadd.f32 %v1428, %v2070
    %v2072 = vpop.f32.mrf.mxu0
    %v2073 = vpop.f32.mrf.mxu0
    %v2074 = vpop.f32.mrf.mxu0
    %2075 = vdwg.mxu0
    %v2076 = vadd.f32 %v744, %v2071
    %v2077 = vxor.u32 %v2076, 2147483648
    %v2078 = vmul.f32 %v2077, 1.442695
    %v2079 = vpow.pop %v2078
    %v2080 = vadd.f32 %v2079, 1.0
    %v2081 = vrcp.pop %v2080
    %v2082 = vmul.f32 1.0, %v2081
    %2084 = vrot.lane.b32.xlu0 %v2071, 64
    %v2085 = vpop.permute.xlu0 %2084
    %v2087 = vmul.f32 %v2082, %v2085
    %2089 = vrot.lane.b32.xlu0 %v2087, 64
    %v2090 = vpop.permute.xlu0 %2089
    %v2092 = vadd.f32 %v744, %v2090
    %v2093 = vtanh.pop %v2092
    %v2094 = vsub.f32 1.0, %v2082
    %2096 = vrot.lane.b32.xlu0 %v2093, 96
    %v2097 = vpop.permute.xlu0 %2096
    %v2099 = vmul.f32 %v2094, %v2097
    %v2100 = vmul.f32 %v2082, %v2028
    %v2101 = vadd.f32 %v2099, %v2100
    %v2102 = vpack.c.bf16 %v1879, %v1879
    %2104 = vrot.lane.b32.xlu0 %v2102, 112
    %v2105 = vpop.permute.xlu0 %2104
    %v2107 = vsel %vm152, %v2105, 0
    %2109 = vmatprep.subr.bf16.mxu0 0
    %2110 = vmatpush1.bf16.msra.mxu0 0
    %2111 = vmatprep.subr.bf16.mxu0 0
    %2112 = vmatpush1.bf16.msra.mxu0 0
    %2113 = vmatprep.subr.bf16.mxu0 0
    %2114 = vmatpush1.bf16.msra.mxu0 0
    %2115 = vmatprep.subr.bf16.mxu0 0
    %2116 = vmatpush1.bf16.msra.mxu0 0
    %2117 = vmatprep.subr.bf16.mxu0 0
    %2118 = vmatpush1.bf16.msra.mxu0 0
    %2119 = vmatprep.subr.bf16.mxu0 0
    %2120 = vmatpush1.bf16.msra.mxu0 0
    %2121 = vmatprep.subr.bf16.mxu0 0
    %2122 = vmatpush1.bf16.msra.mxu0 0
    %2123 = vmatprep.subr.bf16.mxu0 0
    %2124 = vmatpush1.bf16.msra.mxu0 %v1591
    %2125 = vmatprep.subr.bf16.mxu0 0
    %2126 = vmatpush2.bf16.msra.mxu0 0
    %2127 = vmatprep.subr.bf16.mxu0 0
    %2128 = vmatpush2.bf16.msra.mxu0 0
    %2129 = vmatprep.subr.bf16.mxu0 0
    %2130 = vmatpush2.bf16.msra.mxu0 0
    %2131 = vmatprep.subr.bf16.mxu0 0
    %2132 = vmatpush2.bf16.msra.mxu0 0
    %2133 = vmatprep.subr.bf16.mxu0 0
    %2134 = vmatpush2.bf16.msra.mxu0 0
    %2135 = vmatprep.subr.bf16.mxu0 0
    %2136 = vmatpush2.bf16.msra.mxu0 0
    %2137 = vmatprep.subr.bf16.mxu0 0
    %2138 = vmatpush2.bf16.msra.mxu0 0
    %2139 = vmatprep.subr.bf16.mxu0 0
    %2140 = vmatpush2.bf16.msra.mxu0 0
    %2141 = vmatprep.mubr.bf16.mxu0 0
    %2142 = vmatmul.mubr.bf16.gmra.mxu0 %v2107
    %v2143 = vpop.f32.mrf.mxu0
    %v2144 = vadd.f32 %v1586, %v2143
    %v2145 = vpop.f32.mrf.mxu0
    %v2146 = vpop.f32.mrf.mxu0
    %v2147 = vpop.f32.mrf.mxu0
    %2148 = vdwg.mxu0
    %v2149 = vadd.f32 %v1157, %v2144
    %v2150 = vxor.u32 %v2149, 2147483648
    %v2151 = vmul.f32 %v2150, 1.442695
    %v2152 = vpow.pop %v2151
    %v2153 = vadd.f32 %v2152, 1.0
    %v2154 = vrcp.pop %v2153
    %v2155 = vmul.f32 1.0, %v2154
    %2157 = vrot.lane.b32.xlu0 %v2144, 96
    %v2158 = vpop.permute.xlu0 %2157
    %v2160 = vmul.f32 %v2155, %v2158
    %2162 = vrot.lane.b32.xlu0 %v2160, 32
    %v2163 = vpop.permute.xlu0 %2162
    %v2165 = vadd.f32 %v1157, %v2163
    %v2166 = vtanh.pop %v2165
    %v2167 = vsub.f32 1.0, %v2155
    %2169 = vrot.lane.b32.xlu0 %v2166, 112
    %v2170 = vpop.permute.xlu0 %2169
    %v2172 = vmul.f32 %v2167, %v2170
    %v2173 = vmul.f32 %v2155, %v1879
    %v2174 = vadd.f32 %v2172, %v2173
    %v2175 = vpack.c.bf16 %v2101, %v2101
    %2177 = vrot.lane.b32.xlu0 %v2175, 96
    %v2178 = vpop.permute.xlu0 %2177
    %v2180 = vsel %vm170, %v2178, 0
    %2182 = vmatprep.subr.bf16.mxu0 0
    %2183 = vmatpush1.bf16.msra.mxu0 0
    %2184 = vmatprep.subr.bf16.mxu0 0
    %2185 = vmatpush1.bf16.msra.mxu0 0
    %2186 = vmatprep.subr.bf16.mxu0 0
    %2187 = vmatpush1.bf16.msra.mxu0 0
    %2188 = vmatprep.subr.bf16.mxu0 0
    %2189 = vmatpush1.bf16.msra.mxu0 0
    %2190 = vmatprep.subr.bf16.mxu0 0
    %2191 = vmatpush1.bf16.msra.mxu0 0
    %2192 = vmatprep.subr.bf16.mxu0 0
    %2193 = vmatpush1.bf16.msra.mxu0 0
    %2194 = vmatprep.subr.bf16.mxu0 0
    %2195 = vmatpush1.bf16.msra.mxu0 %v1438
    %2196 = vmatprep.subr.bf16.mxu0 0
    %2197 = vmatpush1.bf16.msra.mxu0 %v1437
    %2198 = vmatprep.subr.bf16.mxu0 0
    %2199 = vmatpush2.bf16.msra.mxu0 0
    %2200 = vmatprep.subr.bf16.mxu0 0
    %2201 = vmatpush2.bf16.msra.mxu0 0
    %2202 = vmatprep.subr.bf16.mxu0 0
    %2203 = vmatpush2.bf16.msra.mxu0 0
    %2204 = vmatprep.subr.bf16.mxu0 0
    %2205 = vmatpush2.bf16.msra.mxu0 0
    %2206 = vmatprep.subr.bf16.mxu0 0
    %2207 = vmatpush2.bf16.msra.mxu0 0
    %2208 = vmatprep.subr.bf16.mxu0 0
    %2209 = vmatpush2.bf16.msra.mxu0 0
    %2210 = vmatprep.subr.bf16.mxu0 0
    %2211 = vmatpush2.bf16.msra.mxu0 0
    %2212 = vmatprep.subr.bf16.mxu0 0
    %2213 = vmatpush2.bf16.msra.mxu0 0
    %2214 = vmatprep.mubr.bf16.mxu0 0
    %2215 = vmatmul.mubr.bf16.gmra.mxu0 %v2180
    %v2216 = vpop.f32.mrf.mxu0
    %v2217 = vadd.f32 %v1428, %v2216
    %v2218 = vpop.f32.mrf.mxu0
    %v2219 = vpop.f32.mrf.mxu0
    %v2220 = vpop.f32.mrf.mxu0
    %2221 = vdwg.mxu0
    %v2222 = vadd.f32 %v749, %v2217
    %v2223 = vxor.u32 %v2222, 2147483648
    %v2224 = vmul.f32 %v2223, 1.442695
    %v2225 = vpow.pop %v2224
    %v2226 = vadd.f32 %v2225, 1.0
    %v2227 = vrcp.pop %v2226
    %v2228 = vmul.f32 1.0, %v2227
    %2230 = vrot.lane.b32.xlu0 %v2217, 64
    %v2231 = vpop.permute.xlu0 %2230
    %v2233 = vmul.f32 %v2228, %v2231
    %2235 = vrot.lane.b32.xlu0 %v2233, 64
    %v2236 = vpop.permute.xlu0 %2235
    %v2238 = vadd.f32 %v749, %v2236
    %v2239 = vtanh.pop %v2238
    %v2240 = vsub.f32 1.0, %v2228
    %2242 = vrot.lane.b32.xlu0 %v2239, 96
    %v2243 = vpop.permute.xlu0 %2242
    %v2245 = vmul.f32 %v2240, %v2243
    %v2246 = vmul.f32 %v2228, %v2101
    %v2247 = vadd.f32 %v2245, %v2246
    %v2248 = vpack.c.bf16 %v2247, %v2247
    %2250 = vrot.lane.b32.xlu0 %v2248, 96
    %v2251 = vpop.permute.xlu0 %2250
    %v2253 = vsel %vm170, %v2251, 0
    %2255 = vmatprep.subr.bf16.mxu0 0
    %2256 = vmatpush1.bf16.msra.mxu0 0
    %2257 = vmatprep.subr.bf16.mxu0 0
    %2258 = vmatpush1.bf16.msra.mxu0 0
    %2259 = vmatprep.subr.bf16.mxu0 0
    %2260 = vmatpush1.bf16.msra.mxu0 0
    %2261 = vmatprep.subr.bf16.mxu0 0
    %2262 = vmatpush1.bf16.msra.mxu0 0
    %2263 = vmatprep.subr.bf16.mxu0 0
    %2264 = vmatpush1.bf16.msra.mxu0 0
    %2265 = vmatprep.subr.bf16.mxu0 0
    %2266 = vmatpush1.bf16.msra.mxu0 0
    %2267 = vmatprep.subr.bf16.mxu0 0
    %2268 = vmatpush1.bf16.msra.mxu0 %v1438
    %2269 = vmatprep.subr.bf16.mxu0 0
    %2270 = vmatpush1.bf16.msra.mxu0 %v1437
    %2271 = vmatprep.subr.bf16.mxu0 0
    %2272 = vmatpush2.bf16.msra.mxu0 0
    %2273 = vmatprep.subr.bf16.mxu0 0
    %2274 = vmatpush2.bf16.msra.mxu0 0
    %2275 = vmatprep.subr.bf16.mxu0 0
    %2276 = vmatpush2.bf16.msra.mxu0 0
    %2277 = vmatprep.subr.bf16.mxu0 0
    %2278 = vmatpush2.bf16.msra.mxu0 0
    %2279 = vmatprep.subr.bf16.mxu0 0
    %2280 = vmatpush2.bf16.msra.mxu0 0
    %2281 = vmatprep.subr.bf16.mxu0 0
    %2282 = vmatpush2.bf16.msra.mxu0 0
    %2283 = vmatprep.subr.bf16.mxu0 0
    %2284 = vmatpush2.bf16.msra.mxu0 0
    %2285 = vmatprep.subr.bf16.mxu0 0
    %2286 = vmatpush2.bf16.msra.mxu0 0
    %2287 = vmatprep.mubr.bf16.mxu0 0
    %2288 = vmatmul.mubr.bf16.gmra.mxu0 %v2253
    %v2289 = vpop.f32.mrf.mxu0
    %v2290 = vadd.f32 %v1428, %v2289
    %v2291 = vpop.f32.mrf.mxu0
    %v2292 = vpop.f32.mrf.mxu0
    %v2293 = vpop.f32.mrf.mxu0
    %2294 = vdwg.mxu0
    %v2295 = vadd.f32 %v752, %v2290
    %v2296 = vxor.u32 %v2295, 2147483648
    %v2297 = vmul.f32 %v2296, 1.442695
    %v2298 = vpow.pop %v2297
    %v2299 = vadd.f32 %v2298, 1.0
    %v2300 = vrcp.pop %v2299
    %v2301 = vmul.f32 1.0, %v2300
    %2303 = vrot.lane.b32.xlu0 %v2290, 64
    %v2304 = vpop.permute.xlu0 %2303
    %v2306 = vmul.f32 %v2301, %v2304
    %2308 = vrot.lane.b32.xlu0 %v2306, 64
    %v2309 = vpop.permute.xlu0 %2308
    %v2311 = vadd.f32 %v752, %v2309
    %v2312 = vtanh.pop %v2311
    %v2313 = vsub.f32 1.0, %v2301
    %2315 = vrot.lane.b32.xlu0 %v2312, 96
    %v2316 = vpop.permute.xlu0 %2315
    %v2318 = vmul.f32 %v2313, %v2316
    %v2319 = vmul.f32 %v2301, %v2247
    %v2320 = vadd.f32 %v2318, %v2319
    %v2321 = vpack.c.bf16 %v2174, %v2174
    %2323 = vrot.lane.b32.xlu0 %v2321, 112
    %v2324 = vpop.permute.xlu0 %2323
    %v2326 = vsel %vm152, %v2324, 0
    %2328 = vmatprep.subr.bf16.mxu0 0
    %2329 = vmatpush1.bf16.msra.mxu0 0
    %2330 = vmatprep.subr.bf16.mxu0 0
    %2331 = vmatpush1.bf16.msra.mxu0 0
    %2332 = vmatprep.subr.bf16.mxu0 0
    %2333 = vmatpush1.bf16.msra.mxu0 0
    %2334 = vmatprep.subr.bf16.mxu0 0
    %2335 = vmatpush1.bf16.msra.mxu0 0
    %2336 = vmatprep.subr.bf16.mxu0 0
    %2337 = vmatpush1.bf16.msra.mxu0 0
    %2338 = vmatprep.subr.bf16.mxu0 0
    %2339 = vmatpush1.bf16.msra.mxu0 0
    %2340 = vmatprep.subr.bf16.mxu0 0
    %2341 = vmatpush1.bf16.msra.mxu0 0
    %2342 = vmatprep.subr.bf16.mxu0 0
    %2343 = vmatpush1.bf16.msra.mxu0 %v1591
    %2344 = vmatprep.subr.bf16.mxu0 0
    %2345 = vmatpush2.bf16.msra.mxu0 0
    %2346 = vmatprep.subr.bf16.mxu0 0
    %2347 = vmatpush2.bf16.msra.mxu0 0
    %2348 = vmatprep.subr.bf16.mxu0 0
    %2349 = vmatpush2.bf16.msra.mxu0 0
    %2350 = vmatprep.subr.bf16.mxu0 0
    %2351 = vmatpush2.bf16.msra.mxu0 0
    %2352 = vmatprep.subr.bf16.mxu0 0
    %2353 = vmatpush2.bf16.msra.mxu0 0
    %2354 = vmatprep.subr.bf16.mxu0 0
    %2355 = vmatpush2.bf16.msra.mxu0 0
    %2356 = vmatprep.subr.bf16.mxu0 0
    %2357 = vmatpush2.bf16.msra.mxu0 0
    %2358 = vmatprep.subr.bf16.mxu0 0
    %2359 = vmatpush2.bf16.msra.mxu0 0
    %2360 = vmatprep.mubr.bf16.mxu0 0
    %2361 = vmatmul.mubr.bf16.gmra.mxu0 %v2326
    %v2362 = vpop.f32.mrf.mxu0
    %v2363 = vadd.f32 %v1586, %v2362
    %v2364 = vpop.f32.mrf.mxu0
    %v2365 = vpop.f32.mrf.mxu0
    %v2366 = vpop.f32.mrf.mxu0
    %2367 = vdwg.mxu0
    %v2368 = vadd.f32 %v1160, %v2363
    %v2369 = vxor.u32 %v2368, 2147483648
    %v2370 = vmul.f32 %v2369, 1.442695
    %v2371 = vpow.pop %v2370
    %v2372 = vadd.f32 %v2371, 1.0
    %v2373 = vrcp.pop %v2372
    %v2374 = vmul.f32 1.0, %v2373
    %2376 = vrot.lane.b32.xlu0 %v2363, 96
    %v2377 = vpop.permute.xlu0 %2376
    %v2379 = vmul.f32 %v2374, %v2377
    %2381 = vrot.lane.b32.xlu0 %v2379, 32
    %v2382 = vpop.permute.xlu0 %2381
    %v2384 = vadd.f32 %v1160, %v2382
    %v2385 = vtanh.pop %v2384
    %v2386 = vsub.f32 1.0, %v2374
    %2388 = vrot.lane.b32.xlu0 %v2385, 112
    %v2389 = vpop.permute.xlu0 %2388
    %v2391 = vmul.f32 %v2386, %v2389
    %v2392 = vmul.f32 %v2374, %v2174
    %v2393 = vadd.f32 %v2391, %v2392
    %v2394 = vpack.c.bf16 %v1955, %v1955
    %2396 = vrot.lane.b32.xlu0 %v2394, 112
    %v2397 = vpop.permute.xlu0 %2396
    %v2399 = vsel %vm152, %v2397, 0
    %2401 = vmatprep.subr.bf16.mxu0 0
    %2402 = vmatpush1.bf16.msra.mxu0 0
    %2403 = vmatprep.subr.bf16.mxu0 0
    %2404 = vmatpush1.bf16.msra.mxu0 0
    %2405 = vmatprep.subr.bf16.mxu0 0
    %2406 = vmatpush1.bf16.msra.mxu0 0
    %2407 = vmatprep.subr.bf16.mxu0 0
    %2408 = vmatpush1.bf16.msra.mxu0 0
    %2409 = vmatprep.subr.bf16.mxu0 0
    %2410 = vmatpush1.bf16.msra.mxu0 0
    %2411 = vmatprep.subr.bf16.mxu0 0
    %2412 = vmatpush1.bf16.msra.mxu0 0
    %2413 = vmatprep.subr.bf16.mxu0 0
    %2414 = vmatpush1.bf16.msra.mxu0 0
    %2415 = vmatprep.subr.bf16.mxu0 0
    %2416 = vmatpush1.bf16.msra.mxu0 %v1888
    %2417 = vmatprep.subr.bf16.mxu0 0
    %2418 = vmatpush2.bf16.msra.mxu0 0
    %2419 = vmatprep.subr.bf16.mxu0 0
    %2420 = vmatpush2.bf16.msra.mxu0 0
    %2421 = vmatprep.subr.bf16.mxu0 0
    %2422 = vmatpush2.bf16.msra.mxu0 0
    %2423 = vmatprep.subr.bf16.mxu0 0
    %2424 = vmatpush2.bf16.msra.mxu0 0
    %2425 = vmatprep.subr.bf16.mxu0 0
    %2426 = vmatpush2.bf16.msra.mxu0 0
    %2427 = vmatprep.subr.bf16.mxu0 0
    %2428 = vmatpush2.bf16.msra.mxu0 0
    %2429 = vmatprep.subr.bf16.mxu0 0
    %2430 = vmatpush2.bf16.msra.mxu0 0
    %2431 = vmatprep.subr.bf16.mxu0 0
    %2432 = vmatpush2.bf16.msra.mxu0 0
    %2433 = vmatprep.mubr.bf16.mxu0 0
    %2434 = vmatmul.mubr.bf16.gmra.mxu0 %v2399
    %v2435 = vpop.f32.mrf.mxu0
    %v2436 = vadd.f32 %v1883, %v2435
    %v2437 = vpop.f32.mrf.mxu0
    %v2438 = vpop.f32.mrf.mxu0
    %v2439 = vpop.f32.mrf.mxu0
    %2440 = vdwg.mxu0
    %v2441 = vadd.f32 %v1414, %v2436
    %v2442 = vxor.u32 %v2441, 2147483648
    %v2443 = vmul.f32 %v2442, 1.442695
    %v2444 = vpow.pop %v2443
    %v2445 = vadd.f32 %v2444, 1.0
    %v2446 = vrcp.pop %v2445
    %v2447 = vmul.f32 1.0, %v2446
    %2449 = vrot.lane.b32.xlu0 %v2436, 96
    %v2450 = vpop.permute.xlu0 %2449
    %v2452 = vmul.f32 %v2447, %v2450
    %2454 = vrot.lane.b32.xlu0 %v2452, 32
    %v2455 = vpop.permute.xlu0 %2454
    %v2457 = vadd.f32 %v1414, %v2455
    %v2458 = vtanh.pop %v2457
    %v2459 = vsub.f32 1.0, %v2447
    %2461 = vrot.lane.b32.xlu0 %v2458, 112
    %v2462 = vpop.permute.xlu0 %2461
    %v2464 = vmul.f32 %v2459, %v2462
    %v2465 = vmul.f32 %v2447, %v1955
    %v2466 = vadd.f32 %v2464, %v2465
    %v2467 = vpack.c.bf16 %v2320, %v2320
    %v2468 = vpack.c.bf16 %v2393, %v2393
    %v2469 = vpack.c.bf16 %v2466, %v2466
    %v2470 = vld [vmem:[%s3] sm:$0xf]
    %2472 = vrot.lane.b32.xlu0 %v2467, 96
    %v2473 = vpop.permute.xlu0 %2472
    %2475 = vrot.lane.b32.xlu0 %v2468, 16
    %v2476 = vpop.permute.xlu0 %2475
    %2478 = vrot.lane.b32.xlu0 %v2469, 32
    %v2479 = vpop.permute.xlu0 %2478
    %v2481 = vunpack.c.l.b16 %v2470
    %v2482 = vpack.c.b16 %v2481, %v2481
    %2483 = vrot.lane.b32.xlu0 %v2482, 64
    %v2484 = vpop.permute.xlu0 %2483
    %v2487 = vsel %vm170, %v2473, %v2476
    %v2489 = vsel %vm188, %v2487, %v2479
    %v2491 = vsel %vm493, %v2489, %v2484
    %v2492 = vld [vmem:[%s7] sm:$0xf]
    %v2493 = vld [vmem:[%s7 + $0x4] sm:$0xf]
    %v2494 = vld [vmem:[%s7 + $0x8] sm:$0xf]
    %v2495 = vld [vmem:[%s7 + $0xc] sm:$0xf]
    %v2496 = vld [vmem:[%s7 + $0x10] sm:$0xf]
    %v2497 = vld [vmem:[%s7 + $0x14] sm:$0xf]
    %v2498 = vld [vmem:[%s7 + $0x18] sm:$0xf]
    %v2499 = vld [vmem:[%s7 + $0x1c] sm:$0xf]
    %v2500 = vld [vmem:[%s7 + $0x20] sm:$0xf]
    %v2501 = vld [vmem:[%s7 + $0x24] sm:$0xf]
    %v2502 = vld [vmem:[%s7 + $0x28] sm:$0xf]
    %v2503 = vld [vmem:[%s7 + $0x2c] sm:$0xf]
    %v2504 = vlaneseq
    %v2505 = vshrl.u32 %v2504, 7
    %v2506 = vsub.s32 4, %v2505
    %v2507 = vrot.slane %v35, %v2506
    %v2520 = vunpack.c.l.b16 %v2492
    %v2521 = vunpack.c.l.b16 %v2493
    %v2522 = vunpack.c.l.b16 %v2494
    %v2523 = vunpack.c.l.b16 %v2495
    %v2524 = vunpack.c.l.b16 %v2496
    %v2525 = vunpack.c.l.b16 %v2497
    %v2526 = vunpack.c.l.b16 %v2498
    %v2527 = vunpack.c.l.b16 %v2499
    %v2528 = vunpack.c.l.b16 %v2500
    %v2529 = vunpack.c.l.b16 %v2501
    %v2530 = vunpack.c.l.b16 %v2502
    %v2531 = vunpack.c.l.b16 %v2503
    %v2532 = vpack.c.b16 %v2521, %v2520
    %v2533 = vpack.c.b16 %v2523, %v2522
    %v2534 = vpack.c.b16 %v2525, %v2524
    %v2535 = vpack.c.b16 %v2527, %v2526
    %v2536 = vpack.c.b16 %v2529, %v2528
    %v2537 = vpack.c.b16 %v2531, %v2530
    %v2544 = vsel %vm511, %v2491, 0
    %2546 = vmatprep.subr.bf16.mxu0 0
    %2547 = vmatpush1.bf16.msra.mxu0 0
    %2548 = vmatprep.subr.bf16.mxu0 0
    %2549 = vmatpush1.bf16.msra.mxu0 0
    %2550 = vmatprep.subr.bf16.mxu0 0
    %2551 = vmatpush1.bf16.msra.mxu0 %v2537
    %2552 = vmatprep.subr.bf16.mxu0 0
    %2553 = vmatpush1.bf16.msra.mxu0 %v2536
    %2554 = vmatprep.subr.bf16.mxu0 0
    %2555 = vmatpush1.bf16.msra.mxu0 %v2535
    %2556 = vmatprep.subr.bf16.mxu0 0
    %2557 = vmatpush1.bf16.msra.mxu0 %v2534
    %2558 = vmatprep.subr.bf16.mxu0 0
    %2559 = vmatpush1.bf16.msra.mxu0 %v2533
    %2560 = vmatprep.subr.bf16.mxu0 0
    %2561 = vmatpush1.bf16.msra.mxu0 %v2532
    %2562 = vmatprep.subr.bf16.mxu0 0
    %2563 = vmatpush2.bf16.msra.mxu0 0
    %2564 = vmatprep.subr.bf16.mxu0 0
    %2565 = vmatpush2.bf16.msra.mxu0 0
    %2566 = vmatprep.subr.bf16.mxu0 0
    %2567 = vmatpush2.bf16.msra.mxu0 0
    %2568 = vmatprep.subr.bf16.mxu0 0
    %2569 = vmatpush2.bf16.msra.mxu0 0
    %2570 = vmatprep.subr.bf16.mxu0 0
    %2571 = vmatpush2.bf16.msra.mxu0 0
    %2572 = vmatprep.subr.bf16.mxu0 0
    %2573 = vmatpush2.bf16.msra.mxu0 0
    %2574 = vmatprep.subr.bf16.mxu0 0
    %2575 = vmatpush2.bf16.msra.mxu0 0
    %2576 = vmatprep.subr.bf16.mxu0 0
    %2577 = vmatpush2.bf16.msra.mxu0 0
    %2578 = vmatprep.mubr.bf16.mxu0 0
    %2579 = vmatmul.mubr.bf16.gmra.mxu0 %v2544
    %v2580 = vpop.f32.mrf.mxu0
    %v2581 = vadd.f32 %v2507, %v2580
    %v2582 = vpop.f32.mrf.mxu0
    %v2583 = vpop.f32.mrf.mxu0
    %v2584 = vpop.f32.mrf.mxu0
    %2585 = vdwg.mxu0
    %2586 = vst.msk [vmem:[#allocation5] sm:$0xff] %vm139, %v2581
    // Predicated region
    $region38: #{tpu_custom_call.1} parent=1 // pred_check
      _
    $region39: #{tpu_custom_call.1} parent=1 // pred_check_branch
      %2588 = sbr.rel (0) target = $region41
    $region40: #{tpu_custom_call.1} parent=1 // pred_region
      %s2590 = ssub.s32 128, 128
      %2591 = vsyncadd [#allocation6], %s2590
      %s2593 = sshll.u32 [#allocation5], 4
      %s2594 = int_to_ptr.vmem [resolvable:$true] %s2593
      %2596 = dma.vmem_to_hbm [thread:$0]  %s2594, 128, %s9, [#allocation6]
    $region41: #{tpu_custom_call.1} parent=1 // pred_fallthru
      _
    // Predicated region
    $region42: #{tpu_custom_call.1} parent=1 // pred_check
      _
    $region43: #{tpu_custom_call.1} parent=1 // pred_check_branch
      %2598 = sbr.rel (0) target = $region45
    $region44: #{tpu_custom_call.1} parent=1 // pred_region
      %2599 = dma.done [#allocation6], 128
    $region45: #{tpu_custom_call.1} parent=1 // pred_fallthru
      _
    %2600 = vsyncpa [#allocation6], 1

</llo_original>
